<compile_context>
chip_gen: v7x
topology: tpu7x:2x2x1
jax: 0.10.0
libtpu: 0.0.40
codegen_flags: <defaults>
</compile_context>

<pallas_src>
import functools

import jax
import jax.numpy as jnp
from jax import lax
from jax.experimental import pallas as pl
from jax.experimental.pallas import tpu as pltpu


_LANE = 128        # f32 lane tile
_SUBLANE = 8       # f32 sublane tile
_NEG_PAD = -1e30   # f-gate pre-activation pad => sigmoid == 0 => identity step

# Chunk sizing targets the tightest generation (v7x: 64 MiB VMEM, 32 MiB scoped
# default).  v5e/v6e have more VMEM, but this budget is already well past the
# measured large-tile HBM-roofline plateau, so one budget serves all gens.
_DEFAULT_VMEM_BUDGET = 28 * 1024 * 1024


def _round_up(n, m):
    return ((n + m - 1) // m) * m


def _pick_s_chunk(seq_len, bp, hp, store_bytes, vmem_budget=_DEFAULT_VMEM_BUDGET):
    """Largest per-chunk timestep count that keeps the pipeline inside VMEM.

    Budget: gf+gc chunks are double-buffered inputs, the y-row chunk is a
    double-buffered output, weights / h0 / h_final / carry are fixed residents.
    """
    fixed = (2 * 2 * hp * hp * store_bytes      # Wfh, Whf (2 buffers each)
             + 3 * 2 * bp * hp * 4              # h0 in, h_final out, carry scratch
             + (2 << 20))                       # compiler-internal headroom
    per_step = (2 * 2 * bp * hp * store_bytes   # gf + gc, double-buffered
                + 2 * _SUBLANE * hp * 4)        # y row (sublane-padded), double-buffered
    avail = max(vmem_budget - fixed, per_step)
    chunk = int(avail // per_step)
    return max(1, min(chunk, seq_len, 1024))


def _mgu_chunk_kernel(gf_ref, gc_ref, h0_ref, wfh_ref, whf_ref,
                      y_ref, hfin_ref, h_sc, *, y_row, unroll):
    """One S-chunk of the MGU recurrence; hidden state carried in VMEM scratch.

    gf_ref : (S_CHUNK, Bp, Hp)  precomputed x@Wfx + bfx + bfh   (f-gate x-part)
    gc_ref : (S_CHUNK, Bp, Hp)  precomputed x@Whx + bhx + bhf   (candidate x-part)
    h0_ref : (Bp, Hp)           initial hidden state (resident)
    wfh_ref: (Hp, Hp)           recurrent f-gate weight (in x out, resident)
    whf_ref: (Hp, Hp)           recurrent candidate weight (in x out, resident)
    y_ref  : (S_CHUNK, 1, Hp)   per-step last batch row of h (y[t] = h[-1])
    hfin_ref: (Bp, Hp)          final hidden state (constant-index output block)
    h_sc   : (Bp, Hp) f32       hidden-state carry across chunks
    """
    # First chunk: seed the carry from h0.
    @pl.when(pl.program_id(0) == 0)
    def _():
        h_sc[...] = h0_ref[...]

    # Recurrent weights have a constant block index, so they stay VMEM-resident
    # across the whole grid; these are cheap VMEM->vreg loads.
    wfh = wfh_ref[...]
    whf = whf_ref[...]
    dot_dt = wfh.dtype
    s_chunk = gf_ref.shape[0]

    def step(t, h):
        # f = sigmoid(x@Wfx + bfx + bfh  +  h@Wfh)          (x-part precomputed)
        f = jax.nn.sigmoid(
            gf_ref[t].astype(jnp.float32)
            + jnp.dot(h.astype(dot_dt), wfh, preferred_element_type=jnp.float32))
        # h_hat = tanh(x@Whx + bhx + bhf  +  (f*h)@Whf)     (x-part precomputed)
        h_hat = jnp.tanh(
            gc_ref[t].astype(jnp.float32)
            + jnp.dot((f * h).astype(dot_dt), whf,
                      preferred_element_type=jnp.float32))
        # h = (1-f)*h + f*h_hat, rewritten to save one VPU op on the serial chain.
        h_new = h + f * (h_hat - h)
        # y[t] = h[-1]: store only the last real batch row (lane-dense (1, Hp)).
        y_ref[t] = h_new[y_row:y_row + 1, :]
        return h_new

    # Small fixed unroll: enough for the scheduler to overlap step t's EUP
    # (sigmoid/tanh) with step t+1's loads / MXU push, without the vreg-spill
    # blowup of a full unroll at realistic S.
    h = lax.fori_loop(0, s_chunk, step, h_sc[...], unroll=unroll)
    h_sc[...] = h
    # Constant-index output block: stays VMEM-resident, written back to HBM
    # once at the end of the grid; per-chunk store is a cheap VMEM store.
    hfin_ref[...] = h


def mgu_forward(x, h0, params, *, s_chunk=None, store_dtype=jnp.bfloat16,
                vmem_budget=_DEFAULT_VMEM_BUDGET):
    """MGU forward.  x: (S, B, I), h0: (B, H) -> (y: (S, 1, H), h_final: (B, H)).

    store_dtype: dtype of the streamed gf/gc slabs and of the recurrent dot
    operands (gate elementwise math is always f32).  bf16 halves HBM->VMEM
    traffic and uses the bf16 MXU path; pass f32 for strict f32 parity.
    """
    S, B, I = x.shape
    H = h0.shape[-1]
    (wfx, bfx), (wfh, bfh), (whf, bhf), (whx, bhx) = params

    Bp = _round_up(B, _SUBLANE)
    Hp = _round_up(H, _LANE)
    store_dtype = jnp.dtype(store_dtype)
    store_bytes = store_dtype.itemsize

    # --- Hoisted input projections, fused into ONE wide GEMM (reads x once,
    #     wider N for the 256-wide MXU on v6e/v7x):
    #       [gf | gc] = x @ [Wfx | Whx] + [bfx+bfh | bhx+bhf]
    w_cat = jnp.concatenate([wfx, whx], axis=1)               # (I, 2H)
    b_cat = jnp.concatenate([bfx + bfh, bhx + bhf], axis=1)   # (1, 2H)
    g = jnp.dot(x.reshape(S * B, I), w_cat,
                precision=lax.Precision.HIGHEST) + b_cat
    g = g.reshape(S, B, 2 * H)
    gf, gc = g[..., :H], g[..., H:]

    # --- Chunk the sequence so VMEM holds O(chunk), not O(S).
    if s_chunk is None:
        s_chunk = _pick_s_chunk(S, Bp, Hp, store_bytes, vmem_budget)
    s_chunk = max(1, min(int(s_chunk), S))
    n_chunks = (S + s_chunk - 1) // s_chunk
    Sp = n_chunks * s_chunk

    # --- Padding (exact):
    #   * zero-padded hidden lanes / batch rows: f=0.5 there but h_hat=0 and h
    #     stays 0, so nothing leaks into real lanes/rows.
    #   * padded tail TIMESTEPS get gf = -1e30 => f = sigmoid(-1e30) == 0
    #     exactly => h_new == h: identity updates, the carry / h_final are
    #     unaffected by the sequence tail pad.
    gf_p = jnp.pad(gf, ((0, 0), (0, Bp - B), (0, Hp - H)))
    gf_p = jnp.pad(gf_p, ((0, Sp - S), (0, 0), (0, 0)), constant_values=_NEG_PAD)
    gc_p = jnp.pad(gc, ((0, Sp - S), (0, Bp - B), (0, Hp - H)))
    gf_p = gf_p.astype(store_dtype)
    gc_p = gc_p.astype(store_dtype)

    h0_p = jnp.pad(h0, ((0, Bp - B), (0, Hp - H))).astype(jnp.float32)
    wfh_p = jnp.pad(wfh, ((0, Hp - H), (0, Hp - H))).astype(store_dtype)
    whf_p = jnp.pad(whf, ((0, Hp - H), (0, Hp - H))).astype(store_dtype)

    # --- Explicit scoped-VMEM limit sized from actual chunk/slab footprints.
    chunk_bytes = (2 * 2 * s_chunk * Bp * Hp * store_bytes    # gf+gc, double-buffered
                   + 2 * s_chunk * _SUBLANE * Hp * 4)         # y rows, double-buffered
    fixed_bytes = 2 * 2 * Hp * Hp * store_bytes + 3 * 2 * Bp * Hp * 4
    vmem_limit = int(min(96 << 20, max(32 << 20, 2 * (chunk_bytes + fixed_bytes))))

    grid_spec = pltpu.PrefetchScalarGridSpec(
        num_scalar_prefetch=0,
        grid=(n_chunks,),
        in_specs=[
            pl.BlockSpec((s_chunk, Bp, Hp), lambda s: (s, 0, 0)),   # gf chunk
            pl.BlockSpec((s_chunk, Bp, Hp), lambda s: (s, 0, 0)),   # gc chunk
            pl.BlockSpec((Bp, Hp), lambda s: (0, 0)),               # h0 (resident)
            pl.BlockSpec((Hp, Hp), lambda s: (0, 0)),               # Wfh (resident)
            pl.BlockSpec((Hp, Hp), lambda s: (0, 0)),               # Whf (resident)
        ],
        out_specs=[
            pl.BlockSpec((s_chunk, 1, Hp), lambda s: (s, 0, 0)),    # y rows
            pl.BlockSpec((Bp, Hp), lambda s: (0, 0)),               # h_final
        ],
        scratch_shapes=[pltpu.VMEM((Bp, Hp), jnp.float32)],         # hidden carry
    )

    # TODO(synk): for Bp >= 16 on v7x, add a leading "parallel" grid axis over
    #   batch blocks so both TensorCores run independent recurrence shards.
    # TODO(synk): on v5e, hold Wfh/Whf in MXU weight-staging registers
    #   (pltpu.matmul_push_rhs once per chunk, matmul_acc_lhs/pop per step) to
    #   avoid re-pushing the 128x128 weight tiles on every serial step.
    y_rows, h_fin = pl.pallas_call(
        functools.partial(_mgu_chunk_kernel, y_row=B - 1,
                          unroll=max(1, min(4, s_chunk))),
        out_shape=(jax.ShapeDtypeStruct((Sp, 1, Hp), jnp.float32),
                   jax.ShapeDtypeStruct((Bp, Hp), jnp.float32)),
        grid_spec=grid_spec,
        compiler_params=pltpu.CompilerParams(
            dimension_semantics=("arbitrary",),   # sequential recurrence over chunks
            vmem_limit_bytes=vmem_limit),
    )(gf_p, gc_p, h0_p, wfh_p, whf_p)

    y = y_rows[:S, :, :H]        # y[i] = h[-1] after step i   -> (S, 1, H)
    h_final = h_fin[:B, :H]      # final hidden state          -> (B, H)
    return y, h_final


def mgu_reference(x, h0, params):
    """Pure-JAX reference of the PyTorch forward, for correctness checking."""
    (wfx, bfx), (wfh, bfh), (whf, bhf), (whx, bhx) = params

    def step(h, xt):
        f = jax.nn.sigmoid(xt @ wfx + bfx + h @ wfh + bfh)
        h_hat = jnp.tanh((f * h) @ whf + bhf + xt @ whx + bhx)
        h_new = (1.0 - f) * h + f * h_hat
        return h_new, h_new[-1][None, :]

    h_final, y = jax.lax.scan(step, h0, x)
    return y, h_final


def init_params(key, input_size, hidden_size):
    """Deterministic synthetic parameters. Weight layout: (in, out); bias: (1, out)."""
    ks = jax.random.split(key, 8)

    def lin(kw, kb, fan_in):
        bound = 1.0 / jnp.sqrt(fan_in)
        w = jax.random.uniform(kw, (fan_in, hidden_size), jnp.float32, -bound, bound)
        b = jax.random.uniform(kb, (1, hidden_size), jnp.float32, -bound, bound)
        return w, b

    return (
        lin(ks[0], ks[1], input_size),    # linearfx
        lin(ks[2], ks[3], hidden_size),   # linearfh
        lin(ks[4], ks[5], hidden_size),   # linearhf
        lin(ks[6], ks[7], input_size),    # linearhx
    )


if __name__ == "__main__":
    # Consistent high-precision f32 matmuls on TPU for the parity check.
    jax.config.update("jax_default_matmul_precision", "highest")

    SEQ, BATCH, INPUT, HIDDEN = 8, 2, 16, 32

    key = jax.random.PRNGKey(0)
    kx, kh, kp = jax.random.split(key, 3)

    x = jax.random.normal(kx, (SEQ, BATCH, INPUT), jnp.float32)
    h0 = jax.random.normal(kh, (BATCH, HIDDEN), jnp.float32)
    params = init_params(kp, INPUT, HIDDEN)

    y_ref, h_ref = mgu_reference(x, h0, params)

    # 1) f32 path with a small forced chunk (exercises the chunked grid, the
    #    cross-chunk VMEM carry, and the identity-padded tail: S=8, chunk=3).
    fwd_f32 = jax.jit(functools.partial(mgu_forward, params=params,
                                        s_chunk=3, store_dtype=jnp.float32))
    y32, h32 = fwd_f32(x, h0)
    jax.block_until_ready((y32, h32))
    assert y32.shape == (SEQ, 1, HIDDEN) and h32.shape == (BATCH, HIDDEN)
    assert jnp.allclose(y32, y_ref, atol=1e-4, rtol=1e-4)
    assert jnp.allclose(h32, h_ref, atol=1e-4, rtol=1e-4)

    # 2) bf16-streaming path (halved DMA bytes, bf16 MXU), auto chunk size.
    #    bf16 gate pre-activations lose ~3 decimal digits => relaxed tolerance.
    fwd_bf16 = jax.jit(functools.partial(mgu_forward, params=params,
                                         store_dtype=jnp.bfloat16))
    y16, h16 = fwd_bf16(x, h0)
    jax.block_until_ready((y16, h16))
    assert y16.shape == (SEQ, 1, HIDDEN) and h16.shape == (BATCH, HIDDEN)
    assert jnp.allclose(y16, y_ref, atol=5e-2, rtol=5e-2)
    assert jnp.allclose(h16, h_ref, atol=5e-2, rtol=5e-2)

    print("KERNEL_OK")
</pallas_src>

<mosaic_0001>
module attributes {stable_mosaic.version = 11 : i64} {
  func.func @_mgu_chunk_kernel(%arg0: i32, %arg1: memref<3x8x128xf32, #tpu.memory_space<vmem>>, %arg2: memref<3x8x128xf32, #tpu.memory_space<vmem>>, %arg3: memref<8x128xf32, #tpu.memory_space<vmem>>, %arg4: memref<128x128xf32, #tpu.memory_space<vmem>>, %arg5: memref<128x128xf32, #tpu.memory_space<vmem>>, %arg6: memref<3x1x128xf32, #tpu.memory_space<vmem>>, %arg7: memref<8x128xf32, #tpu.memory_space<vmem>>, %arg8: memref<8x128xf32, #tpu.memory_space<vmem>>) attributes {dimension_semantics = [#tpu.dimension_semantics<arbitrary>], iteration_bounds = array<i64: 3>, scalar_prefetch = 0 : i64, scratch_operands = 1 : i64, tpu.core_type = #tpu.core_type<tc>, window_params = [{transform_indices = @transform_0, window_bounds = array<i64: 3, 8, 128>}, {transform_indices = @transform_1, window_bounds = array<i64: 3, 8, 128>}, {pipeline_mode = #tpu.pipeline_mode<synchronous>, transform_indices = @transform_2, window_bounds = array<i64: 8, 128>}, {pipeline_mode = #tpu.pipeline_mode<synchronous>, transform_indices = @transform_3, window_bounds = array<i64: 128, 128>}, {pipeline_mode = #tpu.pipeline_mode<synchronous>, transform_indices = @transform_4, window_bounds = array<i64: 128, 128>}, {transform_indices = @transform_5, window_bounds = array<i64: 3, 1, 128>}, {pipeline_mode = #tpu.pipeline_mode<synchronous>, transform_indices = @transform_6, window_bounds = array<i64: 8, 128>}]} {
    %c0_i32 = arith.constant 0 : i32
    %0 = arith.cmpi eq, %arg0, %c0_i32 : i32
    %1 = arith.extui %0 : i1 to i32
    %c0_i32_0 = arith.constant 0 : i32
    %2 = arith.cmpi ne, %1, %c0_i32_0 : i32
    scf.if %2 {
      %c0_37 = arith.constant 0 : index
      %c0_38 = arith.constant 0 : index
      %83 = vector.load %arg3[%c0_37, %c0_38] : memref<8x128xf32, #tpu.memory_space<vmem>>, vector<8x128xf32>
      %c0_39 = arith.constant 0 : index
      %c0_40 = arith.constant 0 : index
      %84 = vector.load %arg8[%c0_39, %c0_40] : memref<8x128xf32, #tpu.memory_space<vmem>>, vector<8x128xf32>
      tpu.vector_store %arg8[%c0_39, %c0_40], %83 {strides = array<i32>} : memref<8x128xf32, #tpu.memory_space<vmem>>, vector<8x128xf32>,
    } else {
    }
    %c0 = arith.constant 0 : index
    %c0_1 = arith.constant 0 : index
    %3 = vector.load %arg4[%c0, %c0_1] : memref<128x128xf32, #tpu.memory_space<vmem>>, vector<128x128xf32>
    %c0_2 = arith.constant 0 : index
    %c0_3 = arith.constant 0 : index
    %4 = vector.load %arg5[%c0_2, %c0_3] : memref<128x128xf32, #tpu.memory_space<vmem>>, vector<128x128xf32>
    %c0_4 = arith.constant 0 : index
    %c0_5 = arith.constant 0 : index
    %5 = vector.load %arg8[%c0_4, %c0_5] : memref<8x128xf32, #tpu.memory_space<vmem>>, vector<8x128xf32>
    %c0_i32_6 = arith.constant 0 : i32
    %6 = arith.index_cast %c0_i32_6 : i32 to index
    %c0_7 = arith.constant 0 : index
    %c0_8 = arith.constant 0 : index
    %7 = vector.load %arg1[%6, %c0_7, %c0_8] : memref<3x8x128xf32, #tpu.memory_space<vmem>>, vector<1x8x128xf32>
    %8 = vector.shape_cast %7 : vector<1x8x128xf32> to vector<8x128xf32>
    %cst = arith.constant dense<0.000000e+00> : vector<8x128xf32>
    %9 = tpu.matmul %5, %3, %cst {dimension_numbers = #tpu.dot_dimension_numbers<[1], [0], [0], [1], [0, 0, 1, 1], [], []>, precision = #tpu.contract_precision<fp32>} : vector<8x128xf32>, vector<128x128xf32>, vector<8x128xf32> -> vector<8x128xf32>
    %10 = arith.addf %8, %9 : vector<8x128xf32>
    %11 = arith.negf %10 : vector<8x128xf32>
    %12 = math.exp %11 : vector<8x128xf32>
    %cst_9 = arith.constant 1.000000e+00 : f32
    %13 = vector.broadcast %cst_9 : f32 to vector<8x128xf32>
    %14 = arith.addf %13, %12 : vector<8x128xf32>
    %15 = arith.divf %13, %14 : vector<8x128xf32>
    %16 = arith.index_cast %c0_i32_6 : i32 to index
    %c0_10 = arith.constant 0 : index
    %c0_11 = arith.constant 0 : index
    %17 = vector.load %arg2[%16, %c0_10, %c0_11] : memref<3x8x128xf32, #tpu.memory_space<vmem>>, vector<1x8x128xf32>
    %18 = vector.shape_cast %17 : vector<1x8x128xf32> to vector<8x128xf32>
    %19 = arith.mulf %15, %5 : vector<8x128xf32>
    %cst_12 = arith.constant dense<0.000000e+00> : vector<8x128xf32>
    %20 = tpu.matmul %19, %4, %cst_12 {dimension_numbers = #tpu.dot_dimension_numbers<[1], [0], [0], [1], [0, 0, 1, 1], [], []>, precision = #tpu.contract_precision<fp32>} : vector<8x128xf32>, vector<128x128xf32>, vector<8x128xf32> -> vector<8x128xf32>
    %21 = arith.addf %18, %20 : vector<8x128xf32>
    %22 = math.tanh %21 : vector<8x128xf32>
    %23 = arith.subf %22, %5 : vector<8x128xf32>
    %24 = arith.mulf %15, %23 : vector<8x128xf32>
    %25 = arith.addf %5, %24 : vector<8x128xf32>
    %26 = vector.extract_strided_slice %25 {offsets = [1, 0], sizes = [1, 128], strides = [1, 1]} : vector<8x128xf32> to vector<1x128xf32>
    %27 = arith.index_cast %c0_i32_6 : i32 to index
    %c0_13 = arith.constant 0 : index
    %c0_14 = arith.constant 0 : index
    %28 = vector.load %arg6[%27, %c0_13, %c0_14] : memref<3x1x128xf32, #tpu.memory_space<vmem>>, vector<1x1x128xf32>
    %29 = vector.shape_cast %28 : vector<1x1x128xf32> to vector<1x128xf32>
    %30 = vector.shape_cast %26 : vector<1x128xf32> to vector<1x1x128xf32>
    tpu.vector_store %arg6[%27, %c0_13, %c0_14], %30 {strides = array<i32>} : memref<3x1x128xf32, #tpu.memory_space<vmem>>, vector<1x1x128xf32>,
    %c1_i32 = arith.constant 1 : i32
    %31 = arith.index_cast %c1_i32 : i32 to index
    %c0_15 = arith.constant 0 : index
    %c0_16 = arith.constant 0 : index
    %32 = vector.load %arg1[%31, %c0_15, %c0_16] : memref<3x8x128xf32, #tpu.memory_space<vmem>>, vector<1x8x128xf32>
    %33 = vector.shape_cast %32 : vector<1x8x128xf32> to vector<8x128xf32>
    %cst_17 = arith.constant dense<0.000000e+00> : vector<8x128xf32>
    %34 = tpu.matmul %25, %3, %cst_17 {dimension_numbers = #tpu.dot_dimension_numbers<[1], [0], [0], [1], [0, 0, 1, 1], [], []>, precision = #tpu.contract_precision<fp32>} : vector<8x128xf32>, vector<128x128xf32>, vector<8x128xf32> -> vector<8x128xf32>
    %35 = arith.addf %33, %34 : vector<8x128xf32>
    %36 = arith.negf %35 : vector<8x128xf32>
    %37 = math.exp %36 : vector<8x128xf32>
    %cst_18 = arith.constant 1.000000e+00 : f32
    %38 = vector.broadcast %cst_18 : f32 to vector<8x128xf32>
    %39 = arith.addf %38, %37 : vector<8x128xf32>
    %40 = arith.divf %38, %39 : vector<8x128xf32>
    %41 = arith.index_cast %c1_i32 : i32 to index
    %c0_19 = arith.constant 0 : index
    %c0_20 = arith.constant 0 : index
    %42 = vector.load %arg2[%41, %c0_19, %c0_20] : memref<3x8x128xf32, #tpu.memory_space<vmem>>, vector<1x8x128xf32>
    %43 = vector.shape_cast %42 : vector<1x8x128xf32> to vector<8x128xf32>
    %44 = arith.mulf %40, %25 : vector<8x128xf32>
    %cst_21 = arith.constant dense<0.000000e+00> : vector<8x128xf32>
    %45 = tpu.matmul %44, %4, %cst_21 {dimension_numbers = #tpu.dot_dimension_numbers<[1], [0], [0], [1], [0, 0, 1, 1], [], []>, precision = #tpu.contract_precision<fp32>} : vector<8x128xf32>, vector<128x128xf32>, vector<8x128xf32> -> vector<8x128xf32>
    %46 = arith.addf %43, %45 : vector<8x128xf32>
    %47 = math.tanh %46 : vector<8x128xf32>
    %48 = arith.subf %47, %25 : vector<8x128xf32>
    %49 = arith.mulf %40, %48 : vector<8x128xf32>
    %50 = arith.addf %25, %49 : vector<8x128xf32>
    %51 = vector.extract_strided_slice %50 {offsets = [1, 0], sizes = [1, 128], strides = [1, 1]} : vector<8x128xf32> to vector<1x128xf32>
    %52 = arith.index_cast %c1_i32 : i32 to index
    %c0_22 = arith.constant 0 : index
    %c0_23 = arith.constant 0 : index
    %53 = vector.load %arg6[%52, %c0_22, %c0_23] : memref<3x1x128xf32, #tpu.memory_space<vmem>>, vector<1x1x128xf32>
    %54 = vector.shape_cast %53 : vector<1x1x128xf32> to vector<1x128xf32>
    %55 = vector.shape_cast %51 : vector<1x128xf32> to vector<1x1x128xf32>
    tpu.vector_store %arg6[%52, %c0_22, %c0_23], %55 {strides = array<i32>} : memref<3x1x128xf32, #tpu.memory_space<vmem>>, vector<1x1x128xf32>,
    %c2_i32 = arith.constant 2 : i32
    %56 = arith.index_cast %c2_i32 : i32 to index
    %c0_24 = arith.constant 0 : index
    %c0_25 = arith.constant 0 : index
    %57 = vector.load %arg1[%56, %c0_24, %c0_25] : memref<3x8x128xf32, #tpu.memory_space<vmem>>, vector<1x8x128xf32>
    %58 = vector.shape_cast %57 : vector<1x8x128xf32> to vector<8x128xf32>
    %cst_26 = arith.constant dense<0.000000e+00> : vector<8x128xf32>
    %59 = tpu.matmul %50, %3, %cst_26 {dimension_numbers = #tpu.dot_dimension_numbers<[1], [0], [0], [1], [0, 0, 1, 1], [], []>, precision = #tpu.contract_precision<fp32>} : vector<8x128xf32>, vector<128x128xf32>, vector<8x128xf32> -> vector<8x128xf32>
    %60 = arith.addf %58, %59 : vector<8x128xf32>
    %61 = arith.negf %60 : vector<8x128xf32>
    %62 = math.exp %61 : vector<8x128xf32>
    %cst_27 = arith.constant 1.000000e+00 : f32
    %63 = vector.broadcast %cst_27 : f32 to vector<8x128xf32>
    %64 = arith.addf %63, %62 : vector<8x128xf32>
    %65 = arith.divf %63, %64 : vector<8x128xf32>
    %66 = arith.index_cast %c2_i32 : i32 to index
    %c0_28 = arith.constant 0 : index
    %c0_29 = arith.constant 0 : index
    %67 = vector.load %arg2[%66, %c0_28, %c0_29] : memref<3x8x128xf32, #tpu.memory_space<vmem>>, vector<1x8x128xf32>
    %68 = vector.shape_cast %67 : vector<1x8x128xf32> to vector<8x128xf32>
    %69 = arith.mulf %65, %50 : vector<8x128xf32>
    %cst_30 = arith.constant dense<0.000000e+00> : vector<8x128xf32>
    %70 = tpu.matmul %69, %4, %cst_30 {dimension_numbers = #tpu.dot_dimension_numbers<[1], [0], [0], [1], [0, 0, 1, 1], [], []>, precision = #tpu.contract_precision<fp32>} : vector<8x128xf32>, vector<128x128xf32>, vector<8x128xf32> -> vector<8x128xf32>
    %71 = arith.addf %68, %70 : vector<8x128xf32>
    %72 = math.tanh %71 : vector<8x128xf32>
    %73 = arith.subf %72, %50 : vector<8x128xf32>
    %74 = arith.mulf %65, %73 : vector<8x128xf32>
    %75 = arith.addf %50, %74 : vector<8x128xf32>
    %76 = vector.extract_strided_slice %75 {offsets = [1, 0], sizes = [1, 128], strides = [1, 1]} : vector<8x128xf32> to vector<1x128xf32>
    %77 = arith.index_cast %c2_i32 : i32 to index
    %c0_31 = arith.constant 0 : index
    %c0_32 = arith.constant 0 : index
    %78 = vector.load %arg6[%77, %c0_31, %c0_32] : memref<3x1x128xf32, #tpu.memory_space<vmem>>, vector<1x1x128xf32>
    %79 = vector.shape_cast %78 : vector<1x1x128xf32> to vector<1x128xf32>
    %80 = vector.shape_cast %76 : vector<1x128xf32> to vector<1x1x128xf32>
    tpu.vector_store %arg6[%77, %c0_31, %c0_32], %80 {strides = array<i32>} : memref<3x1x128xf32, #tpu.memory_space<vmem>>, vector<1x1x128xf32>,
    %c3_i32 = arith.constant 3 : i32
    %c0_33 = arith.constant 0 : index
    %c0_34 = arith.constant 0 : index
    %81 = vector.load %arg8[%c0_33, %c0_34] : memref<8x128xf32, #tpu.memory_space<vmem>>, vector<8x128xf32>
    tpu.vector_store %arg8[%c0_33, %c0_34], %75 {strides = array<i32>} : memref<8x128xf32, #tpu.memory_space<vmem>>, vector<8x128xf32>,
    %c0_35 = arith.constant 0 : index
    %c0_36 = arith.constant 0 : index
    %82 = vector.load %arg7[%c0_35, %c0_36] : memref<8x128xf32, #tpu.memory_space<vmem>>, vector<8x128xf32>
    tpu.vector_store %arg7[%c0_35, %c0_36], %75 {strides = array<i32>} : memref<8x128xf32, #tpu.memory_space<vmem>>, vector<8x128xf32>,
    return
  }
  func.func @transform_0(%arg0: i32) -> (i32, i32, i32) {
    %c0_i32 = arith.constant 0 : i32
    %c0_i32_0 = arith.constant 0 : i32
    %c0_i32_1 = arith.constant 0 : i32
    return %arg0, %c0_i32, %c0_i32_0 : i32, i32, i32
  }
  func.func @transform_1(%arg0: i32) -> (i32, i32, i32) {
    %c0_i32 = arith.constant 0 : i32
    %c0_i32_0 = arith.constant 0 : i32
    %c0_i32_1 = arith.constant 0 : i32
    return %arg0, %c0_i32, %c0_i32_0 : i32, i32, i32
  }
  func.func @transform_2(%arg0: i32) -> (i32, i32) {
    %c0_i32 = arith.constant 0 : i32
    %c0_i32_0 = arith.constant 0 : i32
    %c0_i32_1 = arith.constant 0 : i32
    return %c0_i32, %c0_i32_0 : i32, i32
  }
  func.func @transform_3(%arg0: i32) -> (i32, i32) {
    %c0_i32 = arith.constant 0 : i32
    %c0_i32_0 = arith.constant 0 : i32
    %c0_i32_1 = arith.constant 0 : i32
    return %c0_i32, %c0_i32_0 : i32, i32
  }
  func.func @transform_4(%arg0: i32) -> (i32, i32) {
    %c0_i32 = arith.constant 0 : i32
    %c0_i32_0 = arith.constant 0 : i32
    %c0_i32_1 = arith.constant 0 : i32
    return %c0_i32, %c0_i32_0 : i32, i32
  }
  func.func @transform_5(%arg0: i32) -> (i32, i32, i32) {
    %c0_i32 = arith.constant 0 : i32
    %c0_i32_0 = arith.constant 0 : i32
    %c0_i32_1 = arith.constant 0 : i32
    return %arg0, %c0_i32, %c0_i32_0 : i32, i32, i32
  }
  func.func @transform_6(%arg0: i32) -> (i32, i32) {
    %c0_i32 = arith.constant 0 : i32
    %c0_i32_0 = arith.constant 0 : i32
    %c0_i32_1 = arith.constant 0 : i32
    return %c0_i32, %c0_i32_0 : i32, i32
  }
}

</mosaic_0001>

<llo_original>
// kernel: mgu_forward.1
$region0: #{mgu_forward.1}
  #allocation0 [shape = 'u32[]', space=smem, size = 0x4, offset = 0x4, fixed_abs, tag = 'smem constant byte address 0x4 - core index']
  #allocation1 [shape = 'u32[144,128]{1,0:T(1,128)}', space=vmem, size = 0x12000, scoped, tag = 'internal scratch']
  #allocation2 [shape = 'f32[8,128]{1,0:T(8,128)}', space=vmem, size = 0x1000, scoped, tag = 'scratch operand']
  %s0 = inlined_call_operand.vmem [shape: f32[9,8,128], index: 0, kind: input, shape index: {}]
  %s1 = inlined_call_operand.vmem [shape: f32[9,8,128], index: 1, kind: input, shape index: {}]
  %s2 = inlined_call_operand.vmem [shape: f32[8,128], index: 2, kind: input, shape index: {}]
  %s3 = inlined_call_operand.vmem [shape: f32[128,128], index: 3, kind: input, shape index: {}]
  %s4 = inlined_call_operand.vmem [shape: f32[128,128], index: 4, kind: input, shape index: {}]
  %s5 = inlined_call_operand.vmem [shape: f32[9,1,128], index: 5, kind: output, shape index: {0}]
  %s6 = inlined_call_operand.vmem [shape: f32[8,128], index: 6, kind: output, shape index: {1}]
  %7 = xla_tuple %s5, %s6
  %s8 = sld [smem:[#allocation0]]
  $region65: #{mgu_forward.1} parent=0
    _
  %s10 = ssub.s32 1, %s8
  %s11 = scalar_select 0, %s10, %s8
  loop: start=0, step=1, limit=5
  $region2: #{mgu_forward.1} parent=0 // loop_pre_header
    _
  $region3: #{mgu_forward.1} parent=0 // loop_header
    %s13 = sphi 0, %s17
    %p14 = scmp.ge.s32.totalorder %s13, 5
    %s23 = sphi 0, %s25
    %s26 = sphi 0, %s23
    %s27 = sphi 0, %s26
    %s43 = sphi 0, %s27
    %s49 = sphi 0, %s51
    %s52 = sphi 0, %s49
    %s53 = sphi 0, %s52
    %s69 = sphi 0, %s53
    %s73 = sphi 0, %s73
    %s75 = sphi 0, %s73
    %s76 = sphi 0, %s75
    %s90 = sphi 0, %s76
    %s94 = sphi 0, %s94
    %s96 = sphi 0, %s94
    %s97 = sphi 0, %s96
    %s111 = sphi 0, %s97
    %s115 = sphi 0, %s115
    %s117 = sphi 0, %s115
    %s118 = sphi 0, %s117
    %s132 = sphi 0, %s118
    %s138 = sphi 0, %s140
    %s141 = sphi 0, %s138
    %s142 = sphi 0, %s141
    %s158 = sphi 0, %s142
    %s162 = sphi 0, %s162
    %s164 = sphi 0, %s162
    %s165 = sphi 0, %s164
    %s179 = sphi 0, %s165
  $region4: #{mgu_forward.1} parent=0 // loop_header_branch
    %16 = sbr.rel (%p14) target = $region8
  $region5: #{mgu_forward.1} parent=0 // loop_body
    %s18 = ssub.s32 %s13, 1
    %s19 = ssub.s32 %s13, 2
    %s20 = sadd.s32 %s13, 1
    %s21 = ssub.s32 %s13, %s20
    %p22 = scmp.eq.s32.totalorder %s21, 0
    %s24 = sadd.s32 %s23, 1
    %s25 = scalar_select %p22, %s23, %s24
    %p28 = pneg %p22
    %p29 = scmp.eq.s32.totalorder %s13, 2
    %p30 = por %p28, %p29
    %p31 = scmp.ne.s32.totalorder %s23, %s26
    %p32 = scmp.eq.s32.totalorder %s13, 0
    %p33 = por %p31, %p32
    %p34 = scmp.ne.s32.totalorder %s23, %s26
    %p35 = scmp.eq.s32.totalorder %s18, 2
    %p36 = por %p34, %p35
    %p37 = scmp.ne.s32.totalorder %s26, %s27
    %p38 = scmp.eq.s32.totalorder %s18, 0
    %p39 = por %p37, %p38
    %p40 = scmp.ne.s32.totalorder %s26, %s27
    %p41 = scmp.eq.s32.totalorder %s19, 2
    %p42 = por %p40, %p41
    %p44 = scmp.ne.s32.totalorder %s27, %s43
    %p45 = scmp.eq.s32.totalorder %s19, 0
    %p46 = por %p44, %p45
    %s47 = ssub.s32 %s13, %s20
    %p48 = scmp.eq.s32.totalorder %s47, 0
    %s50 = sadd.s32 %s49, 1
    %s51 = scalar_select %p48, %s49, %s50
    %p54 = pneg %p48
    %p55 = scmp.eq.s32.totalorder %s13, 2
    %p56 = por %p54, %p55
    %p57 = scmp.ne.s32.totalorder %s49, %s52
    %p58 = scmp.eq.s32.totalorder %s13, 0
    %p59 = por %p57, %p58
    %p60 = scmp.ne.s32.totalorder %s49, %s52
    %p61 = scmp.eq.s32.totalorder %s18, 2
    %p62 = por %p60, %p61
    %p63 = scmp.ne.s32.totalorder %s52, %s53
    %p64 = scmp.eq.s32.totalorder %s18, 0
    %p65 = por %p63, %p64
    %p66 = scmp.ne.s32.totalorder %s52, %s53
    %p67 = scmp.eq.s32.totalorder %s19, 2
    %p68 = por %p66, %p67
    %p70 = scmp.ne.s32.totalorder %s53, %s69
    %p71 = scmp.eq.s32.totalorder %s19, 0
    %p72 = por %p70, %p71
    %s74 = sadd.s32 %s73, 1
    %p77 = scmp.eq.s32.totalorder %s13, 2
    %p78 = scmp.ne.s32.totalorder %s73, %s75
    %p79 = scmp.eq.s32.totalorder %s13, 0
    %p80 = por %p78, %p79
    %p81 = scmp.ne.s32.totalorder %s73, %s75
    %p82 = scmp.eq.s32.totalorder %s18, 2
    %p83 = por %p81, %p82
    %p84 = scmp.ne.s32.totalorder %s75, %s76
    %p85 = scmp.eq.s32.totalorder %s18, 0
    %p86 = por %p84, %p85
    %p87 = scmp.ne.s32.totalorder %s75, %s76
    %p88 = scmp.eq.s32.totalorder %s19, 2
    %p89 = por %p87, %p88
    %p91 = scmp.ne.s32.totalorder %s76, %s90
    %p92 = scmp.eq.s32.totalorder %s19, 0
    %p93 = por %p91, %p92
    %s95 = sadd.s32 %s94, 1
    %p98 = scmp.eq.s32.totalorder %s13, 2
    %p99 = scmp.ne.s32.totalorder %s94, %s96
    %p100 = scmp.eq.s32.totalorder %s13, 0
    %p101 = por %p99, %p100
    %p102 = scmp.ne.s32.totalorder %s94, %s96
    %p103 = scmp.eq.s32.totalorder %s18, 2
    %p104 = por %p102, %p103
    %p105 = scmp.ne.s32.totalorder %s96, %s97
    %p106 = scmp.eq.s32.totalorder %s18, 0
    %p107 = por %p105, %p106
    %p108 = scmp.ne.s32.totalorder %s96, %s97
    %p109 = scmp.eq.s32.totalorder %s19, 2
    %p110 = por %p108, %p109
    %p112 = scmp.ne.s32.totalorder %s97, %s111
    %p113 = scmp.eq.s32.totalorder %s19, 0
    %p114 = por %p112, %p113
    %s116 = sadd.s32 %s115, 1
    %p119 = scmp.eq.s32.totalorder %s13, 2
    %p120 = scmp.ne.s32.totalorder %s115, %s117
    %p121 = scmp.eq.s32.totalorder %s13, 0
    %p122 = por %p120, %p121
    %p123 = scmp.ne.s32.totalorder %s115, %s117
    %p124 = scmp.eq.s32.totalorder %s18, 2
    %p125 = por %p123, %p124
    %p126 = scmp.ne.s32.totalorder %s117, %s118
    %p127 = scmp.eq.s32.totalorder %s18, 0
    %p128 = por %p126, %p127
    %p129 = scmp.ne.s32.totalorder %s117, %s118
    %p130 = scmp.eq.s32.totalorder %s19, 2
    %p131 = por %p129, %p130
    %p133 = scmp.ne.s32.totalorder %s118, %s132
    %p134 = scmp.eq.s32.totalorder %s19, 0
    %p135 = por %p133, %p134
    %s136 = ssub.s32 %s13, %s20
    %p137 = scmp.eq.s32.totalorder %s136, 0
    %s139 = sadd.s32 %s138, 1
    %s140 = scalar_select %p137, %s138, %s139
    %p143 = pneg %p137
    %p144 = scmp.eq.s32.totalorder %s13, 2
    %p145 = por %p143, %p144
    %p146 = scmp.ne.s32.totalorder %s138, %s141
    %p147 = scmp.eq.s32.totalorder %s13, 0
    %p148 = por %p146, %p147
    %p149 = scmp.ne.s32.totalorder %s138, %s141
    %p150 = scmp.eq.s32.totalorder %s18, 2
    %p151 = por %p149, %p150
    %p152 = scmp.ne.s32.totalorder %s141, %s142
    %p153 = scmp.eq.s32.totalorder %s18, 0
    %p154 = por %p152, %p153
    %p155 = scmp.ne.s32.totalorder %s141, %s142
    %p156 = scmp.eq.s32.totalorder %s19, 2
    %p157 = por %p155, %p156
    %p159 = scmp.ne.s32.totalorder %s142, %s158
    %p160 = scmp.eq.s32.totalorder %s19, 0
    %p161 = por %p159, %p160
    %s163 = sadd.s32 %s162, 1
    %p166 = scmp.eq.s32.totalorder %s13, 2
    %p167 = scmp.ne.s32.totalorder %s162, %s164
    %p168 = scmp.eq.s32.totalorder %s13, 0
    %p169 = por %p167, %p168
    %p170 = scmp.ne.s32.totalorder %s162, %s164
    %p171 = scmp.eq.s32.totalorder %s18, 2
    %p172 = por %p170, %p171
    %p173 = scmp.ne.s32.totalorder %s164, %s165
    %p174 = scmp.eq.s32.totalorder %s18, 0
    %p175 = por %p173, %p174
    %p176 = scmp.ne.s32.totalorder %s164, %s165
    %p177 = scmp.eq.s32.totalorder %s19, 2
    %p178 = por %p176, %p177
    %p180 = scmp.ne.s32.totalorder %s165, %s179
    %p181 = scmp.eq.s32.totalorder %s19, 0
    %p182 = por %p180, %p181
    %p183 = scmp.le.s32.totalorder 1, %s13
    %p184 = scmp.lt.s32.totalorder %s13, 4
    %p185 = pnand %p183, %p184
    %p186 = pneg %p185
    // Predicated region
    $region9: #{mgu_forward.1} parent=5 // pred_check
      _
    $region10: #{mgu_forward.1} parent=5 // pred_check_branch
      %188 = sbr.rel (%p185) target = $region12
    $region11: #{mgu_forward.1} parent=5 // pred_region
      %s189 = ssub.s32 %s13, 1
      // Predicated region
      $region13: #{mgu_forward.1} parent=11 // pred_check
        %p190 = pneg %p86
      $region14: #{mgu_forward.1} parent=11 // pred_check_branch
        %192 = sbr.rel (%p190) target = $region16
      $region15: #{mgu_forward.1} parent=11 // pred_region
        _
      $region16: #{mgu_forward.1} parent=11 // pred_fallthru
        _
      // Predicated region
      $region17: #{mgu_forward.1} parent=11 // pred_check
        %p193 = pneg %p107
      $region18: #{mgu_forward.1} parent=11 // pred_check_branch
        %195 = sbr.rel (%p193) target = $region20
      $region19: #{mgu_forward.1} parent=11 // pred_region
        _
      $region20: #{mgu_forward.1} parent=11 // pred_fallthru
        _
      // Predicated region
      $region21: #{mgu_forward.1} parent=11 // pred_check
        %p196 = pneg %p128
      $region22: #{mgu_forward.1} parent=11 // pred_check_branch
        %198 = sbr.rel (%p196) target = $region24
      $region23: #{mgu_forward.1} parent=11 // pred_region
        _
      $region24: #{mgu_forward.1} parent=11 // pred_fallthru
        _
    $region12: #{mgu_forward.1} parent=5 // pred_fallthru
      _
    %p199 = scmp.lt.s32.totalorder %s13, 3
    // Predicated region
    $region25: #{mgu_forward.1} parent=5 // pred_check
      %p200 = pneg %p199
    $region26: #{mgu_forward.1} parent=5 // pred_check_branch
      %202 = sbr.rel (%p200) target = $region28
    $region27: #{mgu_forward.1} parent=5 // pred_region
      // Predicated region
      $region29: #{mgu_forward.1} parent=27 // pred_check
        %p203 = pneg %p33
      $region30: #{mgu_forward.1} parent=27 // pred_check_branch
        %205 = sbr.rel (%p203) target = $region32
      $region31: #{mgu_forward.1} parent=27 // pred_region
        %s206 = smul.u32 3, %s13
        %p207 = scmp.lt.s32.totalorder %s206, 8
        %s208 = scalar_select %p207, %s206, 8
        %s209 = smul.addr %s208, 8
        %s210 = scalar_lea.vmem %s0, %s209
        %s211 = smul.u32 3, %s13
      $region32: #{mgu_forward.1} parent=27 // pred_fallthru
        _
      // Predicated region
      $region33: #{mgu_forward.1} parent=27 // pred_check
        %p212 = pneg %p59
      $region34: #{mgu_forward.1} parent=27 // pred_check_branch
        %214 = sbr.rel (%p212) target = $region36
      $region35: #{mgu_forward.1} parent=27 // pred_region
        %s215 = smul.u32 3, %s13
        %p216 = scmp.lt.s32.totalorder %s215, 8
        %s217 = scalar_select %p216, %s215, 8
        %s218 = smul.addr %s217, 8
        %s219 = scalar_lea.vmem %s1, %s218
        %s220 = smul.u32 3, %s13
      $region36: #{mgu_forward.1} parent=27 // pred_fallthru
        _
    $region28: #{mgu_forward.1} parent=5 // pred_fallthru
      _
    %p221 = scmp.le.s32.totalorder 1, %s13
    %p222 = scmp.lt.s32.totalorder %s13, 4
    %p223 = pnand %p221, %p222
    %p224 = pneg %p223
    // Predicated region
    $region37: #{mgu_forward.1} parent=5 // pred_check
      _
    $region38: #{mgu_forward.1} parent=5 // pred_check_branch
      %226 = sbr.rel (%p223) target = $region40
    $region39: #{mgu_forward.1} parent=5 // pred_region
      %s227 = ssub.s32 %s13, 1
      %s228 = smul.u32 3, %s18
      %p229 = scmp.lt.s32.totalorder %s228, 8
      %s230 = scalar_select %p229, %s228, 8
      %s231 = smul.addr %s230, 8
      %s232 = scalar_lea.vmem %s0, %s231
      %p233 = pneg %p39
      %p234 = pneg %p36
      %s235 = smul.u32 3, %s18
      %p236 = scmp.lt.s32.totalorder %s235, 8
      %s237 = scalar_select %p236, %s235, 8
      %s238 = smul.addr %s237, 8
      %s239 = scalar_lea.vmem %s1, %s238
      %p240 = pneg %p65
      %p241 = pneg %p62
      %p242 = pneg %p86
      %p243 = pneg %p83
      %p244 = pneg %p107
      %p245 = pneg %p104
      %p246 = pneg %p128
      %p247 = pneg %p125
      %p248 = pneg %p154
      %p249 = pneg %p151
      %s250 = smul.u32 3, %s18
      %p251 = scmp.lt.s32.totalorder %s250, 8
      %s252 = scalar_select %p251, %s250, 8
      %s253 = scalar_lea.vmem %s5, %s252
      %p254 = pneg %p175
      %p255 = pneg %p172
      %s256 = smul.u32 3, %s18
      %p257 = scmp.lt.s32.totalorder %s256, 8
      %s258 = scalar_select %p257, %s256, 8
      %s259 = smul.addr %s258, 8
      %s260 = scalar_lea.vmem %s0, %s259
      %s261 = smul.u32 3, %s18
      %s262 = smul.u32 3, %s18
      %p263 = scmp.lt.s32.totalorder %s262, 8
      %s264 = scalar_select %p263, %s262, 8
      %s265 = smul.addr %s264, 8
      %s266 = scalar_lea.vmem %s1, %s265
      %s267 = smul.u32 3, %s18
      %s268 = smul.u32 3, %s18
      %p269 = scmp.lt.s32.totalorder %s268, 8
      %s270 = scalar_select %p269, %s268, 8
      %s271 = scalar_lea.vmem %s5, %s270
      %s272 = smul.u32 3, %s18
      %p273 = scmp.eq.s32.totalorder %s18, 0
      // Predicated region
      $region41: #{mgu_forward.1} parent=39 // pred_check
        %p274 = pneg %p273
      $region42: #{mgu_forward.1} parent=39 // pred_check_branch
        %276 = sbr.rel (%p274) target = $region44
      $region43: #{mgu_forward.1} parent=39 // pred_region
        %v277 = vld [vmem:[%s2] sm:$0xff]
        %278 = vst [vmem:[#allocation2] sm:$0xff] %v277
      $region44: #{mgu_forward.1} parent=39 // pred_fallthru
        _
      %v279 = vld [vmem:[%s3] sm:$0xff]
      %v280 = vld [vmem:[%s3 + $0x8] sm:$0xff]
      %v281 = vld [vmem:[%s3 + $0x10] sm:$0xff]
      %v282 = vld [vmem:[%s3 + $0x18] sm:$0xff]
      %v283 = vld [vmem:[%s3 + $0x20] sm:$0xff]
      %v284 = vld [vmem:[%s3 + $0x28] sm:$0xff]
      %v285 = vld [vmem:[%s3 + $0x30] sm:$0xff]
      %v286 = vld [vmem:[%s3 + $0x38] sm:$0xff]
      %v287 = vld [vmem:[%s3 + $0x40] sm:$0xff]
      %v288 = vld [vmem:[%s3 + $0x48] sm:$0xff]
      %v289 = vld [vmem:[%s3 + $0x50] sm:$0xff]
      %v290 = vld [vmem:[%s3 + $0x58] sm:$0xff]
      %v291 = vld [vmem:[%s3 + $0x60] sm:$0xff]
      %v292 = vld [vmem:[%s3 + $0x68] sm:$0xff]
      %v293 = vld [vmem:[%s3 + $0x70] sm:$0xff]
      %v294 = vld [vmem:[%s3 + $0x78] sm:$0xff]
      %v295 = vld [vmem:[%s4] sm:$0xff]
      %v296 = vld [vmem:[%s4 + $0x8] sm:$0xff]
      %v297 = vld [vmem:[%s4 + $0x10] sm:$0xff]
      %v298 = vld [vmem:[%s4 + $0x18] sm:$0xff]
      %v299 = vld [vmem:[%s4 + $0x20] sm:$0xff]
      %v300 = vld [vmem:[%s4 + $0x28] sm:$0xff]
      %v301 = vld [vmem:[%s4 + $0x30] sm:$0xff]
      %v302 = vld [vmem:[%s4 + $0x38] sm:$0xff]
      %v303 = vld [vmem:[%s4 + $0x40] sm:$0xff]
      %v304 = vld [vmem:[%s4 + $0x48] sm:$0xff]
      %v305 = vld [vmem:[%s4 + $0x50] sm:$0xff]
      %v306 = vld [vmem:[%s4 + $0x58] sm:$0xff]
      %v307 = vld [vmem:[%s4 + $0x60] sm:$0xff]
      %v308 = vld [vmem:[%s4 + $0x68] sm:$0xff]
      %v309 = vld [vmem:[%s4 + $0x70] sm:$0xff]
      %v310 = vld [vmem:[%s4 + $0x78] sm:$0xff]
      %v311 = vld [vmem:[#allocation2] sm:$0xff]
      %v312 = vld [vmem:[%s260] sm:$0xff]
      %313 = vmatprep.subr.mxu0 0.0
      %v314 = vand.u32 %v279, 4294901760
      %315 = vmatpush1.msra.mxu0 %v314
      %316 = vmatprep.subr.mxu0 0.0
      %v317 = vand.u32 %v280, 4294901760
      %318 = vmatpush1.msra.mxu0 %v317
      %319 = vmatprep.subr.mxu0 0.0
      %v320 = vand.u32 %v281, 4294901760
      %321 = vmatpush1.msra.mxu0 %v320
      %322 = vmatprep.subr.mxu0 0.0
      %v323 = vand.u32 %v282, 4294901760
      %324 = vmatpush1.msra.mxu0 %v323
      %325 = vmatprep.subr.mxu0 0.0
      %v326 = vand.u32 %v283, 4294901760
      %327 = vmatpush1.msra.mxu0 %v326
      %328 = vmatprep.subr.mxu0 0.0
      %v329 = vand.u32 %v284, 4294901760
      %330 = vmatpush1.msra.mxu0 %v329
      %331 = vmatprep.subr.mxu0 0.0
      %v332 = vand.u32 %v285, 4294901760
      %333 = vmatpush1.msra.mxu0 %v332
      %334 = vmatprep.subr.mxu0 0.0
      %v335 = vand.u32 %v286, 4294901760
      %336 = vmatpush1.msra.mxu0 %v335
      %337 = vmatprep.subr.mxu0 0.0
      %v338 = vand.u32 %v287, 4294901760
      %339 = vmatpush1.msra.mxu0 %v338
      %340 = vmatprep.subr.mxu0 0.0
      %v341 = vand.u32 %v288, 4294901760
      %342 = vmatpush1.msra.mxu0 %v341
      %343 = vmatprep.subr.mxu0 0.0
      %v344 = vand.u32 %v289, 4294901760
      %345 = vmatpush1.msra.mxu0 %v344
      %346 = vmatprep.subr.mxu0 0.0
      %v347 = vand.u32 %v290, 4294901760
      %348 = vmatpush1.msra.mxu0 %v347
      %349 = vmatprep.subr.mxu0 0.0
      %v350 = vand.u32 %v291, 4294901760
      %351 = vmatpush1.msra.mxu0 %v350
      %352 = vmatprep.subr.mxu0 0.0
      %v353 = vand.u32 %v292, 4294901760
      %354 = vmatpush1.msra.mxu0 %v353
      %355 = vmatprep.subr.mxu0 0.0
      %v356 = vand.u32 %v293, 4294901760
      %357 = vmatpush1.msra.mxu0 %v356
      %358 = vmatprep.subr.mxu0 0.0
      %v359 = vand.u32 %v294, 4294901760
      %360 = vmatpush1.msra.mxu0 %v359
      %361 = vmatprep.subr.mxu0 0.0
      %362 = vmatpush1.msra.mxu0 0.0
      %363 = vmatprep.subr.mxu0 0.0
      %364 = vmatpush1.msra.mxu0 0.0
      %365 = vmatprep.subr.mxu0 0.0
      %366 = vmatpush1.msra.mxu0 0.0
      %367 = vmatprep.subr.mxu0 0.0
      %368 = vmatpush1.msra.mxu0 0.0
      %369 = vmatprep.subr.mxu0 0.0
      %370 = vmatpush1.msra.mxu0 0.0
      %371 = vmatprep.subr.mxu0 0.0
      %372 = vmatpush1.msra.mxu0 0.0
      %373 = vmatprep.subr.mxu0 0.0
      %374 = vmatpush1.msra.mxu0 0.0
      %375 = vmatprep.subr.mxu0 0.0
      %376 = vmatpush1.msra.mxu0 0.0
      %377 = vmatprep.subr.mxu0 0.0
      %378 = vmatpush1.msra.mxu0 0.0
      %379 = vmatprep.subr.mxu0 0.0
      %380 = vmatpush1.msra.mxu0 0.0
      %381 = vmatprep.subr.mxu0 0.0
      %382 = vmatpush1.msra.mxu0 0.0
      %383 = vmatprep.subr.mxu0 0.0
      %384 = vmatpush1.msra.mxu0 0.0
      %385 = vmatprep.subr.mxu0 0.0
      %386 = vmatpush1.msra.mxu0 0.0
      %387 = vmatprep.subr.mxu0 0.0
      %388 = vmatpush1.msra.mxu0 0.0
      %389 = vmatprep.subr.mxu0 0.0
      %390 = vmatpush1.msra.mxu0 0.0
      %391 = vmatprep.subr.mxu0 0.0
      %392 = vmatpush1.msra.mxu0 0.0
      %393 = vmatprep.mubr.f32.mxu0 0.0
      %v394 = vand.u32 %v311, 4294901760
      %v395 = vsub.f32 %v311, %v394
      %v396 = vand.u32 %v395, 4294901760
      %v397 = vsub.f32 %v395, %v396
      %v398 = vand.u32 %v397, 4294901760
      %399 = vmatmul.mubr.f32.gmra.mrb[0].mxu0 %v398
      %v400 = vpop.f32.mrb[0].mxu0
      %v401 = vadd.f32 0.0, %v400
      %v402 = vpop.f32.mrb[0].mxu0
      %403 = vdwg.mxu0
      %404 = vmatprep.subr.mxu0 0.0
      %v405 = vand.u32 %v279, 4294901760
      %v406 = vsub.f32 %v279, %v405
      %v407 = vand.u32 %v406, 4294901760
      %v408 = vsub.f32 %v406, %v407
      %v409 = vand.u32 %v408, 4294901760
      %410 = vmatpush1.msra.mxu0 %v409
      %411 = vmatprep.subr.mxu0 0.0
      %v412 = vand.u32 %v280, 4294901760
      %v413 = vsub.f32 %v280, %v412
      %v414 = vand.u32 %v413, 4294901760
      %v415 = vsub.f32 %v413, %v414
      %v416 = vand.u32 %v415, 4294901760
      %417 = vmatpush1.msra.mxu0 %v416
      %418 = vmatprep.subr.mxu0 0.0
      %v419 = vand.u32 %v281, 4294901760
      %v420 = vsub.f32 %v281, %v419
      %v421 = vand.u32 %v420, 4294901760
      %v422 = vsub.f32 %v420, %v421
      %v423 = vand.u32 %v422, 4294901760
      %424 = vmatpush1.msra.mxu0 %v423
      %425 = vmatprep.subr.mxu0 0.0
      %v426 = vand.u32 %v282, 4294901760
      %v427 = vsub.f32 %v282, %v426
      %v428 = vand.u32 %v427, 4294901760
      %v429 = vsub.f32 %v427, %v428
      %v430 = vand.u32 %v429, 4294901760
      %431 = vmatpush1.msra.mxu0 %v430
      %432 = vmatprep.subr.mxu0 0.0
      %v433 = vand.u32 %v283, 4294901760
      %v434 = vsub.f32 %v283, %v433
      %v435 = vand.u32 %v434, 4294901760
      %v436 = vsub.f32 %v434, %v435
      %v437 = vand.u32 %v436, 4294901760
      %438 = vmatpush1.msra.mxu0 %v437
      %439 = vmatprep.subr.mxu0 0.0
      %v440 = vand.u32 %v284, 4294901760
      %v441 = vsub.f32 %v284, %v440
      %v442 = vand.u32 %v441, 4294901760
      %v443 = vsub.f32 %v441, %v442
      %v444 = vand.u32 %v443, 4294901760
      %445 = vmatpush1.msra.mxu0 %v444
      %446 = vmatprep.subr.mxu0 0.0
      %v447 = vand.u32 %v285, 4294901760
      %v448 = vsub.f32 %v285, %v447
      %v449 = vand.u32 %v448, 4294901760
      %v450 = vsub.f32 %v448, %v449
      %v451 = vand.u32 %v450, 4294901760
      %452 = vmatpush1.msra.mxu0 %v451
      %453 = vmatprep.subr.mxu0 0.0
      %v454 = vand.u32 %v286, 4294901760
      %v455 = vsub.f32 %v286, %v454
      %v456 = vand.u32 %v455, 4294901760
      %v457 = vsub.f32 %v455, %v456
      %v458 = vand.u32 %v457, 4294901760
      %459 = vmatpush1.msra.mxu0 %v458
      %460 = vmatprep.subr.mxu0 0.0
      %v461 = vand.u32 %v287, 4294901760
      %v462 = vsub.f32 %v287, %v461
      %v463 = vand.u32 %v462, 4294901760
      %v464 = vsub.f32 %v462, %v463
      %v465 = vand.u32 %v464, 4294901760
      %466 = vmatpush1.msra.mxu0 %v465
      %467 = vmatprep.subr.mxu0 0.0
      %v468 = vand.u32 %v288, 4294901760
      %v469 = vsub.f32 %v288, %v468
      %v470 = vand.u32 %v469, 4294901760
      %v471 = vsub.f32 %v469, %v470
      %v472 = vand.u32 %v471, 4294901760
      %473 = vmatpush1.msra.mxu0 %v472
      %474 = vmatprep.subr.mxu0 0.0
      %v475 = vand.u32 %v289, 4294901760
      %v476 = vsub.f32 %v289, %v475
      %v477 = vand.u32 %v476, 4294901760
      %v478 = vsub.f32 %v476, %v477
      %v479 = vand.u32 %v478, 4294901760
      %480 = vmatpush1.msra.mxu0 %v479
      %481 = vmatprep.subr.mxu0 0.0
      %v482 = vand.u32 %v290, 4294901760
      %v483 = vsub.f32 %v290, %v482
      %v484 = vand.u32 %v483, 4294901760
      %v485 = vsub.f32 %v483, %v484
      %v486 = vand.u32 %v485, 4294901760
      %487 = vmatpush1.msra.mxu0 %v486
      %488 = vmatprep.subr.mxu0 0.0
      %v489 = vand.u32 %v291, 4294901760
      %v490 = vsub.f32 %v291, %v489
      %v491 = vand.u32 %v490, 4294901760
      %v492 = vsub.f32 %v490, %v491
      %v493 = vand.u32 %v492, 4294901760
      %494 = vmatpush1.msra.mxu0 %v493
      %495 = vmatprep.subr.mxu0 0.0
      %v496 = vand.u32 %v292, 4294901760
      %v497 = vsub.f32 %v292, %v496
      %v498 = vand.u32 %v497, 4294901760
      %v499 = vsub.f32 %v497, %v498
      %v500 = vand.u32 %v499, 4294901760
      %501 = vmatpush1.msra.mxu0 %v500
      %502 = vmatprep.subr.mxu0 0.0
      %v503 = vand.u32 %v293, 4294901760
      %v504 = vsub.f32 %v293, %v503
      %v505 = vand.u32 %v504, 4294901760
      %v506 = vsub.f32 %v504, %v505
      %v507 = vand.u32 %v506, 4294901760
      %508 = vmatpush1.msra.mxu0 %v507
      %509 = vmatprep.subr.mxu0 0.0
      %v510 = vand.u32 %v294, 4294901760
      %v511 = vsub.f32 %v294, %v510
      %v512 = vand.u32 %v511, 4294901760
      %v513 = vsub.f32 %v511, %v512
      %v514 = vand.u32 %v513, 4294901760
      %515 = vmatpush1.msra.mxu0 %v514
      %516 = vmatprep.subr.mxu0 0.0
      %517 = vmatpush1.msra.mxu0 0.0
      %518 = vmatprep.subr.mxu0 0.0
      %519 = vmatpush1.msra.mxu0 0.0
      %520 = vmatprep.subr.mxu0 0.0
      %521 = vmatpush1.msra.mxu0 0.0
      %522 = vmatprep.subr.mxu0 0.0
      %523 = vmatpush1.msra.mxu0 0.0
      %524 = vmatprep.subr.mxu0 0.0
      %525 = vmatpush1.msra.mxu0 0.0
      %526 = vmatprep.subr.mxu0 0.0
      %527 = vmatpush1.msra.mxu0 0.0
      %528 = vmatprep.subr.mxu0 0.0
      %529 = vmatpush1.msra.mxu0 0.0
      %530 = vmatprep.subr.mxu0 0.0
      %531 = vmatpush1.msra.mxu0 0.0
      %532 = vmatprep.subr.mxu0 0.0
      %533 = vmatpush1.msra.mxu0 0.0
      %534 = vmatprep.subr.mxu0 0.0
      %535 = vmatpush1.msra.mxu0 0.0
      %536 = vmatprep.subr.mxu0 0.0
      %537 = vmatpush1.msra.mxu0 0.0
      %538 = vmatprep.subr.mxu0 0.0
      %539 = vmatpush1.msra.mxu0 0.0
      %540 = vmatprep.subr.mxu0 0.0
      %541 = vmatpush1.msra.mxu0 0.0
      %542 = vmatprep.subr.mxu0 0.0
      %543 = vmatpush1.msra.mxu0 0.0
      %544 = vmatprep.subr.mxu0 0.0
      %545 = vmatpush1.msra.mxu0 0.0
      %546 = vmatprep.subr.mxu0 0.0
      %547 = vmatpush1.msra.mxu0 0.0
      %548 = vmatprep.mubr.f32.mxu0 0.0
      %v549 = vand.u32 %v311, 4294901760
      %550 = vmatmul.mubr.f32.gmra.mrb[0].mxu0 %v549
      %v551 = vpop.f32.mrb[0].mxu0
      %v552 = vadd.f32 %v401, %v551
      %v553 = vpop.f32.mrb[0].mxu0
      %554 = vdwg.mxu0
      %555 = vmatprep.subr.mxu0 0.0
      %v556 = vand.u32 %v279, 4294901760
      %v557 = vsub.f32 %v279, %v556
      %558 = vmatpush1.msra.mxu0 %v557
      %559 = vmatprep.subr.mxu0 0.0
      %v560 = vand.u32 %v280, 4294901760
      %v561 = vsub.f32 %v280, %v560
      %562 = vmatpush1.msra.mxu0 %v561
      %563 = vmatprep.subr.mxu0 0.0
      %v564 = vand.u32 %v281, 4294901760
      %v565 = vsub.f32 %v281, %v564
      %566 = vmatpush1.msra.mxu0 %v565
      %567 = vmatprep.subr.mxu0 0.0
      %v568 = vand.u32 %v282, 4294901760
      %v569 = vsub.f32 %v282, %v568
      %570 = vmatpush1.msra.mxu0 %v569
      %571 = vmatprep.subr.mxu0 0.0
      %v572 = vand.u32 %v283, 4294901760
      %v573 = vsub.f32 %v283, %v572
      %574 = vmatpush1.msra.mxu0 %v573
      %575 = vmatprep.subr.mxu0 0.0
      %v576 = vand.u32 %v284, 4294901760
      %v577 = vsub.f32 %v284, %v576
      %578 = vmatpush1.msra.mxu0 %v577
      %579 = vmatprep.subr.mxu0 0.0
      %v580 = vand.u32 %v285, 4294901760
      %v581 = vsub.f32 %v285, %v580
      %582 = vmatpush1.msra.mxu0 %v581
      %583 = vmatprep.subr.mxu0 0.0
      %v584 = vand.u32 %v286, 4294901760
      %v585 = vsub.f32 %v286, %v584
      %586 = vmatpush1.msra.mxu0 %v585
      %587 = vmatprep.subr.mxu0 0.0
      %v588 = vand.u32 %v287, 4294901760
      %v589 = vsub.f32 %v287, %v588
      %590 = vmatpush1.msra.mxu0 %v589
      %591 = vmatprep.subr.mxu0 0.0
      %v592 = vand.u32 %v288, 4294901760
      %v593 = vsub.f32 %v288, %v592
      %594 = vmatpush1.msra.mxu0 %v593
      %595 = vmatprep.subr.mxu0 0.0
      %v596 = vand.u32 %v289, 4294901760
      %v597 = vsub.f32 %v289, %v596
      %598 = vmatpush1.msra.mxu0 %v597
      %599 = vmatprep.subr.mxu0 0.0
      %v600 = vand.u32 %v290, 4294901760
      %v601 = vsub.f32 %v290, %v600
      %602 = vmatpush1.msra.mxu0 %v601
      %603 = vmatprep.subr.mxu0 0.0
      %v604 = vand.u32 %v291, 4294901760
      %v605 = vsub.f32 %v291, %v604
      %606 = vmatpush1.msra.mxu0 %v605
      %607 = vmatprep.subr.mxu0 0.0
      %v608 = vand.u32 %v292, 4294901760
      %v609 = vsub.f32 %v292, %v608
      %610 = vmatpush1.msra.mxu0 %v609
      %611 = vmatprep.subr.mxu0 0.0
      %v612 = vand.u32 %v293, 4294901760
      %v613 = vsub.f32 %v293, %v612
      %614 = vmatpush1.msra.mxu0 %v613
      %615 = vmatprep.subr.mxu0 0.0
      %v616 = vand.u32 %v294, 4294901760
      %v617 = vsub.f32 %v294, %v616
      %618 = vmatpush1.msra.mxu0 %v617
      %619 = vmatprep.subr.mxu0 0.0
      %620 = vmatpush1.msra.mxu0 0.0
      %621 = vmatprep.subr.mxu0 0.0
      %622 = vmatpush1.msra.mxu0 0.0
      %623 = vmatprep.subr.mxu0 0.0
      %624 = vmatpush1.msra.mxu0 0.0
      %625 = vmatprep.subr.mxu0 0.0
      %626 = vmatpush1.msra.mxu0 0.0
      %627 = vmatprep.subr.mxu0 0.0
      %628 = vmatpush1.msra.mxu0 0.0
      %629 = vmatprep.subr.mxu0 0.0
      %630 = vmatpush1.msra.mxu0 0.0
      %631 = vmatprep.subr.mxu0 0.0
      %632 = vmatpush1.msra.mxu0 0.0
      %633 = vmatprep.subr.mxu0 0.0
      %634 = vmatpush1.msra.mxu0 0.0
      %635 = vmatprep.subr.mxu0 0.0
      %636 = vmatpush1.msra.mxu0 0.0
      %637 = vmatprep.subr.mxu0 0.0
      %638 = vmatpush1.msra.mxu0 0.0
      %639 = vmatprep.subr.mxu0 0.0
      %640 = vmatpush1.msra.mxu0 0.0
      %641 = vmatprep.subr.mxu0 0.0
      %642 = vmatpush1.msra.mxu0 0.0
      %643 = vmatprep.subr.mxu0 0.0
      %644 = vmatpush1.msra.mxu0 0.0
      %645 = vmatprep.subr.mxu0 0.0
      %646 = vmatpush1.msra.mxu0 0.0
      %647 = vmatprep.subr.mxu0 0.0
      %648 = vmatpush1.msra.mxu0 0.0
      %649 = vmatprep.subr.mxu0 0.0
      %650 = vmatpush1.msra.mxu0 0.0
      %651 = vmatprep.mubr.f32.mxu0 0.0
      %v652 = vand.u32 %v311, 4294901760
      %v653 = vsub.f32 %v311, %v652
      %654 = vmatmul.mubr.f32.gmra.mrb[0].mxu0 %v653
      %v655 = vpop.f32.mrb[0].mxu0
      %v656 = vadd.f32 %v552, %v655
      %v657 = vpop.f32.mrb[0].mxu0
      %658 = vdwg.mxu0
      %659 = vmatprep.subr.mxu0 0.0
      %v660 = vand.u32 %v279, 4294901760
      %661 = vmatpush1.msra.mxu0 %v660
      %662 = vmatprep.subr.mxu0 0.0
      %v663 = vand.u32 %v280, 4294901760
      %664 = vmatpush1.msra.mxu0 %v663
      %665 = vmatprep.subr.mxu0 0.0
      %v666 = vand.u32 %v281, 4294901760
      %667 = vmatpush1.msra.mxu0 %v666
      %668 = vmatprep.subr.mxu0 0.0
      %v669 = vand.u32 %v282, 4294901760
      %670 = vmatpush1.msra.mxu0 %v669
      %671 = vmatprep.subr.mxu0 0.0
      %v672 = vand.u32 %v283, 4294901760
      %673 = vmatpush1.msra.mxu0 %v672
      %674 = vmatprep.subr.mxu0 0.0
      %v675 = vand.u32 %v284, 4294901760
      %676 = vmatpush1.msra.mxu0 %v675
      %677 = vmatprep.subr.mxu0 0.0
      %v678 = vand.u32 %v285, 4294901760
      %679 = vmatpush1.msra.mxu0 %v678
      %680 = vmatprep.subr.mxu0 0.0
      %v681 = vand.u32 %v286, 4294901760
      %682 = vmatpush1.msra.mxu0 %v681
      %683 = vmatprep.subr.mxu0 0.0
      %v684 = vand.u32 %v287, 4294901760
      %685 = vmatpush1.msra.mxu0 %v684
      %686 = vmatprep.subr.mxu0 0.0
      %v687 = vand.u32 %v288, 4294901760
      %688 = vmatpush1.msra.mxu0 %v687
      %689 = vmatprep.subr.mxu0 0.0
      %v690 = vand.u32 %v289, 4294901760
      %691 = vmatpush1.msra.mxu0 %v690
      %692 = vmatprep.subr.mxu0 0.0
      %v693 = vand.u32 %v290, 4294901760
      %694 = vmatpush1.msra.mxu0 %v693
      %695 = vmatprep.subr.mxu0 0.0
      %v696 = vand.u32 %v291, 4294901760
      %697 = vmatpush1.msra.mxu0 %v696
      %698 = vmatprep.subr.mxu0 0.0
      %v699 = vand.u32 %v292, 4294901760
      %700 = vmatpush1.msra.mxu0 %v699
      %701 = vmatprep.subr.mxu0 0.0
      %v702 = vand.u32 %v293, 4294901760
      %703 = vmatpush1.msra.mxu0 %v702
      %704 = vmatprep.subr.mxu0 0.0
      %v705 = vand.u32 %v294, 4294901760
      %706 = vmatpush1.msra.mxu0 %v705
      %707 = vmatprep.subr.mxu0 0.0
      %708 = vmatpush1.msra.mxu0 0.0
      %709 = vmatprep.subr.mxu0 0.0
      %710 = vmatpush1.msra.mxu0 0.0
      %711 = vmatprep.subr.mxu0 0.0
      %712 = vmatpush1.msra.mxu0 0.0
      %713 = vmatprep.subr.mxu0 0.0
      %714 = vmatpush1.msra.mxu0 0.0
      %715 = vmatprep.subr.mxu0 0.0
      %716 = vmatpush1.msra.mxu0 0.0
      %717 = vmatprep.subr.mxu0 0.0
      %718 = vmatpush1.msra.mxu0 0.0
      %719 = vmatprep.subr.mxu0 0.0
      %720 = vmatpush1.msra.mxu0 0.0
      %721 = vmatprep.subr.mxu0 0.0
      %722 = vmatpush1.msra.mxu0 0.0
      %723 = vmatprep.subr.mxu0 0.0
      %724 = vmatpush1.msra.mxu0 0.0
      %725 = vmatprep.subr.mxu0 0.0
      %726 = vmatpush1.msra.mxu0 0.0
      %727 = vmatprep.subr.mxu0 0.0
      %728 = vmatpush1.msra.mxu0 0.0
      %729 = vmatprep.subr.mxu0 0.0
      %730 = vmatpush1.msra.mxu0 0.0
      %731 = vmatprep.subr.mxu0 0.0
      %732 = vmatpush1.msra.mxu0 0.0
      %733 = vmatprep.subr.mxu0 0.0
      %734 = vmatpush1.msra.mxu0 0.0
      %735 = vmatprep.subr.mxu0 0.0
      %736 = vmatpush1.msra.mxu0 0.0
      %737 = vmatprep.subr.mxu0 0.0
      %738 = vmatpush1.msra.mxu0 0.0
      %739 = vmatprep.mubr.f32.mxu0 0.0
      %v740 = vand.u32 %v311, 4294901760
      %v741 = vsub.f32 %v311, %v740
      %v742 = vand.u32 %v741, 4294901760
      %743 = vmatmul.mubr.f32.gmra.mrb[0].mxu0 %v742
      %v744 = vpop.f32.mrb[0].mxu0
      %v745 = vadd.f32 %v656, %v744
      %v746 = vpop.f32.mrb[0].mxu0
      %747 = vdwg.mxu0
      %748 = vmatprep.subr.mxu0 0.0
      %v749 = vand.u32 %v279, 4294901760
      %v750 = vsub.f32 %v279, %v749
      %v751 = vand.u32 %v750, 4294901760
      %752 = vmatpush1.msra.mxu0 %v751
      %753 = vmatprep.subr.mxu0 0.0
      %v754 = vand.u32 %v280, 4294901760
      %v755 = vsub.f32 %v280, %v754
      %v756 = vand.u32 %v755, 4294901760
      %757 = vmatpush1.msra.mxu0 %v756
      %758 = vmatprep.subr.mxu0 0.0
      %v759 = vand.u32 %v281, 4294901760
      %v760 = vsub.f32 %v281, %v759
      %v761 = vand.u32 %v760, 4294901760
      %762 = vmatpush1.msra.mxu0 %v761
      %763 = vmatprep.subr.mxu0 0.0
      %v764 = vand.u32 %v282, 4294901760
      %v765 = vsub.f32 %v282, %v764
      %v766 = vand.u32 %v765, 4294901760
      %767 = vmatpush1.msra.mxu0 %v766
      %768 = vmatprep.subr.mxu0 0.0
      %v769 = vand.u32 %v283, 4294901760
      %v770 = vsub.f32 %v283, %v769
      %v771 = vand.u32 %v770, 4294901760
      %772 = vmatpush1.msra.mxu0 %v771
      %773 = vmatprep.subr.mxu0 0.0
      %v774 = vand.u32 %v284, 4294901760
      %v775 = vsub.f32 %v284, %v774
      %v776 = vand.u32 %v775, 4294901760
      %777 = vmatpush1.msra.mxu0 %v776
      %778 = vmatprep.subr.mxu0 0.0
      %v779 = vand.u32 %v285, 4294901760
      %v780 = vsub.f32 %v285, %v779
      %v781 = vand.u32 %v780, 4294901760
      %782 = vmatpush1.msra.mxu0 %v781
      %783 = vmatprep.subr.mxu0 0.0
      %v784 = vand.u32 %v286, 4294901760
      %v785 = vsub.f32 %v286, %v784
      %v786 = vand.u32 %v785, 4294901760
      %787 = vmatpush1.msra.mxu0 %v786
      %788 = vmatprep.subr.mxu0 0.0
      %v789 = vand.u32 %v287, 4294901760
      %v790 = vsub.f32 %v287, %v789
      %v791 = vand.u32 %v790, 4294901760
      %792 = vmatpush1.msra.mxu0 %v791
      %793 = vmatprep.subr.mxu0 0.0
      %v794 = vand.u32 %v288, 4294901760
      %v795 = vsub.f32 %v288, %v794
      %v796 = vand.u32 %v795, 4294901760
      %797 = vmatpush1.msra.mxu0 %v796
      %798 = vmatprep.subr.mxu0 0.0
      %v799 = vand.u32 %v289, 4294901760
      %v800 = vsub.f32 %v289, %v799
      %v801 = vand.u32 %v800, 4294901760
      %802 = vmatpush1.msra.mxu0 %v801
      %803 = vmatprep.subr.mxu0 0.0
      %v804 = vand.u32 %v290, 4294901760
      %v805 = vsub.f32 %v290, %v804
      %v806 = vand.u32 %v805, 4294901760
      %807 = vmatpush1.msra.mxu0 %v806
      %808 = vmatprep.subr.mxu0 0.0
      %v809 = vand.u32 %v291, 4294901760
      %v810 = vsub.f32 %v291, %v809
      %v811 = vand.u32 %v810, 4294901760
      %812 = vmatpush1.msra.mxu0 %v811
      %813 = vmatprep.subr.mxu0 0.0
      %v814 = vand.u32 %v292, 4294901760
      %v815 = vsub.f32 %v292, %v814
      %v816 = vand.u32 %v815, 4294901760
      %817 = vmatpush1.msra.mxu0 %v816
      %818 = vmatprep.subr.mxu0 0.0
      %v819 = vand.u32 %v293, 4294901760
      %v820 = vsub.f32 %v293, %v819
      %v821 = vand.u32 %v820, 4294901760
      %822 = vmatpush1.msra.mxu0 %v821
      %823 = vmatprep.subr.mxu0 0.0
      %v824 = vand.u32 %v294, 4294901760
      %v825 = vsub.f32 %v294, %v824
      %v826 = vand.u32 %v825, 4294901760
      %827 = vmatpush1.msra.mxu0 %v826
      %828 = vmatprep.subr.mxu0 0.0
      %829 = vmatpush1.msra.mxu0 0.0
      %830 = vmatprep.subr.mxu0 0.0
      %831 = vmatpush1.msra.mxu0 0.0
      %832 = vmatprep.subr.mxu0 0.0
      %833 = vmatpush1.msra.mxu0 0.0
      %834 = vmatprep.subr.mxu0 0.0
      %835 = vmatpush1.msra.mxu0 0.0
      %836 = vmatprep.subr.mxu0 0.0
      %837 = vmatpush1.msra.mxu0 0.0
      %838 = vmatprep.subr.mxu0 0.0
      %839 = vmatpush1.msra.mxu0 0.0
      %840 = vmatprep.subr.mxu0 0.0
      %841 = vmatpush1.msra.mxu0 0.0
      %842 = vmatprep.subr.mxu0 0.0
      %843 = vmatpush1.msra.mxu0 0.0
      %844 = vmatprep.subr.mxu0 0.0
      %845 = vmatpush1.msra.mxu0 0.0
      %846 = vmatprep.subr.mxu0 0.0
      %847 = vmatpush1.msra.mxu0 0.0
      %848 = vmatprep.subr.mxu0 0.0
      %849 = vmatpush1.msra.mxu0 0.0
      %850 = vmatprep.subr.mxu0 0.0
      %851 = vmatpush1.msra.mxu0 0.0
      %852 = vmatprep.subr.mxu0 0.0
      %853 = vmatpush1.msra.mxu0 0.0
      %854 = vmatprep.subr.mxu0 0.0
      %855 = vmatpush1.msra.mxu0 0.0
      %856 = vmatprep.subr.mxu0 0.0
      %857 = vmatpush1.msra.mxu0 0.0
      %858 = vmatprep.subr.mxu0 0.0
      %859 = vmatpush1.msra.mxu0 0.0
      %860 = vmatprep.mubr.f32.mxu0 0.0
      %v861 = vand.u32 %v311, 4294901760
      %862 = vmatmul.mubr.f32.gmra.mrb[0].mxu0 %v861
      %v863 = vpop.f32.mrb[0].mxu0
      %v864 = vadd.f32 %v745, %v863
      %v865 = vpop.f32.mrb[0].mxu0
      %866 = vdwg.mxu0
      %867 = vmatprep.subr.mxu0 0.0
      %v868 = vand.u32 %v279, 4294901760
      %869 = vmatpush1.msra.mxu0 %v868
      %870 = vmatprep.subr.mxu0 0.0
      %v871 = vand.u32 %v280, 4294901760
      %872 = vmatpush1.msra.mxu0 %v871
      %873 = vmatprep.subr.mxu0 0.0
      %v874 = vand.u32 %v281, 4294901760
      %875 = vmatpush1.msra.mxu0 %v874
      %876 = vmatprep.subr.mxu0 0.0
      %v877 = vand.u32 %v282, 4294901760
      %878 = vmatpush1.msra.mxu0 %v877
      %879 = vmatprep.subr.mxu0 0.0
      %v880 = vand.u32 %v283, 4294901760
      %881 = vmatpush1.msra.mxu0 %v880
      %882 = vmatprep.subr.mxu0 0.0
      %v883 = vand.u32 %v284, 4294901760
      %884 = vmatpush1.msra.mxu0 %v883
      %885 = vmatprep.subr.mxu0 0.0
      %v886 = vand.u32 %v285, 4294901760
      %887 = vmatpush1.msra.mxu0 %v886
      %888 = vmatprep.subr.mxu0 0.0
      %v889 = vand.u32 %v286, 4294901760
      %890 = vmatpush1.msra.mxu0 %v889
      %891 = vmatprep.subr.mxu0 0.0
      %v892 = vand.u32 %v287, 4294901760
      %893 = vmatpush1.msra.mxu0 %v892
      %894 = vmatprep.subr.mxu0 0.0
      %v895 = vand.u32 %v288, 4294901760
      %896 = vmatpush1.msra.mxu0 %v895
      %897 = vmatprep.subr.mxu0 0.0
      %v898 = vand.u32 %v289, 4294901760
      %899 = vmatpush1.msra.mxu0 %v898
      %900 = vmatprep.subr.mxu0 0.0
      %v901 = vand.u32 %v290, 4294901760
      %902 = vmatpush1.msra.mxu0 %v901
      %903 = vmatprep.subr.mxu0 0.0
      %v904 = vand.u32 %v291, 4294901760
      %905 = vmatpush1.msra.mxu0 %v904
      %906 = vmatprep.subr.mxu0 0.0
      %v907 = vand.u32 %v292, 4294901760
      %908 = vmatpush1.msra.mxu0 %v907
      %909 = vmatprep.subr.mxu0 0.0
      %v910 = vand.u32 %v293, 4294901760
      %911 = vmatpush1.msra.mxu0 %v910
      %912 = vmatprep.subr.mxu0 0.0
      %v913 = vand.u32 %v294, 4294901760
      %914 = vmatpush1.msra.mxu0 %v913
      %915 = vmatprep.subr.mxu0 0.0
      %916 = vmatpush1.msra.mxu0 0.0
      %917 = vmatprep.subr.mxu0 0.0
      %918 = vmatpush1.msra.mxu0 0.0
      %919 = vmatprep.subr.mxu0 0.0
      %920 = vmatpush1.msra.mxu0 0.0
      %921 = vmatprep.subr.mxu0 0.0
      %922 = vmatpush1.msra.mxu0 0.0
      %923 = vmatprep.subr.mxu0 0.0
      %924 = vmatpush1.msra.mxu0 0.0
      %925 = vmatprep.subr.mxu0 0.0
      %926 = vmatpush1.msra.mxu0 0.0
      %927 = vmatprep.subr.mxu0 0.0
      %928 = vmatpush1.msra.mxu0 0.0
      %929 = vmatprep.subr.mxu0 0.0
      %930 = vmatpush1.msra.mxu0 0.0
      %931 = vmatprep.subr.mxu0 0.0
      %932 = vmatpush1.msra.mxu0 0.0
      %933 = vmatprep.subr.mxu0 0.0
      %934 = vmatpush1.msra.mxu0 0.0
      %935 = vmatprep.subr.mxu0 0.0
      %936 = vmatpush1.msra.mxu0 0.0
      %937 = vmatprep.subr.mxu0 0.0
      %938 = vmatpush1.msra.mxu0 0.0
      %939 = vmatprep.subr.mxu0 0.0
      %940 = vmatpush1.msra.mxu0 0.0
      %941 = vmatprep.subr.mxu0 0.0
      %942 = vmatpush1.msra.mxu0 0.0
      %943 = vmatprep.subr.mxu0 0.0
      %944 = vmatpush1.msra.mxu0 0.0
      %945 = vmatprep.subr.mxu0 0.0
      %946 = vmatpush1.msra.mxu0 0.0
      %947 = vmatprep.mubr.f32.mxu0 0.0
      %v948 = vand.u32 %v311, 4294901760
      %949 = vmatmul.mubr.f32.gmra.mrb[0].mxu0 %v948
      %v950 = vpop.f32.mrb[0].mxu0
      %v951 = vadd.f32 %v864, %v950
      %v952 = vpop.f32.mrb[0].mxu0
      %953 = vdwg.mxu0
      %v954 = vadd.f32 %v312, %v951
      %v955 = vxor.u32 %v954, 2147483648
      %v956 = vmul.f32 %v955, 1.442695
      %v957 = vpow.pop %v956
      %v958 = vadd.f32 %v957, 1.0
      %v959 = vrcp.pop %v958
      %v960 = vmul.f32 1.0, %v959
      %v961 = vld [vmem:[%s266] sm:$0xff]
      %v962 = vmul.f32 %v960, %v311
      %963 = vmatprep.subr.mxu0 0.0
      %v964 = vand.u32 %v295, 4294901760
      %965 = vmatpush1.msra.mxu0 %v964
      %966 = vmatprep.subr.mxu0 0.0
      %v967 = vand.u32 %v296, 4294901760
      %968 = vmatpush1.msra.mxu0 %v967
      %969 = vmatprep.subr.mxu0 0.0
      %v970 = vand.u32 %v297, 4294901760
      %971 = vmatpush1.msra.mxu0 %v970
      %972 = vmatprep.subr.mxu0 0.0
      %v973 = vand.u32 %v298, 4294901760
      %974 = vmatpush1.msra.mxu0 %v973
      %975 = vmatprep.subr.mxu0 0.0
      %v976 = vand.u32 %v299, 4294901760
      %977 = vmatpush1.msra.mxu0 %v976
      %978 = vmatprep.subr.mxu0 0.0
      %v979 = vand.u32 %v300, 4294901760
      %980 = vmatpush1.msra.mxu0 %v979
      %981 = vmatprep.subr.mxu0 0.0
      %v982 = vand.u32 %v301, 4294901760
      %983 = vmatpush1.msra.mxu0 %v982
      %984 = vmatprep.subr.mxu0 0.0
      %v985 = vand.u32 %v302, 4294901760
      %986 = vmatpush1.msra.mxu0 %v985
      %987 = vmatprep.subr.mxu0 0.0
      %v988 = vand.u32 %v303, 4294901760
      %989 = vmatpush1.msra.mxu0 %v988
      %990 = vmatprep.subr.mxu0 0.0
      %v991 = vand.u32 %v304, 4294901760
      %992 = vmatpush1.msra.mxu0 %v991
      %993 = vmatprep.subr.mxu0 0.0
      %v994 = vand.u32 %v305, 4294901760
      %995 = vmatpush1.msra.mxu0 %v994
      %996 = vmatprep.subr.mxu0 0.0
      %v997 = vand.u32 %v306, 4294901760
      %998 = vmatpush1.msra.mxu0 %v997
      %999 = vmatprep.subr.mxu0 0.0
      %v1000 = vand.u32 %v307, 4294901760
      %1001 = vmatpush1.msra.mxu0 %v1000
      %1002 = vmatprep.subr.mxu0 0.0
      %v1003 = vand.u32 %v308, 4294901760
      %1004 = vmatpush1.msra.mxu0 %v1003
      %1005 = vmatprep.subr.mxu0 0.0
      %v1006 = vand.u32 %v309, 4294901760
      %1007 = vmatpush1.msra.mxu0 %v1006
      %1008 = vmatprep.subr.mxu0 0.0
      %v1009 = vand.u32 %v310, 4294901760
      %1010 = vmatpush1.msra.mxu0 %v1009
      %1011 = vmatprep.subr.mxu0 0.0
      %1012 = vmatpush1.msra.mxu0 0.0
      %1013 = vmatprep.subr.mxu0 0.0
      %1014 = vmatpush1.msra.mxu0 0.0
      %1015 = vmatprep.subr.mxu0 0.0
      %1016 = vmatpush1.msra.mxu0 0.0
      %1017 = vmatprep.subr.mxu0 0.0
      %1018 = vmatpush1.msra.mxu0 0.0
      %1019 = vmatprep.subr.mxu0 0.0
      %1020 = vmatpush1.msra.mxu0 0.0
      %1021 = vmatprep.subr.mxu0 0.0
      %1022 = vmatpush1.msra.mxu0 0.0
      %1023 = vmatprep.subr.mxu0 0.0
      %1024 = vmatpush1.msra.mxu0 0.0
      %1025 = vmatprep.subr.mxu0 0.0
      %1026 = vmatpush1.msra.mxu0 0.0
      %1027 = vmatprep.subr.mxu0 0.0
      %1028 = vmatpush1.msra.mxu0 0.0
      %1029 = vmatprep.subr.mxu0 0.0
      %1030 = vmatpush1.msra.mxu0 0.0
      %1031 = vmatprep.subr.mxu0 0.0
      %1032 = vmatpush1.msra.mxu0 0.0
      %1033 = vmatprep.subr.mxu0 0.0
      %1034 = vmatpush1.msra.mxu0 0.0
      %1035 = vmatprep.subr.mxu0 0.0
      %1036 = vmatpush1.msra.mxu0 0.0
      %1037 = vmatprep.subr.mxu0 0.0
      %1038 = vmatpush1.msra.mxu0 0.0
      %1039 = vmatprep.subr.mxu0 0.0
      %1040 = vmatpush1.msra.mxu0 0.0
      %1041 = vmatprep.subr.mxu0 0.0
      %1042 = vmatpush1.msra.mxu0 0.0
      %1043 = vmatprep.mubr.f32.mxu0 0.0
      %v1044 = vand.u32 %v962, 4294901760
      %v1045 = vsub.f32 %v962, %v1044
      %v1046 = vand.u32 %v1045, 4294901760
      %v1047 = vsub.f32 %v1045, %v1046
      %v1048 = vand.u32 %v1047, 4294901760
      %1049 = vmatmul.mubr.f32.gmra.mrb[0].mxu0 %v1048
      %v1050 = vpop.f32.mrb[0].mxu0
      %v1051 = vadd.f32 0.0, %v1050
      %v1052 = vpop.f32.mrb[0].mxu0
      %1053 = vdwg.mxu0
      %1054 = vmatprep.subr.mxu0 0.0
      %v1055 = vand.u32 %v295, 4294901760
      %v1056 = vsub.f32 %v295, %v1055
      %v1057 = vand.u32 %v1056, 4294901760
      %v1058 = vsub.f32 %v1056, %v1057
      %v1059 = vand.u32 %v1058, 4294901760
      %1060 = vmatpush1.msra.mxu0 %v1059
      %1061 = vmatprep.subr.mxu0 0.0
      %v1062 = vand.u32 %v296, 4294901760
      %v1063 = vsub.f32 %v296, %v1062
      %v1064 = vand.u32 %v1063, 4294901760
      %v1065 = vsub.f32 %v1063, %v1064
      %v1066 = vand.u32 %v1065, 4294901760
      %1067 = vmatpush1.msra.mxu0 %v1066
      %1068 = vmatprep.subr.mxu0 0.0
      %v1069 = vand.u32 %v297, 4294901760
      %v1070 = vsub.f32 %v297, %v1069
      %v1071 = vand.u32 %v1070, 4294901760
      %v1072 = vsub.f32 %v1070, %v1071
      %v1073 = vand.u32 %v1072, 4294901760
      %1074 = vmatpush1.msra.mxu0 %v1073
      %1075 = vmatprep.subr.mxu0 0.0
      %v1076 = vand.u32 %v298, 4294901760
      %v1077 = vsub.f32 %v298, %v1076
      %v1078 = vand.u32 %v1077, 4294901760
      %v1079 = vsub.f32 %v1077, %v1078
      %v1080 = vand.u32 %v1079, 4294901760
      %1081 = vmatpush1.msra.mxu0 %v1080
      %1082 = vmatprep.subr.mxu0 0.0
      %v1083 = vand.u32 %v299, 4294901760
      %v1084 = vsub.f32 %v299, %v1083
      %v1085 = vand.u32 %v1084, 4294901760
      %v1086 = vsub.f32 %v1084, %v1085
      %v1087 = vand.u32 %v1086, 4294901760
      %1088 = vmatpush1.msra.mxu0 %v1087
      %1089 = vmatprep.subr.mxu0 0.0
      %v1090 = vand.u32 %v300, 4294901760
      %v1091 = vsub.f32 %v300, %v1090
      %v1092 = vand.u32 %v1091, 4294901760
      %v1093 = vsub.f32 %v1091, %v1092
      %v1094 = vand.u32 %v1093, 4294901760
      %1095 = vmatpush1.msra.mxu0 %v1094
      %1096 = vmatprep.subr.mxu0 0.0
      %v1097 = vand.u32 %v301, 4294901760
      %v1098 = vsub.f32 %v301, %v1097
      %v1099 = vand.u32 %v1098, 4294901760
      %v1100 = vsub.f32 %v1098, %v1099
      %v1101 = vand.u32 %v1100, 4294901760
      %1102 = vmatpush1.msra.mxu0 %v1101
      %1103 = vmatprep.subr.mxu0 0.0
      %v1104 = vand.u32 %v302, 4294901760
      %v1105 = vsub.f32 %v302, %v1104
      %v1106 = vand.u32 %v1105, 4294901760
      %v1107 = vsub.f32 %v1105, %v1106
      %v1108 = vand.u32 %v1107, 4294901760
      %1109 = vmatpush1.msra.mxu0 %v1108
      %1110 = vmatprep.subr.mxu0 0.0
      %v1111 = vand.u32 %v303, 4294901760
      %v1112 = vsub.f32 %v303, %v1111
      %v1113 = vand.u32 %v1112, 4294901760
      %v1114 = vsub.f32 %v1112, %v1113
      %v1115 = vand.u32 %v1114, 4294901760
      %1116 = vmatpush1.msra.mxu0 %v1115
      %1117 = vmatprep.subr.mxu0 0.0
      %v1118 = vand.u32 %v304, 4294901760
      %v1119 = vsub.f32 %v304, %v1118
      %v1120 = vand.u32 %v1119, 4294901760
      %v1121 = vsub.f32 %v1119, %v1120
      %v1122 = vand.u32 %v1121, 4294901760
      %1123 = vmatpush1.msra.mxu0 %v1122
      %1124 = vmatprep.subr.mxu0 0.0
      %v1125 = vand.u32 %v305, 4294901760
      %v1126 = vsub.f32 %v305, %v1125
      %v1127 = vand.u32 %v1126, 4294901760
      %v1128 = vsub.f32 %v1126, %v1127
      %v1129 = vand.u32 %v1128, 4294901760
      %1130 = vmatpush1.msra.mxu0 %v1129
      %1131 = vmatprep.subr.mxu0 0.0
      %v1132 = vand.u32 %v306, 4294901760
      %v1133 = vsub.f32 %v306, %v1132
      %v1134 = vand.u32 %v1133, 4294901760
      %v1135 = vsub.f32 %v1133, %v1134
      %v1136 = vand.u32 %v1135, 4294901760
      %1137 = vmatpush1.msra.mxu0 %v1136
      %1138 = vmatprep.subr.mxu0 0.0
      %v1139 = vand.u32 %v307, 4294901760
      %v1140 = vsub.f32 %v307, %v1139
      %v1141 = vand.u32 %v1140, 4294901760
      %v1142 = vsub.f32 %v1140, %v1141
      %v1143 = vand.u32 %v1142, 4294901760
      %1144 = vmatpush1.msra.mxu0 %v1143
      %1145 = vmatprep.subr.mxu0 0.0
      %v1146 = vand.u32 %v308, 4294901760
      %v1147 = vsub.f32 %v308, %v1146
      %v1148 = vand.u32 %v1147, 4294901760
      %v1149 = vsub.f32 %v1147, %v1148
      %v1150 = vand.u32 %v1149, 4294901760
      %1151 = vmatpush1.msra.mxu0 %v1150
      %1152 = vmatprep.subr.mxu0 0.0
      %v1153 = vand.u32 %v309, 4294901760
      %v1154 = vsub.f32 %v309, %v1153
      %v1155 = vand.u32 %v1154, 4294901760
      %v1156 = vsub.f32 %v1154, %v1155
      %v1157 = vand.u32 %v1156, 4294901760
      %1158 = vmatpush1.msra.mxu0 %v1157
      %1159 = vmatprep.subr.mxu0 0.0
      %v1160 = vand.u32 %v310, 4294901760
      %v1161 = vsub.f32 %v310, %v1160
      %v1162 = vand.u32 %v1161, 4294901760
      %v1163 = vsub.f32 %v1161, %v1162
      %v1164 = vand.u32 %v1163, 4294901760
      %1165 = vmatpush1.msra.mxu0 %v1164
      %1166 = vmatprep.subr.mxu0 0.0
      %1167 = vmatpush1.msra.mxu0 0.0
      %1168 = vmatprep.subr.mxu0 0.0
      %1169 = vmatpush1.msra.mxu0 0.0
      %1170 = vmatprep.subr.mxu0 0.0
      %1171 = vmatpush1.msra.mxu0 0.0
      %1172 = vmatprep.subr.mxu0 0.0
      %1173 = vmatpush1.msra.mxu0 0.0
      %1174 = vmatprep.subr.mxu0 0.0
      %1175 = vmatpush1.msra.mxu0 0.0
      %1176 = vmatprep.subr.mxu0 0.0
      %1177 = vmatpush1.msra.mxu0 0.0
      %1178 = vmatprep.subr.mxu0 0.0
      %1179 = vmatpush1.msra.mxu0 0.0
      %1180 = vmatprep.subr.mxu0 0.0
      %1181 = vmatpush1.msra.mxu0 0.0
      %1182 = vmatprep.subr.mxu0 0.0
      %1183 = vmatpush1.msra.mxu0 0.0
      %1184 = vmatprep.subr.mxu0 0.0
      %1185 = vmatpush1.msra.mxu0 0.0
      %1186 = vmatprep.subr.mxu0 0.0
      %1187 = vmatpush1.msra.mxu0 0.0
      %1188 = vmatprep.subr.mxu0 0.0
      %1189 = vmatpush1.msra.mxu0 0.0
      %1190 = vmatprep.subr.mxu0 0.0
      %1191 = vmatpush1.msra.mxu0 0.0
      %1192 = vmatprep.subr.mxu0 0.0
      %1193 = vmatpush1.msra.mxu0 0.0
      %1194 = vmatprep.subr.mxu0 0.0
      %1195 = vmatpush1.msra.mxu0 0.0
      %1196 = vmatprep.subr.mxu0 0.0
      %1197 = vmatpush1.msra.mxu0 0.0
      %1198 = vmatprep.mubr.f32.mxu0 0.0
      %v1199 = vand.u32 %v962, 4294901760
      %1200 = vmatmul.mubr.f32.gmra.mrb[0].mxu0 %v1199
      %v1201 = vpop.f32.mrb[0].mxu0
      %v1202 = vadd.f32 %v1051, %v1201
      %v1203 = vpop.f32.mrb[0].mxu0
      %1204 = vdwg.mxu0
      %1205 = vmatprep.subr.mxu0 0.0
      %v1206 = vand.u32 %v295, 4294901760
      %v1207 = vsub.f32 %v295, %v1206
      %1208 = vmatpush1.msra.mxu0 %v1207
      %1209 = vmatprep.subr.mxu0 0.0
      %v1210 = vand.u32 %v296, 4294901760
      %v1211 = vsub.f32 %v296, %v1210
      %1212 = vmatpush1.msra.mxu0 %v1211
      %1213 = vmatprep.subr.mxu0 0.0
      %v1214 = vand.u32 %v297, 4294901760
      %v1215 = vsub.f32 %v297, %v1214
      %1216 = vmatpush1.msra.mxu0 %v1215
      %1217 = vmatprep.subr.mxu0 0.0
      %v1218 = vand.u32 %v298, 4294901760
      %v1219 = vsub.f32 %v298, %v1218
      %1220 = vmatpush1.msra.mxu0 %v1219
      %1221 = vmatprep.subr.mxu0 0.0
      %v1222 = vand.u32 %v299, 4294901760
      %v1223 = vsub.f32 %v299, %v1222
      %1224 = vmatpush1.msra.mxu0 %v1223
      %1225 = vmatprep.subr.mxu0 0.0
      %v1226 = vand.u32 %v300, 4294901760
      %v1227 = vsub.f32 %v300, %v1226
      %1228 = vmatpush1.msra.mxu0 %v1227
      %1229 = vmatprep.subr.mxu0 0.0
      %v1230 = vand.u32 %v301, 4294901760
      %v1231 = vsub.f32 %v301, %v1230
      %1232 = vmatpush1.msra.mxu0 %v1231
      %1233 = vmatprep.subr.mxu0 0.0
      %v1234 = vand.u32 %v302, 4294901760
      %v1235 = vsub.f32 %v302, %v1234
      %1236 = vmatpush1.msra.mxu0 %v1235
      %1237 = vmatprep.subr.mxu0 0.0
      %v1238 = vand.u32 %v303, 4294901760
      %v1239 = vsub.f32 %v303, %v1238
      %1240 = vmatpush1.msra.mxu0 %v1239
      %1241 = vmatprep.subr.mxu0 0.0
      %v1242 = vand.u32 %v304, 4294901760
      %v1243 = vsub.f32 %v304, %v1242
      %1244 = vmatpush1.msra.mxu0 %v1243
      %1245 = vmatprep.subr.mxu0 0.0
      %v1246 = vand.u32 %v305, 4294901760
      %v1247 = vsub.f32 %v305, %v1246
      %1248 = vmatpush1.msra.mxu0 %v1247
      %1249 = vmatprep.subr.mxu0 0.0
      %v1250 = vand.u32 %v306, 4294901760
      %v1251 = vsub.f32 %v306, %v1250
      %1252 = vmatpush1.msra.mxu0 %v1251
      %1253 = vmatprep.subr.mxu0 0.0
      %v1254 = vand.u32 %v307, 4294901760
      %v1255 = vsub.f32 %v307, %v1254
      %1256 = vmatpush1.msra.mxu0 %v1255
      %1257 = vmatprep.subr.mxu0 0.0
      %v1258 = vand.u32 %v308, 4294901760
      %v1259 = vsub.f32 %v308, %v1258
      %1260 = vmatpush1.msra.mxu0 %v1259
      %1261 = vmatprep.subr.mxu0 0.0
      %v1262 = vand.u32 %v309, 4294901760
      %v1263 = vsub.f32 %v309, %v1262
      %1264 = vmatpush1.msra.mxu0 %v1263
      %1265 = vmatprep.subr.mxu0 0.0
      %v1266 = vand.u32 %v310, 4294901760
      %v1267 = vsub.f32 %v310, %v1266
      %1268 = vmatpush1.msra.mxu0 %v1267
      %1269 = vmatprep.subr.mxu0 0.0
      %1270 = vmatpush1.msra.mxu0 0.0
      %1271 = vmatprep.subr.mxu0 0.0
      %1272 = vmatpush1.msra.mxu0 0.0
      %1273 = vmatprep.subr.mxu0 0.0
      %1274 = vmatpush1.msra.mxu0 0.0
      %1275 = vmatprep.subr.mxu0 0.0
      %1276 = vmatpush1.msra.mxu0 0.0
      %1277 = vmatprep.subr.mxu0 0.0
      %1278 = vmatpush1.msra.mxu0 0.0
      %1279 = vmatprep.subr.mxu0 0.0
      %1280 = vmatpush1.msra.mxu0 0.0
      %1281 = vmatprep.subr.mxu0 0.0
      %1282 = vmatpush1.msra.mxu0 0.0
      %1283 = vmatprep.subr.mxu0 0.0
      %1284 = vmatpush1.msra.mxu0 0.0
      %1285 = vmatprep.subr.mxu0 0.0
      %1286 = vmatpush1.msra.mxu0 0.0
      %1287 = vmatprep.subr.mxu0 0.0
      %1288 = vmatpush1.msra.mxu0 0.0
      %1289 = vmatprep.subr.mxu0 0.0
      %1290 = vmatpush1.msra.mxu0 0.0
      %1291 = vmatprep.subr.mxu0 0.0
      %1292 = vmatpush1.msra.mxu0 0.0
      %1293 = vmatprep.subr.mxu0 0.0
      %1294 = vmatpush1.msra.mxu0 0.0
      %1295 = vmatprep.subr.mxu0 0.0
      %1296 = vmatpush1.msra.mxu0 0.0
      %1297 = vmatprep.subr.mxu0 0.0
      %1298 = vmatpush1.msra.mxu0 0.0
      %1299 = vmatprep.subr.mxu0 0.0
      %1300 = vmatpush1.msra.mxu0 0.0
      %1301 = vmatprep.mubr.f32.mxu0 0.0
      %v1302 = vand.u32 %v962, 4294901760
      %v1303 = vsub.f32 %v962, %v1302
      %1304 = vmatmul.mubr.f32.gmra.mrb[0].mxu0 %v1303
      %v1305 = vpop.f32.mrb[0].mxu0
      %v1306 = vadd.f32 %v1202, %v1305
      %v1307 = vpop.f32.mrb[0].mxu0
      %1308 = vdwg.mxu0
      %1309 = vmatprep.subr.mxu0 0.0
      %v1310 = vand.u32 %v295, 4294901760
      %1311 = vmatpush1.msra.mxu0 %v1310
      %1312 = vmatprep.subr.mxu0 0.0
      %v1313 = vand.u32 %v296, 4294901760
      %1314 = vmatpush1.msra.mxu0 %v1313
      %1315 = vmatprep.subr.mxu0 0.0
      %v1316 = vand.u32 %v297, 4294901760
      %1317 = vmatpush1.msra.mxu0 %v1316
      %1318 = vmatprep.subr.mxu0 0.0
      %v1319 = vand.u32 %v298, 4294901760
      %1320 = vmatpush1.msra.mxu0 %v1319
      %1321 = vmatprep.subr.mxu0 0.0
      %v1322 = vand.u32 %v299, 4294901760
      %1323 = vmatpush1.msra.mxu0 %v1322
      %1324 = vmatprep.subr.mxu0 0.0
      %v1325 = vand.u32 %v300, 4294901760
      %1326 = vmatpush1.msra.mxu0 %v1325
      %1327 = vmatprep.subr.mxu0 0.0
      %v1328 = vand.u32 %v301, 4294901760
      %1329 = vmatpush1.msra.mxu0 %v1328
      %1330 = vmatprep.subr.mxu0 0.0
      %v1331 = vand.u32 %v302, 4294901760
      %1332 = vmatpush1.msra.mxu0 %v1331
      %1333 = vmatprep.subr.mxu0 0.0
      %v1334 = vand.u32 %v303, 4294901760
      %1335 = vmatpush1.msra.mxu0 %v1334
      %1336 = vmatprep.subr.mxu0 0.0
      %v1337 = vand.u32 %v304, 4294901760
      %1338 = vmatpush1.msra.mxu0 %v1337
      %1339 = vmatprep.subr.mxu0 0.0
      %v1340 = vand.u32 %v305, 4294901760
      %1341 = vmatpush1.msra.mxu0 %v1340
      %1342 = vmatprep.subr.mxu0 0.0
      %v1343 = vand.u32 %v306, 4294901760
      %1344 = vmatpush1.msra.mxu0 %v1343
      %1345 = vmatprep.subr.mxu0 0.0
      %v1346 = vand.u32 %v307, 4294901760
      %1347 = vmatpush1.msra.mxu0 %v1346
      %1348 = vmatprep.subr.mxu0 0.0
      %v1349 = vand.u32 %v308, 4294901760
      %1350 = vmatpush1.msra.mxu0 %v1349
      %1351 = vmatprep.subr.mxu0 0.0
      %v1352 = vand.u32 %v309, 4294901760
      %1353 = vmatpush1.msra.mxu0 %v1352
      %1354 = vmatprep.subr.mxu0 0.0
      %v1355 = vand.u32 %v310, 4294901760
      %1356 = vmatpush1.msra.mxu0 %v1355
      %1357 = vmatprep.subr.mxu0 0.0
      %1358 = vmatpush1.msra.mxu0 0.0
      %1359 = vmatprep.subr.mxu0 0.0
      %1360 = vmatpush1.msra.mxu0 0.0
      %1361 = vmatprep.subr.mxu0 0.0
      %1362 = vmatpush1.msra.mxu0 0.0
      %1363 = vmatprep.subr.mxu0 0.0
      %1364 = vmatpush1.msra.mxu0 0.0
      %1365 = vmatprep.subr.mxu0 0.0
      %1366 = vmatpush1.msra.mxu0 0.0
      %1367 = vmatprep.subr.mxu0 0.0
      %1368 = vmatpush1.msra.mxu0 0.0
      %1369 = vmatprep.subr.mxu0 0.0
      %1370 = vmatpush1.msra.mxu0 0.0
      %1371 = vmatprep.subr.mxu0 0.0
      %1372 = vmatpush1.msra.mxu0 0.0
      %1373 = vmatprep.subr.mxu0 0.0
      %1374 = vmatpush1.msra.mxu0 0.0
      %1375 = vmatprep.subr.mxu0 0.0
      %1376 = vmatpush1.msra.mxu0 0.0
      %1377 = vmatprep.subr.mxu0 0.0
      %1378 = vmatpush1.msra.mxu0 0.0
      %1379 = vmatprep.subr.mxu0 0.0
      %1380 = vmatpush1.msra.mxu0 0.0
      %1381 = vmatprep.subr.mxu0 0.0
      %1382 = vmatpush1.msra.mxu0 0.0
      %1383 = vmatprep.subr.mxu0 0.0
      %1384 = vmatpush1.msra.mxu0 0.0
      %1385 = vmatprep.subr.mxu0 0.0
      %1386 = vmatpush1.msra.mxu0 0.0
      %1387 = vmatprep.subr.mxu0 0.0
      %1388 = vmatpush1.msra.mxu0 0.0
      %1389 = vmatprep.mubr.f32.mxu0 0.0
      %v1390 = vand.u32 %v962, 4294901760
      %v1391 = vsub.f32 %v962, %v1390
      %v1392 = vand.u32 %v1391, 4294901760
      %1393 = vmatmul.mubr.f32.gmra.mrb[0].mxu0 %v1392
      %v1394 = vpop.f32.mrb[0].mxu0
      %v1395 = vadd.f32 %v1306, %v1394
      %v1396 = vpop.f32.mrb[0].mxu0
      %1397 = vdwg.mxu0
      %1398 = vmatprep.subr.mxu0 0.0
      %v1399 = vand.u32 %v295, 4294901760
      %v1400 = vsub.f32 %v295, %v1399
      %v1401 = vand.u32 %v1400, 4294901760
      %1402 = vmatpush1.msra.mxu0 %v1401
      %1403 = vmatprep.subr.mxu0 0.0
      %v1404 = vand.u32 %v296, 4294901760
      %v1405 = vsub.f32 %v296, %v1404
      %v1406 = vand.u32 %v1405, 4294901760
      %1407 = vmatpush1.msra.mxu0 %v1406
      %1408 = vmatprep.subr.mxu0 0.0
      %v1409 = vand.u32 %v297, 4294901760
      %v1410 = vsub.f32 %v297, %v1409
      %v1411 = vand.u32 %v1410, 4294901760
      %1412 = vmatpush1.msra.mxu0 %v1411
      %1413 = vmatprep.subr.mxu0 0.0
      %v1414 = vand.u32 %v298, 4294901760
      %v1415 = vsub.f32 %v298, %v1414
      %v1416 = vand.u32 %v1415, 4294901760
      %1417 = vmatpush1.msra.mxu0 %v1416
      %1418 = vmatprep.subr.mxu0 0.0
      %v1419 = vand.u32 %v299, 4294901760
      %v1420 = vsub.f32 %v299, %v1419
      %v1421 = vand.u32 %v1420, 4294901760
      %1422 = vmatpush1.msra.mxu0 %v1421
      %1423 = vmatprep.subr.mxu0 0.0
      %v1424 = vand.u32 %v300, 4294901760
      %v1425 = vsub.f32 %v300, %v1424
      %v1426 = vand.u32 %v1425, 4294901760
      %1427 = vmatpush1.msra.mxu0 %v1426
      %1428 = vmatprep.subr.mxu0 0.0
      %v1429 = vand.u32 %v301, 4294901760
      %v1430 = vsub.f32 %v301, %v1429
      %v1431 = vand.u32 %v1430, 4294901760
      %1432 = vmatpush1.msra.mxu0 %v1431
      %1433 = vmatprep.subr.mxu0 0.0
      %v1434 = vand.u32 %v302, 4294901760
      %v1435 = vsub.f32 %v302, %v1434
      %v1436 = vand.u32 %v1435, 4294901760
      %1437 = vmatpush1.msra.mxu0 %v1436
      %1438 = vmatprep.subr.mxu0 0.0
      %v1439 = vand.u32 %v303, 4294901760
      %v1440 = vsub.f32 %v303, %v1439
      %v1441 = vand.u32 %v1440, 4294901760
      %1442 = vmatpush1.msra.mxu0 %v1441
      %1443 = vmatprep.subr.mxu0 0.0
      %v1444 = vand.u32 %v304, 4294901760
      %v1445 = vsub.f32 %v304, %v1444
      %v1446 = vand.u32 %v1445, 4294901760
      %1447 = vmatpush1.msra.mxu0 %v1446
      %1448 = vmatprep.subr.mxu0 0.0
      %v1449 = vand.u32 %v305, 4294901760
      %v1450 = vsub.f32 %v305, %v1449
      %v1451 = vand.u32 %v1450, 4294901760
      %1452 = vmatpush1.msra.mxu0 %v1451
      %1453 = vmatprep.subr.mxu0 0.0
      %v1454 = vand.u32 %v306, 4294901760
      %v1455 = vsub.f32 %v306, %v1454
      %v1456 = vand.u32 %v1455, 4294901760
      %1457 = vmatpush1.msra.mxu0 %v1456
      %1458 = vmatprep.subr.mxu0 0.0
      %v1459 = vand.u32 %v307, 4294901760
      %v1460 = vsub.f32 %v307, %v1459
      %v1461 = vand.u32 %v1460, 4294901760
      %1462 = vmatpush1.msra.mxu0 %v1461
      %1463 = vmatprep.subr.mxu0 0.0
      %v1464 = vand.u32 %v308, 4294901760
      %v1465 = vsub.f32 %v308, %v1464
      %v1466 = vand.u32 %v1465, 4294901760
      %1467 = vmatpush1.msra.mxu0 %v1466
      %1468 = vmatprep.subr.mxu0 0.0
      %v1469 = vand.u32 %v309, 4294901760
      %v1470 = vsub.f32 %v309, %v1469
      %v1471 = vand.u32 %v1470, 4294901760
      %1472 = vmatpush1.msra.mxu0 %v1471
      %1473 = vmatprep.subr.mxu0 0.0
      %v1474 = vand.u32 %v310, 4294901760
      %v1475 = vsub.f32 %v310, %v1474
      %v1476 = vand.u32 %v1475, 4294901760
      %1477 = vmatpush1.msra.mxu0 %v1476
      %1478 = vmatprep.subr.mxu0 0.0
      %1479 = vmatpush1.msra.mxu0 0.0
      %1480 = vmatprep.subr.mxu0 0.0
      %1481 = vmatpush1.msra.mxu0 0.0
      %1482 = vmatprep.subr.mxu0 0.0
      %1483 = vmatpush1.msra.mxu0 0.0
      %1484 = vmatprep.subr.mxu0 0.0
      %1485 = vmatpush1.msra.mxu0 0.0
      %1486 = vmatprep.subr.mxu0 0.0
      %1487 = vmatpush1.msra.mxu0 0.0
      %1488 = vmatprep.subr.mxu0 0.0
      %1489 = vmatpush1.msra.mxu0 0.0
      %1490 = vmatprep.subr.mxu0 0.0
      %1491 = vmatpush1.msra.mxu0 0.0
      %1492 = vmatprep.subr.mxu0 0.0
      %1493 = vmatpush1.msra.mxu0 0.0
      %1494 = vmatprep.subr.mxu0 0.0
      %1495 = vmatpush1.msra.mxu0 0.0
      %1496 = vmatprep.subr.mxu0 0.0
      %1497 = vmatpush1.msra.mxu0 0.0
      %1498 = vmatprep.subr.mxu0 0.0
      %1499 = vmatpush1.msra.mxu0 0.0
      %1500 = vmatprep.subr.mxu0 0.0
      %1501 = vmatpush1.msra.mxu0 0.0
      %1502 = vmatprep.subr.mxu0 0.0
      %1503 = vmatpush1.msra.mxu0 0.0
      %1504 = vmatprep.subr.mxu0 0.0
      %1505 = vmatpush1.msra.mxu0 0.0
      %1506 = vmatprep.subr.mxu0 0.0
      %1507 = vmatpush1.msra.mxu0 0.0
      %1508 = vmatprep.subr.mxu0 0.0
      %1509 = vmatpush1.msra.mxu0 0.0
      %1510 = vmatprep.mubr.f32.mxu0 0.0
      %v1511 = vand.u32 %v962, 4294901760
      %1512 = vmatmul.mubr.f32.gmra.mrb[0].mxu0 %v1511
      %v1513 = vpop.f32.mrb[0].mxu0
      %v1514 = vadd.f32 %v1395, %v1513
      %v1515 = vpop.f32.mrb[0].mxu0
      %1516 = vdwg.mxu0
      %1517 = vmatprep.subr.mxu0 0.0
      %v1518 = vand.u32 %v295, 4294901760
      %1519 = vmatpush1.msra.mxu0 %v1518
      %1520 = vmatprep.subr.mxu0 0.0
      %v1521 = vand.u32 %v296, 4294901760
      %1522 = vmatpush1.msra.mxu0 %v1521
      %1523 = vmatprep.subr.mxu0 0.0
      %v1524 = vand.u32 %v297, 4294901760
      %1525 = vmatpush1.msra.mxu0 %v1524
      %1526 = vmatprep.subr.mxu0 0.0
      %v1527 = vand.u32 %v298, 4294901760
      %1528 = vmatpush1.msra.mxu0 %v1527
      %1529 = vmatprep.subr.mxu0 0.0
      %v1530 = vand.u32 %v299, 4294901760
      %1531 = vmatpush1.msra.mxu0 %v1530
      %1532 = vmatprep.subr.mxu0 0.0
      %v1533 = vand.u32 %v300, 4294901760
      %1534 = vmatpush1.msra.mxu0 %v1533
      %1535 = vmatprep.subr.mxu0 0.0
      %v1536 = vand.u32 %v301, 4294901760
      %1537 = vmatpush1.msra.mxu0 %v1536
      %1538 = vmatprep.subr.mxu0 0.0
      %v1539 = vand.u32 %v302, 4294901760
      %1540 = vmatpush1.msra.mxu0 %v1539
      %1541 = vmatprep.subr.mxu0 0.0
      %v1542 = vand.u32 %v303, 4294901760
      %1543 = vmatpush1.msra.mxu0 %v1542
      %1544 = vmatprep.subr.mxu0 0.0
      %v1545 = vand.u32 %v304, 4294901760
      %1546 = vmatpush1.msra.mxu0 %v1545
      %1547 = vmatprep.subr.mxu0 0.0
      %v1548 = vand.u32 %v305, 4294901760
      %1549 = vmatpush1.msra.mxu0 %v1548
      %1550 = vmatprep.subr.mxu0 0.0
      %v1551 = vand.u32 %v306, 4294901760
      %1552 = vmatpush1.msra.mxu0 %v1551
      %1553 = vmatprep.subr.mxu0 0.0
      %v1554 = vand.u32 %v307, 4294901760
      %1555 = vmatpush1.msra.mxu0 %v1554
      %1556 = vmatprep.subr.mxu0 0.0
      %v1557 = vand.u32 %v308, 4294901760
      %1558 = vmatpush1.msra.mxu0 %v1557
      %1559 = vmatprep.subr.mxu0 0.0
      %v1560 = vand.u32 %v309, 4294901760
      %1561 = vmatpush1.msra.mxu0 %v1560
      %1562 = vmatprep.subr.mxu0 0.0
      %v1563 = vand.u32 %v310, 4294901760
      %1564 = vmatpush1.msra.mxu0 %v1563
      %1565 = vmatprep.subr.mxu0 0.0
      %1566 = vmatpush1.msra.mxu0 0.0
      %1567 = vmatprep.subr.mxu0 0.0
      %1568 = vmatpush1.msra.mxu0 0.0
      %1569 = vmatprep.subr.mxu0 0.0
      %1570 = vmatpush1.msra.mxu0 0.0
      %1571 = vmatprep.subr.mxu0 0.0
      %1572 = vmatpush1.msra.mxu0 0.0
      %1573 = vmatprep.subr.mxu0 0.0
      %1574 = vmatpush1.msra.mxu0 0.0
      %1575 = vmatprep.subr.mxu0 0.0
      %1576 = vmatpush1.msra.mxu0 0.0
      %1577 = vmatprep.subr.mxu0 0.0
      %1578 = vmatpush1.msra.mxu0 0.0
      %1579 = vmatprep.subr.mxu0 0.0
      %1580 = vmatpush1.msra.mxu0 0.0
      %1581 = vmatprep.subr.mxu0 0.0
      %1582 = vmatpush1.msra.mxu0 0.0
      %1583 = vmatprep.subr.mxu0 0.0
      %1584 = vmatpush1.msra.mxu0 0.0
      %1585 = vmatprep.subr.mxu0 0.0
      %1586 = vmatpush1.msra.mxu0 0.0
      %1587 = vmatprep.subr.mxu0 0.0
      %1588 = vmatpush1.msra.mxu0 0.0
      %1589 = vmatprep.subr.mxu0 0.0
      %1590 = vmatpush1.msra.mxu0 0.0
      %1591 = vmatprep.subr.mxu0 0.0
      %1592 = vmatpush1.msra.mxu0 0.0
      %1593 = vmatprep.subr.mxu0 0.0
      %1594 = vmatpush1.msra.mxu0 0.0
      %1595 = vmatprep.subr.mxu0 0.0
      %1596 = vmatpush1.msra.mxu0 0.0
      %1597 = vmatprep.mubr.f32.mxu0 0.0
      %v1598 = vand.u32 %v962, 4294901760
      %1599 = vmatmul.mubr.f32.gmra.mrb[0].mxu0 %v1598
      %v1600 = vpop.f32.mrb[0].mxu0
      %v1601 = vadd.f32 %v1514, %v1600
      %v1602 = vpop.f32.mrb[0].mxu0
      %1603 = vdwg.mxu0
      %v1604 = vadd.f32 %v961, %v1601
      %v1605 = vtanh.pop %v1604
      %v1606 = vsub.f32 %v1605, %v311
      %v1607 = vmul.f32 %v960, %v1606
      %v1608 = vadd.f32 %v311, %v1607
      %1609 = vst [vmem:[%s271 - $0x1] sm:$0x2] %v1608
      %s1610 = scalar_lea.vmem %s260, 8
      %v1611 = vld [vmem:[%s1610] sm:$0xff]
      %1612 = vmatprep.subr.mxu0 0.0
      %v1613 = vand.u32 %v279, 4294901760
      %1614 = vmatpush1.msra.mxu0 %v1613
      %1615 = vmatprep.subr.mxu0 0.0
      %v1616 = vand.u32 %v280, 4294901760
      %1617 = vmatpush1.msra.mxu0 %v1616
      %1618 = vmatprep.subr.mxu0 0.0
      %v1619 = vand.u32 %v281, 4294901760
      %1620 = vmatpush1.msra.mxu0 %v1619
      %1621 = vmatprep.subr.mxu0 0.0
      %v1622 = vand.u32 %v282, 4294901760
      %1623 = vmatpush1.msra.mxu0 %v1622
      %1624 = vmatprep.subr.mxu0 0.0
      %v1625 = vand.u32 %v283, 4294901760
      %1626 = vmatpush1.msra.mxu0 %v1625
      %1627 = vmatprep.subr.mxu0 0.0
      %v1628 = vand.u32 %v284, 4294901760
      %1629 = vmatpush1.msra.mxu0 %v1628
      %1630 = vmatprep.subr.mxu0 0.0
      %v1631 = vand.u32 %v285, 4294901760
      %1632 = vmatpush1.msra.mxu0 %v1631
      %1633 = vmatprep.subr.mxu0 0.0
      %v1634 = vand.u32 %v286, 4294901760
      %1635 = vmatpush1.msra.mxu0 %v1634
      %1636 = vmatprep.subr.mxu0 0.0
      %v1637 = vand.u32 %v287, 4294901760
      %1638 = vmatpush1.msra.mxu0 %v1637
      %1639 = vmatprep.subr.mxu0 0.0
      %v1640 = vand.u32 %v288, 4294901760
      %1641 = vmatpush1.msra.mxu0 %v1640
      %1642 = vmatprep.subr.mxu0 0.0
      %v1643 = vand.u32 %v289, 4294901760
      %1644 = vmatpush1.msra.mxu0 %v1643
      %1645 = vmatprep.subr.mxu0 0.0
      %v1646 = vand.u32 %v290, 4294901760
      %1647 = vmatpush1.msra.mxu0 %v1646
      %1648 = vmatprep.subr.mxu0 0.0
      %v1649 = vand.u32 %v291, 4294901760
      %1650 = vmatpush1.msra.mxu0 %v1649
      %1651 = vmatprep.subr.mxu0 0.0
      %v1652 = vand.u32 %v292, 4294901760
      %1653 = vmatpush1.msra.mxu0 %v1652
      %1654 = vmatprep.subr.mxu0 0.0
      %v1655 = vand.u32 %v293, 4294901760
      %1656 = vmatpush1.msra.mxu0 %v1655
      %1657 = vmatprep.subr.mxu0 0.0
      %v1658 = vand.u32 %v294, 4294901760
      %1659 = vmatpush1.msra.mxu0 %v1658
      %1660 = vmatprep.subr.mxu0 0.0
      %1661 = vmatpush1.msra.mxu0 0.0
      %1662 = vmatprep.subr.mxu0 0.0
      %1663 = vmatpush1.msra.mxu0 0.0
      %1664 = vmatprep.subr.mxu0 0.0
      %1665 = vmatpush1.msra.mxu0 0.0
      %1666 = vmatprep.subr.mxu0 0.0
      %1667 = vmatpush1.msra.mxu0 0.0
      %1668 = vmatprep.subr.mxu0 0.0
      %1669 = vmatpush1.msra.mxu0 0.0
      %1670 = vmatprep.subr.mxu0 0.0
      %1671 = vmatpush1.msra.mxu0 0.0
      %1672 = vmatprep.subr.mxu0 0.0
      %1673 = vmatpush1.msra.mxu0 0.0
      %1674 = vmatprep.subr.mxu0 0.0
      %1675 = vmatpush1.msra.mxu0 0.0
      %1676 = vmatprep.subr.mxu0 0.0
      %1677 = vmatpush1.msra.mxu0 0.0
      %1678 = vmatprep.subr.mxu0 0.0
      %1679 = vmatpush1.msra.mxu0 0.0
      %1680 = vmatprep.subr.mxu0 0.0
      %1681 = vmatpush1.msra.mxu0 0.0
      %1682 = vmatprep.subr.mxu0 0.0
      %1683 = vmatpush1.msra.mxu0 0.0
      %1684 = vmatprep.subr.mxu0 0.0
      %1685 = vmatpush1.msra.mxu0 0.0
      %1686 = vmatprep.subr.mxu0 0.0
      %1687 = vmatpush1.msra.mxu0 0.0
      %1688 = vmatprep.subr.mxu0 0.0
      %1689 = vmatpush1.msra.mxu0 0.0
      %1690 = vmatprep.subr.mxu0 0.0
      %1691 = vmatpush1.msra.mxu0 0.0
      %1692 = vmatprep.mubr.f32.mxu0 0.0
      %v1693 = vand.u32 %v1608, 4294901760
      %v1694 = vsub.f32 %v1608, %v1693
      %v1695 = vand.u32 %v1694, 4294901760
      %v1696 = vsub.f32 %v1694, %v1695
      %v1697 = vand.u32 %v1696, 4294901760
      %1698 = vmatmul.mubr.f32.gmra.mrb[0].mxu0 %v1697
      %v1699 = vpop.f32.mrb[0].mxu0
      %v1700 = vadd.f32 0.0, %v1699
      %v1701 = vpop.f32.mrb[0].mxu0
      %1702 = vdwg.mxu0
      %1703 = vmatprep.subr.mxu0 0.0
      %v1704 = vand.u32 %v279, 4294901760
      %v1705 = vsub.f32 %v279, %v1704
      %v1706 = vand.u32 %v1705, 4294901760
      %v1707 = vsub.f32 %v1705, %v1706
      %v1708 = vand.u32 %v1707, 4294901760
      %1709 = vmatpush1.msra.mxu0 %v1708
      %1710 = vmatprep.subr.mxu0 0.0
      %v1711 = vand.u32 %v280, 4294901760
      %v1712 = vsub.f32 %v280, %v1711
      %v1713 = vand.u32 %v1712, 4294901760
      %v1714 = vsub.f32 %v1712, %v1713
      %v1715 = vand.u32 %v1714, 4294901760
      %1716 = vmatpush1.msra.mxu0 %v1715
      %1717 = vmatprep.subr.mxu0 0.0
      %v1718 = vand.u32 %v281, 4294901760
      %v1719 = vsub.f32 %v281, %v1718
      %v1720 = vand.u32 %v1719, 4294901760
      %v1721 = vsub.f32 %v1719, %v1720
      %v1722 = vand.u32 %v1721, 4294901760
      %1723 = vmatpush1.msra.mxu0 %v1722
      %1724 = vmatprep.subr.mxu0 0.0
      %v1725 = vand.u32 %v282, 4294901760
      %v1726 = vsub.f32 %v282, %v1725
      %v1727 = vand.u32 %v1726, 4294901760
      %v1728 = vsub.f32 %v1726, %v1727
      %v1729 = vand.u32 %v1728, 4294901760
      %1730 = vmatpush1.msra.mxu0 %v1729
      %1731 = vmatprep.subr.mxu0 0.0
      %v1732 = vand.u32 %v283, 4294901760
      %v1733 = vsub.f32 %v283, %v1732
      %v1734 = vand.u32 %v1733, 4294901760
      %v1735 = vsub.f32 %v1733, %v1734
      %v1736 = vand.u32 %v1735, 4294901760
      %1737 = vmatpush1.msra.mxu0 %v1736
      %1738 = vmatprep.subr.mxu0 0.0
      %v1739 = vand.u32 %v284, 4294901760
      %v1740 = vsub.f32 %v284, %v1739
      %v1741 = vand.u32 %v1740, 4294901760
      %v1742 = vsub.f32 %v1740, %v1741
      %v1743 = vand.u32 %v1742, 4294901760
      %1744 = vmatpush1.msra.mxu0 %v1743
      %1745 = vmatprep.subr.mxu0 0.0
      %v1746 = vand.u32 %v285, 4294901760
      %v1747 = vsub.f32 %v285, %v1746
      %v1748 = vand.u32 %v1747, 4294901760
      %v1749 = vsub.f32 %v1747, %v1748
      %v1750 = vand.u32 %v1749, 4294901760
      %1751 = vmatpush1.msra.mxu0 %v1750
      %1752 = vmatprep.subr.mxu0 0.0
      %v1753 = vand.u32 %v286, 4294901760
      %v1754 = vsub.f32 %v286, %v1753
      %v1755 = vand.u32 %v1754, 4294901760
      %v1756 = vsub.f32 %v1754, %v1755
      %v1757 = vand.u32 %v1756, 4294901760
      %1758 = vmatpush1.msra.mxu0 %v1757
      %1759 = vmatprep.subr.mxu0 0.0
      %v1760 = vand.u32 %v287, 4294901760
      %v1761 = vsub.f32 %v287, %v1760
      %v1762 = vand.u32 %v1761, 4294901760
      %v1763 = vsub.f32 %v1761, %v1762
      %v1764 = vand.u32 %v1763, 4294901760
      %1765 = vmatpush1.msra.mxu0 %v1764
      %1766 = vmatprep.subr.mxu0 0.0
      %v1767 = vand.u32 %v288, 4294901760
      %v1768 = vsub.f32 %v288, %v1767
      %v1769 = vand.u32 %v1768, 4294901760
      %v1770 = vsub.f32 %v1768, %v1769
      %v1771 = vand.u32 %v1770, 4294901760
      %1772 = vmatpush1.msra.mxu0 %v1771
      %1773 = vmatprep.subr.mxu0 0.0
      %v1774 = vand.u32 %v289, 4294901760
      %v1775 = vsub.f32 %v289, %v1774
      %v1776 = vand.u32 %v1775, 4294901760
      %v1777 = vsub.f32 %v1775, %v1776
      %v1778 = vand.u32 %v1777, 4294901760
      %1779 = vmatpush1.msra.mxu0 %v1778
      %1780 = vmatprep.subr.mxu0 0.0
      %v1781 = vand.u32 %v290, 4294901760
      %v1782 = vsub.f32 %v290, %v1781
      %v1783 = vand.u32 %v1782, 4294901760
      %v1784 = vsub.f32 %v1782, %v1783
      %v1785 = vand.u32 %v1784, 4294901760
      %1786 = vmatpush1.msra.mxu0 %v1785
      %1787 = vmatprep.subr.mxu0 0.0
      %v1788 = vand.u32 %v291, 4294901760
      %v1789 = vsub.f32 %v291, %v1788
      %v1790 = vand.u32 %v1789, 4294901760
      %v1791 = vsub.f32 %v1789, %v1790
      %v1792 = vand.u32 %v1791, 4294901760
      %1793 = vmatpush1.msra.mxu0 %v1792
      %1794 = vmatprep.subr.mxu0 0.0
      %v1795 = vand.u32 %v292, 4294901760
      %v1796 = vsub.f32 %v292, %v1795
      %v1797 = vand.u32 %v1796, 4294901760
      %v1798 = vsub.f32 %v1796, %v1797
      %v1799 = vand.u32 %v1798, 4294901760
      %1800 = vmatpush1.msra.mxu0 %v1799
      %1801 = vmatprep.subr.mxu0 0.0
      %v1802 = vand.u32 %v293, 4294901760
      %v1803 = vsub.f32 %v293, %v1802
      %v1804 = vand.u32 %v1803, 4294901760
      %v1805 = vsub.f32 %v1803, %v1804
      %v1806 = vand.u32 %v1805, 4294901760
      %1807 = vmatpush1.msra.mxu0 %v1806
      %1808 = vmatprep.subr.mxu0 0.0
      %v1809 = vand.u32 %v294, 4294901760
      %v1810 = vsub.f32 %v294, %v1809
      %v1811 = vand.u32 %v1810, 4294901760
      %v1812 = vsub.f32 %v1810, %v1811
      %v1813 = vand.u32 %v1812, 4294901760
      %1814 = vmatpush1.msra.mxu0 %v1813
      %1815 = vmatprep.subr.mxu0 0.0
      %1816 = vmatpush1.msra.mxu0 0.0
      %1817 = vmatprep.subr.mxu0 0.0
      %1818 = vmatpush1.msra.mxu0 0.0
      %1819 = vmatprep.subr.mxu0 0.0
      %1820 = vmatpush1.msra.mxu0 0.0
      %1821 = vmatprep.subr.mxu0 0.0
      %1822 = vmatpush1.msra.mxu0 0.0
      %1823 = vmatprep.subr.mxu0 0.0
      %1824 = vmatpush1.msra.mxu0 0.0
      %1825 = vmatprep.subr.mxu0 0.0
      %1826 = vmatpush1.msra.mxu0 0.0
      %1827 = vmatprep.subr.mxu0 0.0
      %1828 = vmatpush1.msra.mxu0 0.0
      %1829 = vmatprep.subr.mxu0 0.0
      %1830 = vmatpush1.msra.mxu0 0.0
      %1831 = vmatprep.subr.mxu0 0.0
      %1832 = vmatpush1.msra.mxu0 0.0
      %1833 = vmatprep.subr.mxu0 0.0
      %1834 = vmatpush1.msra.mxu0 0.0
      %1835 = vmatprep.subr.mxu0 0.0
      %1836 = vmatpush1.msra.mxu0 0.0
      %1837 = vmatprep.subr.mxu0 0.0
      %1838 = vmatpush1.msra.mxu0 0.0
      %1839 = vmatprep.subr.mxu0 0.0
      %1840 = vmatpush1.msra.mxu0 0.0
      %1841 = vmatprep.subr.mxu0 0.0
      %1842 = vmatpush1.msra.mxu0 0.0
      %1843 = vmatprep.subr.mxu0 0.0
      %1844 = vmatpush1.msra.mxu0 0.0
      %1845 = vmatprep.subr.mxu0 0.0
      %1846 = vmatpush1.msra.mxu0 0.0
      %1847 = vmatprep.mubr.f32.mxu0 0.0
      %v1848 = vand.u32 %v1608, 4294901760
      %1849 = vmatmul.mubr.f32.gmra.mrb[0].mxu0 %v1848
      %v1850 = vpop.f32.mrb[0].mxu0
      %v1851 = vadd.f32 %v1700, %v1850
      %v1852 = vpop.f32.mrb[0].mxu0
      %1853 = vdwg.mxu0
      %1854 = vmatprep.subr.mxu0 0.0
      %v1855 = vand.u32 %v279, 4294901760
      %v1856 = vsub.f32 %v279, %v1855
      %1857 = vmatpush1.msra.mxu0 %v1856
      %1858 = vmatprep.subr.mxu0 0.0
      %v1859 = vand.u32 %v280, 4294901760
      %v1860 = vsub.f32 %v280, %v1859
      %1861 = vmatpush1.msra.mxu0 %v1860
      %1862 = vmatprep.subr.mxu0 0.0
      %v1863 = vand.u32 %v281, 4294901760
      %v1864 = vsub.f32 %v281, %v1863
      %1865 = vmatpush1.msra.mxu0 %v1864
      %1866 = vmatprep.subr.mxu0 0.0
      %v1867 = vand.u32 %v282, 4294901760
      %v1868 = vsub.f32 %v282, %v1867
      %1869 = vmatpush1.msra.mxu0 %v1868
      %1870 = vmatprep.subr.mxu0 0.0
      %v1871 = vand.u32 %v283, 4294901760
      %v1872 = vsub.f32 %v283, %v1871
      %1873 = vmatpush1.msra.mxu0 %v1872
      %1874 = vmatprep.subr.mxu0 0.0
      %v1875 = vand.u32 %v284, 4294901760
      %v1876 = vsub.f32 %v284, %v1875
      %1877 = vmatpush1.msra.mxu0 %v1876
      %1878 = vmatprep.subr.mxu0 0.0
      %v1879 = vand.u32 %v285, 4294901760
      %v1880 = vsub.f32 %v285, %v1879
      %1881 = vmatpush1.msra.mxu0 %v1880
      %1882 = vmatprep.subr.mxu0 0.0
      %v1883 = vand.u32 %v286, 4294901760
      %v1884 = vsub.f32 %v286, %v1883
      %1885 = vmatpush1.msra.mxu0 %v1884
      %1886 = vmatprep.subr.mxu0 0.0
      %v1887 = vand.u32 %v287, 4294901760
      %v1888 = vsub.f32 %v287, %v1887
      %1889 = vmatpush1.msra.mxu0 %v1888
      %1890 = vmatprep.subr.mxu0 0.0
      %v1891 = vand.u32 %v288, 4294901760
      %v1892 = vsub.f32 %v288, %v1891
      %1893 = vmatpush1.msra.mxu0 %v1892
      %1894 = vmatprep.subr.mxu0 0.0
      %v1895 = vand.u32 %v289, 4294901760
      %v1896 = vsub.f32 %v289, %v1895
      %1897 = vmatpush1.msra.mxu0 %v1896
      %1898 = vmatprep.subr.mxu0 0.0
      %v1899 = vand.u32 %v290, 4294901760
      %v1900 = vsub.f32 %v290, %v1899
      %1901 = vmatpush1.msra.mxu0 %v1900
      %1902 = vmatprep.subr.mxu0 0.0
      %v1903 = vand.u32 %v291, 4294901760
      %v1904 = vsub.f32 %v291, %v1903
      %1905 = vmatpush1.msra.mxu0 %v1904
      %1906 = vmatprep.subr.mxu0 0.0
      %v1907 = vand.u32 %v292, 4294901760
      %v1908 = vsub.f32 %v292, %v1907
      %1909 = vmatpush1.msra.mxu0 %v1908
      %1910 = vmatprep.subr.mxu0 0.0
      %v1911 = vand.u32 %v293, 4294901760
      %v1912 = vsub.f32 %v293, %v1911
      %1913 = vmatpush1.msra.mxu0 %v1912
      %1914 = vmatprep.subr.mxu0 0.0
      %v1915 = vand.u32 %v294, 4294901760
      %v1916 = vsub.f32 %v294, %v1915
      %1917 = vmatpush1.msra.mxu0 %v1916
      %1918 = vmatprep.subr.mxu0 0.0
      %1919 = vmatpush1.msra.mxu0 0.0
      %1920 = vmatprep.subr.mxu0 0.0
      %1921 = vmatpush1.msra.mxu0 0.0
      %1922 = vmatprep.subr.mxu0 0.0
      %1923 = vmatpush1.msra.mxu0 0.0
      %1924 = vmatprep.subr.mxu0 0.0
      %1925 = vmatpush1.msra.mxu0 0.0
      %1926 = vmatprep.subr.mxu0 0.0
      %1927 = vmatpush1.msra.mxu0 0.0
      %1928 = vmatprep.subr.mxu0 0.0
      %1929 = vmatpush1.msra.mxu0 0.0
      %1930 = vmatprep.subr.mxu0 0.0
      %1931 = vmatpush1.msra.mxu0 0.0
      %1932 = vmatprep.subr.mxu0 0.0
      %1933 = vmatpush1.msra.mxu0 0.0
      %1934 = vmatprep.subr.mxu0 0.0
      %1935 = vmatpush1.msra.mxu0 0.0
      %1936 = vmatprep.subr.mxu0 0.0
      %1937 = vmatpush1.msra.mxu0 0.0
      %1938 = vmatprep.subr.mxu0 0.0
      %1939 = vmatpush1.msra.mxu0 0.0
      %1940 = vmatprep.subr.mxu0 0.0
      %1941 = vmatpush1.msra.mxu0 0.0
      %1942 = vmatprep.subr.mxu0 0.0
      %1943 = vmatpush1.msra.mxu0 0.0
      %1944 = vmatprep.subr.mxu0 0.0
      %1945 = vmatpush1.msra.mxu0 0.0
      %1946 = vmatprep.subr.mxu0 0.0
      %1947 = vmatpush1.msra.mxu0 0.0
      %1948 = vmatprep.subr.mxu0 0.0
      %1949 = vmatpush1.msra.mxu0 0.0
      %1950 = vmatprep.mubr.f32.mxu0 0.0
      %v1951 = vand.u32 %v1608, 4294901760
      %v1952 = vsub.f32 %v1608, %v1951
      %1953 = vmatmul.mubr.f32.gmra.mrb[0].mxu0 %v1952
      %v1954 = vpop.f32.mrb[0].mxu0
      %v1955 = vadd.f32 %v1851, %v1954
      %v1956 = vpop.f32.mrb[0].mxu0
      %1957 = vdwg.mxu0
      %1958 = vmatprep.subr.mxu0 0.0
      %v1959 = vand.u32 %v279, 4294901760
      %1960 = vmatpush1.msra.mxu0 %v1959
      %1961 = vmatprep.subr.mxu0 0.0
      %v1962 = vand.u32 %v280, 4294901760
      %1963 = vmatpush1.msra.mxu0 %v1962
      %1964 = vmatprep.subr.mxu0 0.0
      %v1965 = vand.u32 %v281, 4294901760
      %1966 = vmatpush1.msra.mxu0 %v1965
      %1967 = vmatprep.subr.mxu0 0.0
      %v1968 = vand.u32 %v282, 4294901760
      %1969 = vmatpush1.msra.mxu0 %v1968
      %1970 = vmatprep.subr.mxu0 0.0
      %v1971 = vand.u32 %v283, 4294901760
      %1972 = vmatpush1.msra.mxu0 %v1971
      %1973 = vmatprep.subr.mxu0 0.0
      %v1974 = vand.u32 %v284, 4294901760
      %1975 = vmatpush1.msra.mxu0 %v1974
      %1976 = vmatprep.subr.mxu0 0.0
      %v1977 = vand.u32 %v285, 4294901760
      %1978 = vmatpush1.msra.mxu0 %v1977
      %1979 = vmatprep.subr.mxu0 0.0
      %v1980 = vand.u32 %v286, 4294901760
      %1981 = vmatpush1.msra.mxu0 %v1980
      %1982 = vmatprep.subr.mxu0 0.0
      %v1983 = vand.u32 %v287, 4294901760
      %1984 = vmatpush1.msra.mxu0 %v1983
      %1985 = vmatprep.subr.mxu0 0.0
      %v1986 = vand.u32 %v288, 4294901760
      %1987 = vmatpush1.msra.mxu0 %v1986
      %1988 = vmatprep.subr.mxu0 0.0
      %v1989 = vand.u32 %v289, 4294901760
      %1990 = vmatpush1.msra.mxu0 %v1989
      %1991 = vmatprep.subr.mxu0 0.0
      %v1992 = vand.u32 %v290, 4294901760
      %1993 = vmatpush1.msra.mxu0 %v1992
      %1994 = vmatprep.subr.mxu0 0.0
      %v1995 = vand.u32 %v291, 4294901760
      %1996 = vmatpush1.msra.mxu0 %v1995
      %1997 = vmatprep.subr.mxu0 0.0
      %v1998 = vand.u32 %v292, 4294901760
      %1999 = vmatpush1.msra.mxu0 %v1998
      %2000 = vmatprep.subr.mxu0 0.0
      %v2001 = vand.u32 %v293, 4294901760
      %2002 = vmatpush1.msra.mxu0 %v2001
      %2003 = vmatprep.subr.mxu0 0.0
      %v2004 = vand.u32 %v294, 4294901760
      %2005 = vmatpush1.msra.mxu0 %v2004
      %2006 = vmatprep.subr.mxu0 0.0
      %2007 = vmatpush1.msra.mxu0 0.0
      %2008 = vmatprep.subr.mxu0 0.0
      %2009 = vmatpush1.msra.mxu0 0.0
      %2010 = vmatprep.subr.mxu0 0.0
      %2011 = vmatpush1.msra.mxu0 0.0
      %2012 = vmatprep.subr.mxu0 0.0
      %2013 = vmatpush1.msra.mxu0 0.0
      %2014 = vmatprep.subr.mxu0 0.0
      %2015 = vmatpush1.msra.mxu0 0.0
      %2016 = vmatprep.subr.mxu0 0.0
      %2017 = vmatpush1.msra.mxu0 0.0
      %2018 = vmatprep.subr.mxu0 0.0
      %2019 = vmatpush1.msra.mxu0 0.0
      %2020 = vmatprep.subr.mxu0 0.0
      %2021 = vmatpush1.msra.mxu0 0.0
      %2022 = vmatprep.subr.mxu0 0.0
      %2023 = vmatpush1.msra.mxu0 0.0
      %2024 = vmatprep.subr.mxu0 0.0
      %2025 = vmatpush1.msra.mxu0 0.0
      %2026 = vmatprep.subr.mxu0 0.0
      %2027 = vmatpush1.msra.mxu0 0.0
      %2028 = vmatprep.subr.mxu0 0.0
      %2029 = vmatpush1.msra.mxu0 0.0
      %2030 = vmatprep.subr.mxu0 0.0
      %2031 = vmatpush1.msra.mxu0 0.0
      %2032 = vmatprep.subr.mxu0 0.0
      %2033 = vmatpush1.msra.mxu0 0.0
      %2034 = vmatprep.subr.mxu0 0.0
      %2035 = vmatpush1.msra.mxu0 0.0
      %2036 = vmatprep.subr.mxu0 0.0
      %2037 = vmatpush1.msra.mxu0 0.0
      %2038 = vmatprep.mubr.f32.mxu0 0.0
      %v2039 = vand.u32 %v1608, 4294901760
      %v2040 = vsub.f32 %v1608, %v2039
      %v2041 = vand.u32 %v2040, 4294901760
      %2042 = vmatmul.mubr.f32.gmra.mrb[0].mxu0 %v2041
      %v2043 = vpop.f32.mrb[0].mxu0
      %v2044 = vadd.f32 %v1955, %v2043
      %v2045 = vpop.f32.mrb[0].mxu0
      %2046 = vdwg.mxu0
      %2047 = vmatprep.subr.mxu0 0.0
      %v2048 = vand.u32 %v279, 4294901760
      %v2049 = vsub.f32 %v279, %v2048
      %v2050 = vand.u32 %v2049, 4294901760
      %2051 = vmatpush1.msra.mxu0 %v2050
      %2052 = vmatprep.subr.mxu0 0.0
      %v2053 = vand.u32 %v280, 4294901760
      %v2054 = vsub.f32 %v280, %v2053
      %v2055 = vand.u32 %v2054, 4294901760
      %2056 = vmatpush1.msra.mxu0 %v2055
      %2057 = vmatprep.subr.mxu0 0.0
      %v2058 = vand.u32 %v281, 4294901760
      %v2059 = vsub.f32 %v281, %v2058
      %v2060 = vand.u32 %v2059, 4294901760
      %2061 = vmatpush1.msra.mxu0 %v2060
      %2062 = vmatprep.subr.mxu0 0.0
      %v2063 = vand.u32 %v282, 4294901760
      %v2064 = vsub.f32 %v282, %v2063
      %v2065 = vand.u32 %v2064, 4294901760
      %2066 = vmatpush1.msra.mxu0 %v2065
      %2067 = vmatprep.subr.mxu0 0.0
      %v2068 = vand.u32 %v283, 4294901760
      %v2069 = vsub.f32 %v283, %v2068
      %v2070 = vand.u32 %v2069, 4294901760
      %2071 = vmatpush1.msra.mxu0 %v2070
      %2072 = vmatprep.subr.mxu0 0.0
      %v2073 = vand.u32 %v284, 4294901760
      %v2074 = vsub.f32 %v284, %v2073
      %v2075 = vand.u32 %v2074, 4294901760
      %2076 = vmatpush1.msra.mxu0 %v2075
      %2077 = vmatprep.subr.mxu0 0.0
      %v2078 = vand.u32 %v285, 4294901760
      %v2079 = vsub.f32 %v285, %v2078
      %v2080 = vand.u32 %v2079, 4294901760
      %2081 = vmatpush1.msra.mxu0 %v2080
      %2082 = vmatprep.subr.mxu0 0.0
      %v2083 = vand.u32 %v286, 4294901760
      %v2084 = vsub.f32 %v286, %v2083
      %v2085 = vand.u32 %v2084, 4294901760
      %2086 = vmatpush1.msra.mxu0 %v2085
      %2087 = vmatprep.subr.mxu0 0.0
      %v2088 = vand.u32 %v287, 4294901760
      %v2089 = vsub.f32 %v287, %v2088
      %v2090 = vand.u32 %v2089, 4294901760
      %2091 = vmatpush1.msra.mxu0 %v2090
      %2092 = vmatprep.subr.mxu0 0.0
      %v2093 = vand.u32 %v288, 4294901760
      %v2094 = vsub.f32 %v288, %v2093
      %v2095 = vand.u32 %v2094, 4294901760
      %2096 = vmatpush1.msra.mxu0 %v2095
      %2097 = vmatprep.subr.mxu0 0.0
      %v2098 = vand.u32 %v289, 4294901760
      %v2099 = vsub.f32 %v289, %v2098
      %v2100 = vand.u32 %v2099, 4294901760
      %2101 = vmatpush1.msra.mxu0 %v2100
      %2102 = vmatprep.subr.mxu0 0.0
      %v2103 = vand.u32 %v290, 4294901760
      %v2104 = vsub.f32 %v290, %v2103
      %v2105 = vand.u32 %v2104, 4294901760
      %2106 = vmatpush1.msra.mxu0 %v2105
      %2107 = vmatprep.subr.mxu0 0.0
      %v2108 = vand.u32 %v291, 4294901760
      %v2109 = vsub.f32 %v291, %v2108
      %v2110 = vand.u32 %v2109, 4294901760
      %2111 = vmatpush1.msra.mxu0 %v2110
      %2112 = vmatprep.subr.mxu0 0.0
      %v2113 = vand.u32 %v292, 4294901760
      %v2114 = vsub.f32 %v292, %v2113
      %v2115 = vand.u32 %v2114, 4294901760
      %2116 = vmatpush1.msra.mxu0 %v2115
      %2117 = vmatprep.subr.mxu0 0.0
      %v2118 = vand.u32 %v293, 4294901760
      %v2119 = vsub.f32 %v293, %v2118
      %v2120 = vand.u32 %v2119, 4294901760
      %2121 = vmatpush1.msra.mxu0 %v2120
      %2122 = vmatprep.subr.mxu0 0.0
      %v2123 = vand.u32 %v294, 4294901760
      %v2124 = vsub.f32 %v294, %v2123
      %v2125 = vand.u32 %v2124, 4294901760
      %2126 = vmatpush1.msra.mxu0 %v2125
      %2127 = vmatprep.subr.mxu0 0.0
      %2128 = vmatpush1.msra.mxu0 0.0
      %2129 = vmatprep.subr.mxu0 0.0
      %2130 = vmatpush1.msra.mxu0 0.0
      %2131 = vmatprep.subr.mxu0 0.0
      %2132 = vmatpush1.msra.mxu0 0.0
      %2133 = vmatprep.subr.mxu0 0.0
      %2134 = vmatpush1.msra.mxu0 0.0
      %2135 = vmatprep.subr.mxu0 0.0
      %2136 = vmatpush1.msra.mxu0 0.0
      %2137 = vmatprep.subr.mxu0 0.0
      %2138 = vmatpush1.msra.mxu0 0.0
      %2139 = vmatprep.subr.mxu0 0.0
      %2140 = vmatpush1.msra.mxu0 0.0
      %2141 = vmatprep.subr.mxu0 0.0
      %2142 = vmatpush1.msra.mxu0 0.0
      %2143 = vmatprep.subr.mxu0 0.0
      %2144 = vmatpush1.msra.mxu0 0.0
      %2145 = vmatprep.subr.mxu0 0.0
      %2146 = vmatpush1.msra.mxu0 0.0
      %2147 = vmatprep.subr.mxu0 0.0
      %2148 = vmatpush1.msra.mxu0 0.0
      %2149 = vmatprep.subr.mxu0 0.0
      %2150 = vmatpush1.msra.mxu0 0.0
      %2151 = vmatprep.subr.mxu0 0.0
      %2152 = vmatpush1.msra.mxu0 0.0
      %2153 = vmatprep.subr.mxu0 0.0
      %2154 = vmatpush1.msra.mxu0 0.0
      %2155 = vmatprep.subr.mxu0 0.0
      %2156 = vmatpush1.msra.mxu0 0.0
      %2157 = vmatprep.subr.mxu0 0.0
      %2158 = vmatpush1.msra.mxu0 0.0
      %2159 = vmatprep.mubr.f32.mxu0 0.0
      %v2160 = vand.u32 %v1608, 4294901760
      %2161 = vmatmul.mubr.f32.gmra.mrb[0].mxu0 %v2160
      %v2162 = vpop.f32.mrb[0].mxu0
      %v2163 = vadd.f32 %v2044, %v2162
      %v2164 = vpop.f32.mrb[0].mxu0
      %2165 = vdwg.mxu0
      %2166 = vmatprep.subr.mxu0 0.0
      %v2167 = vand.u32 %v279, 4294901760
      %2168 = vmatpush1.msra.mxu0 %v2167
      %2169 = vmatprep.subr.mxu0 0.0
      %v2170 = vand.u32 %v280, 4294901760
      %2171 = vmatpush1.msra.mxu0 %v2170
      %2172 = vmatprep.subr.mxu0 0.0
      %v2173 = vand.u32 %v281, 4294901760
      %2174 = vmatpush1.msra.mxu0 %v2173
      %2175 = vmatprep.subr.mxu0 0.0
      %v2176 = vand.u32 %v282, 4294901760
      %2177 = vmatpush1.msra.mxu0 %v2176
      %2178 = vmatprep.subr.mxu0 0.0
      %v2179 = vand.u32 %v283, 4294901760
      %2180 = vmatpush1.msra.mxu0 %v2179
      %2181 = vmatprep.subr.mxu0 0.0
      %v2182 = vand.u32 %v284, 4294901760
      %2183 = vmatpush1.msra.mxu0 %v2182
      %2184 = vmatprep.subr.mxu0 0.0
      %v2185 = vand.u32 %v285, 4294901760
      %2186 = vmatpush1.msra.mxu0 %v2185
      %2187 = vmatprep.subr.mxu0 0.0
      %v2188 = vand.u32 %v286, 4294901760
      %2189 = vmatpush1.msra.mxu0 %v2188
      %2190 = vmatprep.subr.mxu0 0.0
      %v2191 = vand.u32 %v287, 4294901760
      %2192 = vmatpush1.msra.mxu0 %v2191
      %2193 = vmatprep.subr.mxu0 0.0
      %v2194 = vand.u32 %v288, 4294901760
      %2195 = vmatpush1.msra.mxu0 %v2194
      %2196 = vmatprep.subr.mxu0 0.0
      %v2197 = vand.u32 %v289, 4294901760
      %2198 = vmatpush1.msra.mxu0 %v2197
      %2199 = vmatprep.subr.mxu0 0.0
      %v2200 = vand.u32 %v290, 4294901760
      %2201 = vmatpush1.msra.mxu0 %v2200
      %2202 = vmatprep.subr.mxu0 0.0
      %v2203 = vand.u32 %v291, 4294901760
      %2204 = vmatpush1.msra.mxu0 %v2203
      %2205 = vmatprep.subr.mxu0 0.0
      %v2206 = vand.u32 %v292, 4294901760
      %2207 = vmatpush1.msra.mxu0 %v2206
      %2208 = vmatprep.subr.mxu0 0.0
      %v2209 = vand.u32 %v293, 4294901760
      %2210 = vmatpush1.msra.mxu0 %v2209
      %2211 = vmatprep.subr.mxu0 0.0
      %v2212 = vand.u32 %v294, 4294901760
      %2213 = vmatpush1.msra.mxu0 %v2212
      %2214 = vmatprep.subr.mxu0 0.0
      %2215 = vmatpush1.msra.mxu0 0.0
      %2216 = vmatprep.subr.mxu0 0.0
      %2217 = vmatpush1.msra.mxu0 0.0
      %2218 = vmatprep.subr.mxu0 0.0
      %2219 = vmatpush1.msra.mxu0 0.0
      %2220 = vmatprep.subr.mxu0 0.0
      %2221 = vmatpush1.msra.mxu0 0.0
      %2222 = vmatprep.subr.mxu0 0.0
      %2223 = vmatpush1.msra.mxu0 0.0
      %2224 = vmatprep.subr.mxu0 0.0
      %2225 = vmatpush1.msra.mxu0 0.0
      %2226 = vmatprep.subr.mxu0 0.0
      %2227 = vmatpush1.msra.mxu0 0.0
      %2228 = vmatprep.subr.mxu0 0.0
      %2229 = vmatpush1.msra.mxu0 0.0
      %2230 = vmatprep.subr.mxu0 0.0
      %2231 = vmatpush1.msra.mxu0 0.0
      %2232 = vmatprep.subr.mxu0 0.0
      %2233 = vmatpush1.msra.mxu0 0.0
      %2234 = vmatprep.subr.mxu0 0.0
      %2235 = vmatpush1.msra.mxu0 0.0
      %2236 = vmatprep.subr.mxu0 0.0
      %2237 = vmatpush1.msra.mxu0 0.0
      %2238 = vmatprep.subr.mxu0 0.0
      %2239 = vmatpush1.msra.mxu0 0.0
      %2240 = vmatprep.subr.mxu0 0.0
      %2241 = vmatpush1.msra.mxu0 0.0
      %2242 = vmatprep.subr.mxu0 0.0
      %2243 = vmatpush1.msra.mxu0 0.0
      %2244 = vmatprep.subr.mxu0 0.0
      %2245 = vmatpush1.msra.mxu0 0.0
      %2246 = vmatprep.mubr.f32.mxu0 0.0
      %v2247 = vand.u32 %v1608, 4294901760
      %2248 = vmatmul.mubr.f32.gmra.mrb[0].mxu0 %v2247
      %v2249 = vpop.f32.mrb[0].mxu0
      %v2250 = vadd.f32 %v2163, %v2249
      %v2251 = vpop.f32.mrb[0].mxu0
      %2252 = vdwg.mxu0
      %v2253 = vadd.f32 %v1611, %v2250
      %v2254 = vxor.u32 %v2253, 2147483648
      %v2255 = vmul.f32 %v2254, 1.442695
      %v2256 = vpow.pop %v2255
      %v2257 = vadd.f32 %v2256, 1.0
      %v2258 = vrcp.pop %v2257
      %v2259 = vmul.f32 1.0, %v2258
      %s2260 = scalar_lea.vmem %s266, 8
      %v2261 = vld [vmem:[%s2260] sm:$0xff]
      %v2262 = vmul.f32 %v2259, %v1608
      %2263 = vmatprep.subr.mxu0 0.0
      %v2264 = vand.u32 %v295, 4294901760
      %2265 = vmatpush1.msra.mxu0 %v2264
      %2266 = vmatprep.subr.mxu0 0.0
      %v2267 = vand.u32 %v296, 4294901760
      %2268 = vmatpush1.msra.mxu0 %v2267
      %2269 = vmatprep.subr.mxu0 0.0
      %v2270 = vand.u32 %v297, 4294901760
      %2271 = vmatpush1.msra.mxu0 %v2270
      %2272 = vmatprep.subr.mxu0 0.0
      %v2273 = vand.u32 %v298, 4294901760
      %2274 = vmatpush1.msra.mxu0 %v2273
      %2275 = vmatprep.subr.mxu0 0.0
      %v2276 = vand.u32 %v299, 4294901760
      %2277 = vmatpush1.msra.mxu0 %v2276
      %2278 = vmatprep.subr.mxu0 0.0
      %v2279 = vand.u32 %v300, 4294901760
      %2280 = vmatpush1.msra.mxu0 %v2279
      %2281 = vmatprep.subr.mxu0 0.0
      %v2282 = vand.u32 %v301, 4294901760
      %2283 = vmatpush1.msra.mxu0 %v2282
      %2284 = vmatprep.subr.mxu0 0.0
      %v2285 = vand.u32 %v302, 4294901760
      %2286 = vmatpush1.msra.mxu0 %v2285
      %2287 = vmatprep.subr.mxu0 0.0
      %v2288 = vand.u32 %v303, 4294901760
      %2289 = vmatpush1.msra.mxu0 %v2288
      %2290 = vmatprep.subr.mxu0 0.0
      %v2291 = vand.u32 %v304, 4294901760
      %2292 = vmatpush1.msra.mxu0 %v2291
      %2293 = vmatprep.subr.mxu0 0.0
      %v2294 = vand.u32 %v305, 4294901760
      %2295 = vmatpush1.msra.mxu0 %v2294
      %2296 = vmatprep.subr.mxu0 0.0
      %v2297 = vand.u32 %v306, 4294901760
      %2298 = vmatpush1.msra.mxu0 %v2297
      %2299 = vmatprep.subr.mxu0 0.0
      %v2300 = vand.u32 %v307, 4294901760
      %2301 = vmatpush1.msra.mxu0 %v2300
      %2302 = vmatprep.subr.mxu0 0.0
      %v2303 = vand.u32 %v308, 4294901760
      %2304 = vmatpush1.msra.mxu0 %v2303
      %2305 = vmatprep.subr.mxu0 0.0
      %v2306 = vand.u32 %v309, 4294901760
      %2307 = vmatpush1.msra.mxu0 %v2306
      %2308 = vmatprep.subr.mxu0 0.0
      %v2309 = vand.u32 %v310, 4294901760
      %2310 = vmatpush1.msra.mxu0 %v2309
      %2311 = vmatprep.subr.mxu0 0.0
      %2312 = vmatpush1.msra.mxu0 0.0
      %2313 = vmatprep.subr.mxu0 0.0
      %2314 = vmatpush1.msra.mxu0 0.0
      %2315 = vmatprep.subr.mxu0 0.0
      %2316 = vmatpush1.msra.mxu0 0.0
      %2317 = vmatprep.subr.mxu0 0.0
      %2318 = vmatpush1.msra.mxu0 0.0
      %2319 = vmatprep.subr.mxu0 0.0
      %2320 = vmatpush1.msra.mxu0 0.0
      %2321 = vmatprep.subr.mxu0 0.0
      %2322 = vmatpush1.msra.mxu0 0.0
      %2323 = vmatprep.subr.mxu0 0.0
      %2324 = vmatpush1.msra.mxu0 0.0
      %2325 = vmatprep.subr.mxu0 0.0
      %2326 = vmatpush1.msra.mxu0 0.0
      %2327 = vmatprep.subr.mxu0 0.0
      %2328 = vmatpush1.msra.mxu0 0.0
      %2329 = vmatprep.subr.mxu0 0.0
      %2330 = vmatpush1.msra.mxu0 0.0
      %2331 = vmatprep.subr.mxu0 0.0
      %2332 = vmatpush1.msra.mxu0 0.0
      %2333 = vmatprep.subr.mxu0 0.0
      %2334 = vmatpush1.msra.mxu0 0.0
      %2335 = vmatprep.subr.mxu0 0.0
      %2336 = vmatpush1.msra.mxu0 0.0
      %2337 = vmatprep.subr.mxu0 0.0
      %2338 = vmatpush1.msra.mxu0 0.0
      %2339 = vmatprep.subr.mxu0 0.0
      %2340 = vmatpush1.msra.mxu0 0.0
      %2341 = vmatprep.subr.mxu0 0.0
      %2342 = vmatpush1.msra.mxu0 0.0
      %2343 = vmatprep.mubr.f32.mxu0 0.0
      %v2344 = vand.u32 %v2262, 4294901760
      %v2345 = vsub.f32 %v2262, %v2344
      %v2346 = vand.u32 %v2345, 4294901760
      %v2347 = vsub.f32 %v2345, %v2346
      %v2348 = vand.u32 %v2347, 4294901760
      %2349 = vmatmul.mubr.f32.gmra.mrb[0].mxu0 %v2348
      %v2350 = vpop.f32.mrb[0].mxu0
      %v2351 = vadd.f32 0.0, %v2350
      %v2352 = vpop.f32.mrb[0].mxu0
      %2353 = vdwg.mxu0
      %2354 = vmatprep.subr.mxu0 0.0
      %v2355 = vand.u32 %v295, 4294901760
      %v2356 = vsub.f32 %v295, %v2355
      %v2357 = vand.u32 %v2356, 4294901760
      %v2358 = vsub.f32 %v2356, %v2357
      %v2359 = vand.u32 %v2358, 4294901760
      %2360 = vmatpush1.msra.mxu0 %v2359
      %2361 = vmatprep.subr.mxu0 0.0
      %v2362 = vand.u32 %v296, 4294901760
      %v2363 = vsub.f32 %v296, %v2362
      %v2364 = vand.u32 %v2363, 4294901760
      %v2365 = vsub.f32 %v2363, %v2364
      %v2366 = vand.u32 %v2365, 4294901760
      %2367 = vmatpush1.msra.mxu0 %v2366
      %2368 = vmatprep.subr.mxu0 0.0
      %v2369 = vand.u32 %v297, 4294901760
      %v2370 = vsub.f32 %v297, %v2369
      %v2371 = vand.u32 %v2370, 4294901760
      %v2372 = vsub.f32 %v2370, %v2371
      %v2373 = vand.u32 %v2372, 4294901760
      %2374 = vmatpush1.msra.mxu0 %v2373
      %2375 = vmatprep.subr.mxu0 0.0
      %v2376 = vand.u32 %v298, 4294901760
      %v2377 = vsub.f32 %v298, %v2376
      %v2378 = vand.u32 %v2377, 4294901760
      %v2379 = vsub.f32 %v2377, %v2378
      %v2380 = vand.u32 %v2379, 4294901760
      %2381 = vmatpush1.msra.mxu0 %v2380
      %2382 = vmatprep.subr.mxu0 0.0
      %v2383 = vand.u32 %v299, 4294901760
      %v2384 = vsub.f32 %v299, %v2383
      %v2385 = vand.u32 %v2384, 4294901760
      %v2386 = vsub.f32 %v2384, %v2385
      %v2387 = vand.u32 %v2386, 4294901760
      %2388 = vmatpush1.msra.mxu0 %v2387
      %2389 = vmatprep.subr.mxu0 0.0
      %v2390 = vand.u32 %v300, 4294901760
      %v2391 = vsub.f32 %v300, %v2390
      %v2392 = vand.u32 %v2391, 4294901760
      %v2393 = vsub.f32 %v2391, %v2392
      %v2394 = vand.u32 %v2393, 4294901760
      %2395 = vmatpush1.msra.mxu0 %v2394
      %2396 = vmatprep.subr.mxu0 0.0
      %v2397 = vand.u32 %v301, 4294901760
      %v2398 = vsub.f32 %v301, %v2397
      %v2399 = vand.u32 %v2398, 4294901760
      %v2400 = vsub.f32 %v2398, %v2399
      %v2401 = vand.u32 %v2400, 4294901760
      %2402 = vmatpush1.msra.mxu0 %v2401
      %2403 = vmatprep.subr.mxu0 0.0
      %v2404 = vand.u32 %v302, 4294901760
      %v2405 = vsub.f32 %v302, %v2404
      %v2406 = vand.u32 %v2405, 4294901760
      %v2407 = vsub.f32 %v2405, %v2406
      %v2408 = vand.u32 %v2407, 4294901760
      %2409 = vmatpush1.msra.mxu0 %v2408
      %2410 = vmatprep.subr.mxu0 0.0
      %v2411 = vand.u32 %v303, 4294901760
      %v2412 = vsub.f32 %v303, %v2411
      %v2413 = vand.u32 %v2412, 4294901760
      %v2414 = vsub.f32 %v2412, %v2413
      %v2415 = vand.u32 %v2414, 4294901760
      %2416 = vmatpush1.msra.mxu0 %v2415
      %2417 = vmatprep.subr.mxu0 0.0
      %v2418 = vand.u32 %v304, 4294901760
      %v2419 = vsub.f32 %v304, %v2418
      %v2420 = vand.u32 %v2419, 4294901760
      %v2421 = vsub.f32 %v2419, %v2420
      %v2422 = vand.u32 %v2421, 4294901760
      %2423 = vmatpush1.msra.mxu0 %v2422
      %2424 = vmatprep.subr.mxu0 0.0
      %v2425 = vand.u32 %v305, 4294901760
      %v2426 = vsub.f32 %v305, %v2425
      %v2427 = vand.u32 %v2426, 4294901760
      %v2428 = vsub.f32 %v2426, %v2427
      %v2429 = vand.u32 %v2428, 4294901760
      %2430 = vmatpush1.msra.mxu0 %v2429
      %2431 = vmatprep.subr.mxu0 0.0
      %v2432 = vand.u32 %v306, 4294901760
      %v2433 = vsub.f32 %v306, %v2432
      %v2434 = vand.u32 %v2433, 4294901760
      %v2435 = vsub.f32 %v2433, %v2434
      %v2436 = vand.u32 %v2435, 4294901760
      %2437 = vmatpush1.msra.mxu0 %v2436
      %2438 = vmatprep.subr.mxu0 0.0
      %v2439 = vand.u32 %v307, 4294901760
      %v2440 = vsub.f32 %v307, %v2439
      %v2441 = vand.u32 %v2440, 4294901760
      %v2442 = vsub.f32 %v2440, %v2441
      %v2443 = vand.u32 %v2442, 4294901760
      %2444 = vmatpush1.msra.mxu0 %v2443
      %2445 = vmatprep.subr.mxu0 0.0
      %v2446 = vand.u32 %v308, 4294901760
      %v2447 = vsub.f32 %v308, %v2446
      %v2448 = vand.u32 %v2447, 4294901760
      %v2449 = vsub.f32 %v2447, %v2448
      %v2450 = vand.u32 %v2449, 4294901760
      %2451 = vmatpush1.msra.mxu0 %v2450
      %2452 = vmatprep.subr.mxu0 0.0
      %v2453 = vand.u32 %v309, 4294901760
      %v2454 = vsub.f32 %v309, %v2453
      %v2455 = vand.u32 %v2454, 4294901760
      %v2456 = vsub.f32 %v2454, %v2455
      %v2457 = vand.u32 %v2456, 4294901760
      %2458 = vmatpush1.msra.mxu0 %v2457
      %2459 = vmatprep.subr.mxu0 0.0
      %v2460 = vand.u32 %v310, 4294901760
      %v2461 = vsub.f32 %v310, %v2460
      %v2462 = vand.u32 %v2461, 4294901760
      %v2463 = vsub.f32 %v2461, %v2462
      %v2464 = vand.u32 %v2463, 4294901760
      %2465 = vmatpush1.msra.mxu0 %v2464
      %2466 = vmatprep.subr.mxu0 0.0
      %2467 = vmatpush1.msra.mxu0 0.0
      %2468 = vmatprep.subr.mxu0 0.0
      %2469 = vmatpush1.msra.mxu0 0.0
      %2470 = vmatprep.subr.mxu0 0.0
      %2471 = vmatpush1.msra.mxu0 0.0
      %2472 = vmatprep.subr.mxu0 0.0
      %2473 = vmatpush1.msra.mxu0 0.0
      %2474 = vmatprep.subr.mxu0 0.0
      %2475 = vmatpush1.msra.mxu0 0.0
      %2476 = vmatprep.subr.mxu0 0.0
      %2477 = vmatpush1.msra.mxu0 0.0
      %2478 = vmatprep.subr.mxu0 0.0
      %2479 = vmatpush1.msra.mxu0 0.0
      %2480 = vmatprep.subr.mxu0 0.0
      %2481 = vmatpush1.msra.mxu0 0.0
      %2482 = vmatprep.subr.mxu0 0.0
      %2483 = vmatpush1.msra.mxu0 0.0
      %2484 = vmatprep.subr.mxu0 0.0
      %2485 = vmatpush1.msra.mxu0 0.0
      %2486 = vmatprep.subr.mxu0 0.0
      %2487 = vmatpush1.msra.mxu0 0.0
      %2488 = vmatprep.subr.mxu0 0.0
      %2489 = vmatpush1.msra.mxu0 0.0
      %2490 = vmatprep.subr.mxu0 0.0
      %2491 = vmatpush1.msra.mxu0 0.0
      %2492 = vmatprep.subr.mxu0 0.0
      %2493 = vmatpush1.msra.mxu0 0.0
      %2494 = vmatprep.subr.mxu0 0.0
      %2495 = vmatpush1.msra.mxu0 0.0
      %2496 = vmatprep.subr.mxu0 0.0
      %2497 = vmatpush1.msra.mxu0 0.0
      %2498 = vmatprep.mubr.f32.mxu0 0.0
      %v2499 = vand.u32 %v2262, 4294901760
      %2500 = vmatmul.mubr.f32.gmra.mrb[0].mxu0 %v2499
      %v2501 = vpop.f32.mrb[0].mxu0
      %v2502 = vadd.f32 %v2351, %v2501
      %v2503 = vpop.f32.mrb[0].mxu0
      %2504 = vdwg.mxu0
      %2505 = vmatprep.subr.mxu0 0.0
      %v2506 = vand.u32 %v295, 4294901760
      %v2507 = vsub.f32 %v295, %v2506
      %2508 = vmatpush1.msra.mxu0 %v2507
      %2509 = vmatprep.subr.mxu0 0.0
      %v2510 = vand.u32 %v296, 4294901760
      %v2511 = vsub.f32 %v296, %v2510
      %2512 = vmatpush1.msra.mxu0 %v2511
      %2513 = vmatprep.subr.mxu0 0.0
      %v2514 = vand.u32 %v297, 4294901760
      %v2515 = vsub.f32 %v297, %v2514
      %2516 = vmatpush1.msra.mxu0 %v2515
      %2517 = vmatprep.subr.mxu0 0.0
      %v2518 = vand.u32 %v298, 4294901760
      %v2519 = vsub.f32 %v298, %v2518
      %2520 = vmatpush1.msra.mxu0 %v2519
      %2521 = vmatprep.subr.mxu0 0.0
      %v2522 = vand.u32 %v299, 4294901760
      %v2523 = vsub.f32 %v299, %v2522
      %2524 = vmatpush1.msra.mxu0 %v2523
      %2525 = vmatprep.subr.mxu0 0.0
      %v2526 = vand.u32 %v300, 4294901760
      %v2527 = vsub.f32 %v300, %v2526
      %2528 = vmatpush1.msra.mxu0 %v2527
      %2529 = vmatprep.subr.mxu0 0.0
      %v2530 = vand.u32 %v301, 4294901760
      %v2531 = vsub.f32 %v301, %v2530
      %2532 = vmatpush1.msra.mxu0 %v2531
      %2533 = vmatprep.subr.mxu0 0.0
      %v2534 = vand.u32 %v302, 4294901760
      %v2535 = vsub.f32 %v302, %v2534
      %2536 = vmatpush1.msra.mxu0 %v2535
      %2537 = vmatprep.subr.mxu0 0.0
      %v2538 = vand.u32 %v303, 4294901760
      %v2539 = vsub.f32 %v303, %v2538
      %2540 = vmatpush1.msra.mxu0 %v2539
      %2541 = vmatprep.subr.mxu0 0.0
      %v2542 = vand.u32 %v304, 4294901760
      %v2543 = vsub.f32 %v304, %v2542
      %2544 = vmatpush1.msra.mxu0 %v2543
      %2545 = vmatprep.subr.mxu0 0.0
      %v2546 = vand.u32 %v305, 4294901760
      %v2547 = vsub.f32 %v305, %v2546
      %2548 = vmatpush1.msra.mxu0 %v2547
      %2549 = vmatprep.subr.mxu0 0.0
      %v2550 = vand.u32 %v306, 4294901760
      %v2551 = vsub.f32 %v306, %v2550
      %2552 = vmatpush1.msra.mxu0 %v2551
      %2553 = vmatprep.subr.mxu0 0.0
      %v2554 = vand.u32 %v307, 4294901760
      %v2555 = vsub.f32 %v307, %v2554
      %2556 = vmatpush1.msra.mxu0 %v2555
      %2557 = vmatprep.subr.mxu0 0.0
      %v2558 = vand.u32 %v308, 4294901760
      %v2559 = vsub.f32 %v308, %v2558
      %2560 = vmatpush1.msra.mxu0 %v2559
      %2561 = vmatprep.subr.mxu0 0.0
      %v2562 = vand.u32 %v309, 4294901760
      %v2563 = vsub.f32 %v309, %v2562
      %2564 = vmatpush1.msra.mxu0 %v2563
      %2565 = vmatprep.subr.mxu0 0.0
      %v2566 = vand.u32 %v310, 4294901760
      %v2567 = vsub.f32 %v310, %v2566
      %2568 = vmatpush1.msra.mxu0 %v2567
      %2569 = vmatprep.subr.mxu0 0.0
      %2570 = vmatpush1.msra.mxu0 0.0
      %2571 = vmatprep.subr.mxu0 0.0
      %2572 = vmatpush1.msra.mxu0 0.0
      %2573 = vmatprep.subr.mxu0 0.0
      %2574 = vmatpush1.msra.mxu0 0.0
      %2575 = vmatprep.subr.mxu0 0.0
      %2576 = vmatpush1.msra.mxu0 0.0
      %2577 = vmatprep.subr.mxu0 0.0
      %2578 = vmatpush1.msra.mxu0 0.0
      %2579 = vmatprep.subr.mxu0 0.0
      %2580 = vmatpush1.msra.mxu0 0.0
      %2581 = vmatprep.subr.mxu0 0.0
      %2582 = vmatpush1.msra.mxu0 0.0
      %2583 = vmatprep.subr.mxu0 0.0
      %2584 = vmatpush1.msra.mxu0 0.0
      %2585 = vmatprep.subr.mxu0 0.0
      %2586 = vmatpush1.msra.mxu0 0.0
      %2587 = vmatprep.subr.mxu0 0.0
      %2588 = vmatpush1.msra.mxu0 0.0
      %2589 = vmatprep.subr.mxu0 0.0
      %2590 = vmatpush1.msra.mxu0 0.0
      %2591 = vmatprep.subr.mxu0 0.0
      %2592 = vmatpush1.msra.mxu0 0.0
      %2593 = vmatprep.subr.mxu0 0.0
      %2594 = vmatpush1.msra.mxu0 0.0
      %2595 = vmatprep.subr.mxu0 0.0
      %2596 = vmatpush1.msra.mxu0 0.0
      %2597 = vmatprep.subr.mxu0 0.0
      %2598 = vmatpush1.msra.mxu0 0.0
      %2599 = vmatprep.subr.mxu0 0.0
      %2600 = vmatpush1.msra.mxu0 0.0
      %2601 = vmatprep.mubr.f32.mxu0 0.0
      %v2602 = vand.u32 %v2262, 4294901760
      %v2603 = vsub.f32 %v2262, %v2602
      %2604 = vmatmul.mubr.f32.gmra.mrb[0].mxu0 %v2603
      %v2605 = vpop.f32.mrb[0].mxu0
      %v2606 = vadd.f32 %v2502, %v2605
      %v2607 = vpop.f32.mrb[0].mxu0
      %2608 = vdwg.mxu0
      %2609 = vmatprep.subr.mxu0 0.0
      %v2610 = vand.u32 %v295, 4294901760
      %2611 = vmatpush1.msra.mxu0 %v2610
      %2612 = vmatprep.subr.mxu0 0.0
      %v2613 = vand.u32 %v296, 4294901760
      %2614 = vmatpush1.msra.mxu0 %v2613
      %2615 = vmatprep.subr.mxu0 0.0
      %v2616 = vand.u32 %v297, 4294901760
      %2617 = vmatpush1.msra.mxu0 %v2616
      %2618 = vmatprep.subr.mxu0 0.0
      %v2619 = vand.u32 %v298, 4294901760
      %2620 = vmatpush1.msra.mxu0 %v2619
      %2621 = vmatprep.subr.mxu0 0.0
      %v2622 = vand.u32 %v299, 4294901760
      %2623 = vmatpush1.msra.mxu0 %v2622
      %2624 = vmatprep.subr.mxu0 0.0
      %v2625 = vand.u32 %v300, 4294901760
      %2626 = vmatpush1.msra.mxu0 %v2625
      %2627 = vmatprep.subr.mxu0 0.0
      %v2628 = vand.u32 %v301, 4294901760
      %2629 = vmatpush1.msra.mxu0 %v2628
      %2630 = vmatprep.subr.mxu0 0.0
      %v2631 = vand.u32 %v302, 4294901760
      %2632 = vmatpush1.msra.mxu0 %v2631
      %2633 = vmatprep.subr.mxu0 0.0
      %v2634 = vand.u32 %v303, 4294901760
      %2635 = vmatpush1.msra.mxu0 %v2634
      %2636 = vmatprep.subr.mxu0 0.0
      %v2637 = vand.u32 %v304, 4294901760
      %2638 = vmatpush1.msra.mxu0 %v2637
      %2639 = vmatprep.subr.mxu0 0.0
      %v2640 = vand.u32 %v305, 4294901760
      %2641 = vmatpush1.msra.mxu0 %v2640
      %2642 = vmatprep.subr.mxu0 0.0
      %v2643 = vand.u32 %v306, 4294901760
      %2644 = vmatpush1.msra.mxu0 %v2643
      %2645 = vmatprep.subr.mxu0 0.0
      %v2646 = vand.u32 %v307, 4294901760
      %2647 = vmatpush1.msra.mxu0 %v2646
      %2648 = vmatprep.subr.mxu0 0.0
      %v2649 = vand.u32 %v308, 4294901760
      %2650 = vmatpush1.msra.mxu0 %v2649
      %2651 = vmatprep.subr.mxu0 0.0
      %v2652 = vand.u32 %v309, 4294901760
      %2653 = vmatpush1.msra.mxu0 %v2652
      %2654 = vmatprep.subr.mxu0 0.0
      %v2655 = vand.u32 %v310, 4294901760
      %2656 = vmatpush1.msra.mxu0 %v2655
      %2657 = vmatprep.subr.mxu0 0.0
      %2658 = vmatpush1.msra.mxu0 0.0
      %2659 = vmatprep.subr.mxu0 0.0
      %2660 = vmatpush1.msra.mxu0 0.0
      %2661 = vmatprep.subr.mxu0 0.0
      %2662 = vmatpush1.msra.mxu0 0.0
      %2663 = vmatprep.subr.mxu0 0.0
      %2664 = vmatpush1.msra.mxu0 0.0
      %2665 = vmatprep.subr.mxu0 0.0
      %2666 = vmatpush1.msra.mxu0 0.0
      %2667 = vmatprep.subr.mxu0 0.0
      %2668 = vmatpush1.msra.mxu0 0.0
      %2669 = vmatprep.subr.mxu0 0.0
      %2670 = vmatpush1.msra.mxu0 0.0
      %2671 = vmatprep.subr.mxu0 0.0
      %2672 = vmatpush1.msra.mxu0 0.0
      %2673 = vmatprep.subr.mxu0 0.0
      %2674 = vmatpush1.msra.mxu0 0.0
      %2675 = vmatprep.subr.mxu0 0.0
      %2676 = vmatpush1.msra.mxu0 0.0
      %2677 = vmatprep.subr.mxu0 0.0
      %2678 = vmatpush1.msra.mxu0 0.0
      %2679 = vmatprep.subr.mxu0 0.0
      %2680 = vmatpush1.msra.mxu0 0.0
      %2681 = vmatprep.subr.mxu0 0.0
      %2682 = vmatpush1.msra.mxu0 0.0
      %2683 = vmatprep.subr.mxu0 0.0
      %2684 = vmatpush1.msra.mxu0 0.0
      %2685 = vmatprep.subr.mxu0 0.0
      %2686 = vmatpush1.msra.mxu0 0.0
      %2687 = vmatprep.subr.mxu0 0.0
      %2688 = vmatpush1.msra.mxu0 0.0
      %2689 = vmatprep.mubr.f32.mxu0 0.0
      %v2690 = vand.u32 %v2262, 4294901760
      %v2691 = vsub.f32 %v2262, %v2690
      %v2692 = vand.u32 %v2691, 4294901760
      %2693 = vmatmul.mubr.f32.gmra.mrb[0].mxu0 %v2692
      %v2694 = vpop.f32.mrb[0].mxu0
      %v2695 = vadd.f32 %v2606, %v2694
      %v2696 = vpop.f32.mrb[0].mxu0
      %2697 = vdwg.mxu0
      %2698 = vmatprep.subr.mxu0 0.0
      %v2699 = vand.u32 %v295, 4294901760
      %v2700 = vsub.f32 %v295, %v2699
      %v2701 = vand.u32 %v2700, 4294901760
      %2702 = vmatpush1.msra.mxu0 %v2701
      %2703 = vmatprep.subr.mxu0 0.0
      %v2704 = vand.u32 %v296, 4294901760
      %v2705 = vsub.f32 %v296, %v2704
      %v2706 = vand.u32 %v2705, 4294901760
      %2707 = vmatpush1.msra.mxu0 %v2706
      %2708 = vmatprep.subr.mxu0 0.0
      %v2709 = vand.u32 %v297, 4294901760
      %v2710 = vsub.f32 %v297, %v2709
      %v2711 = vand.u32 %v2710, 4294901760
      %2712 = vmatpush1.msra.mxu0 %v2711
      %2713 = vmatprep.subr.mxu0 0.0
      %v2714 = vand.u32 %v298, 4294901760
      %v2715 = vsub.f32 %v298, %v2714
      %v2716 = vand.u32 %v2715, 4294901760
      %2717 = vmatpush1.msra.mxu0 %v2716
      %2718 = vmatprep.subr.mxu0 0.0
      %v2719 = vand.u32 %v299, 4294901760
      %v2720 = vsub.f32 %v299, %v2719
      %v2721 = vand.u32 %v2720, 4294901760
      %2722 = vmatpush1.msra.mxu0 %v2721
      %2723 = vmatprep.subr.mxu0 0.0
      %v2724 = vand.u32 %v300, 4294901760
      %v2725 = vsub.f32 %v300, %v2724
      %v2726 = vand.u32 %v2725, 4294901760
      %2727 = vmatpush1.msra.mxu0 %v2726
      %2728 = vmatprep.subr.mxu0 0.0
      %v2729 = vand.u32 %v301, 4294901760
      %v2730 = vsub.f32 %v301, %v2729
      %v2731 = vand.u32 %v2730, 4294901760
      %2732 = vmatpush1.msra.mxu0 %v2731
      %2733 = vmatprep.subr.mxu0 0.0
      %v2734 = vand.u32 %v302, 4294901760
      %v2735 = vsub.f32 %v302, %v2734
      %v2736 = vand.u32 %v2735, 4294901760
      %2737 = vmatpush1.msra.mxu0 %v2736
      %2738 = vmatprep.subr.mxu0 0.0
      %v2739 = vand.u32 %v303, 4294901760
      %v2740 = vsub.f32 %v303, %v2739
      %v2741 = vand.u32 %v2740, 4294901760
      %2742 = vmatpush1.msra.mxu0 %v2741
      %2743 = vmatprep.subr.mxu0 0.0
      %v2744 = vand.u32 %v304, 4294901760
      %v2745 = vsub.f32 %v304, %v2744
      %v2746 = vand.u32 %v2745, 4294901760
      %2747 = vmatpush1.msra.mxu0 %v2746
      %2748 = vmatprep.subr.mxu0 0.0
      %v2749 = vand.u32 %v305, 4294901760
      %v2750 = vsub.f32 %v305, %v2749
      %v2751 = vand.u32 %v2750, 4294901760
      %2752 = vmatpush1.msra.mxu0 %v2751
      %2753 = vmatprep.subr.mxu0 0.0
      %v2754 = vand.u32 %v306, 4294901760
      %v2755 = vsub.f32 %v306, %v2754
      %v2756 = vand.u32 %v2755, 4294901760
      %2757 = vmatpush1.msra.mxu0 %v2756
      %2758 = vmatprep.subr.mxu0 0.0
      %v2759 = vand.u32 %v307, 4294901760
      %v2760 = vsub.f32 %v307, %v2759
      %v2761 = vand.u32 %v2760, 4294901760
      %2762 = vmatpush1.msra.mxu0 %v2761
      %2763 = vmatprep.subr.mxu0 0.0
      %v2764 = vand.u32 %v308, 4294901760
      %v2765 = vsub.f32 %v308, %v2764
      %v2766 = vand.u32 %v2765, 4294901760
      %2767 = vmatpush1.msra.mxu0 %v2766
      %2768 = vmatprep.subr.mxu0 0.0
      %v2769 = vand.u32 %v309, 4294901760
      %v2770 = vsub.f32 %v309, %v2769
      %v2771 = vand.u32 %v2770, 4294901760
      %2772 = vmatpush1.msra.mxu0 %v2771
      %2773 = vmatprep.subr.mxu0 0.0
      %v2774 = vand.u32 %v310, 4294901760
      %v2775 = vsub.f32 %v310, %v2774
      %v2776 = vand.u32 %v2775, 4294901760
      %2777 = vmatpush1.msra.mxu0 %v2776
      %2778 = vmatprep.subr.mxu0 0.0
      %2779 = vmatpush1.msra.mxu0 0.0
      %2780 = vmatprep.subr.mxu0 0.0
      %2781 = vmatpush1.msra.mxu0 0.0
      %2782 = vmatprep.subr.mxu0 0.0
      %2783 = vmatpush1.msra.mxu0 0.0
      %2784 = vmatprep.subr.mxu0 0.0
      %2785 = vmatpush1.msra.mxu0 0.0
      %2786 = vmatprep.subr.mxu0 0.0
      %2787 = vmatpush1.msra.mxu0 0.0
      %2788 = vmatprep.subr.mxu0 0.0
      %2789 = vmatpush1.msra.mxu0 0.0
      %2790 = vmatprep.subr.mxu0 0.0
      %2791 = vmatpush1.msra.mxu0 0.0
      %2792 = vmatprep.subr.mxu0 0.0
      %2793 = vmatpush1.msra.mxu0 0.0
      %2794 = vmatprep.subr.mxu0 0.0
      %2795 = vmatpush1.msra.mxu0 0.0
      %2796 = vmatprep.subr.mxu0 0.0
      %2797 = vmatpush1.msra.mxu0 0.0
      %2798 = vmatprep.subr.mxu0 0.0
      %2799 = vmatpush1.msra.mxu0 0.0
      %2800 = vmatprep.subr.mxu0 0.0
      %2801 = vmatpush1.msra.mxu0 0.0
      %2802 = vmatprep.subr.mxu0 0.0
      %2803 = vmatpush1.msra.mxu0 0.0
      %2804 = vmatprep.subr.mxu0 0.0
      %2805 = vmatpush1.msra.mxu0 0.0
      %2806 = vmatprep.subr.mxu0 0.0
      %2807 = vmatpush1.msra.mxu0 0.0
      %2808 = vmatprep.subr.mxu0 0.0
      %2809 = vmatpush1.msra.mxu0 0.0
      %2810 = vmatprep.mubr.f32.mxu0 0.0
      %v2811 = vand.u32 %v2262, 4294901760
      %2812 = vmatmul.mubr.f32.gmra.mrb[0].mxu0 %v2811
      %v2813 = vpop.f32.mrb[0].mxu0
      %v2814 = vadd.f32 %v2695, %v2813
      %v2815 = vpop.f32.mrb[0].mxu0
      %2816 = vdwg.mxu0
      %2817 = vmatprep.subr.mxu0 0.0
      %v2818 = vand.u32 %v295, 4294901760
      %2819 = vmatpush1.msra.mxu0 %v2818
      %2820 = vmatprep.subr.mxu0 0.0
      %v2821 = vand.u32 %v296, 4294901760
      %2822 = vmatpush1.msra.mxu0 %v2821
      %2823 = vmatprep.subr.mxu0 0.0
      %v2824 = vand.u32 %v297, 4294901760
      %2825 = vmatpush1.msra.mxu0 %v2824
      %2826 = vmatprep.subr.mxu0 0.0
      %v2827 = vand.u32 %v298, 4294901760
      %2828 = vmatpush1.msra.mxu0 %v2827
      %2829 = vmatprep.subr.mxu0 0.0
      %v2830 = vand.u32 %v299, 4294901760
      %2831 = vmatpush1.msra.mxu0 %v2830
      %2832 = vmatprep.subr.mxu0 0.0
      %v2833 = vand.u32 %v300, 4294901760
      %2834 = vmatpush1.msra.mxu0 %v2833
      %2835 = vmatprep.subr.mxu0 0.0
      %v2836 = vand.u32 %v301, 4294901760
      %2837 = vmatpush1.msra.mxu0 %v2836
      %2838 = vmatprep.subr.mxu0 0.0
      %v2839 = vand.u32 %v302, 4294901760
      %2840 = vmatpush1.msra.mxu0 %v2839
      %2841 = vmatprep.subr.mxu0 0.0
      %v2842 = vand.u32 %v303, 4294901760
      %2843 = vmatpush1.msra.mxu0 %v2842
      %2844 = vmatprep.subr.mxu0 0.0
      %v2845 = vand.u32 %v304, 4294901760
      %2846 = vmatpush1.msra.mxu0 %v2845
      %2847 = vmatprep.subr.mxu0 0.0
      %v2848 = vand.u32 %v305, 4294901760
      %2849 = vmatpush1.msra.mxu0 %v2848
      %2850 = vmatprep.subr.mxu0 0.0
      %v2851 = vand.u32 %v306, 4294901760
      %2852 = vmatpush1.msra.mxu0 %v2851
      %2853 = vmatprep.subr.mxu0 0.0
      %v2854 = vand.u32 %v307, 4294901760
      %2855 = vmatpush1.msra.mxu0 %v2854
      %2856 = vmatprep.subr.mxu0 0.0
      %v2857 = vand.u32 %v308, 4294901760
      %2858 = vmatpush1.msra.mxu0 %v2857
      %2859 = vmatprep.subr.mxu0 0.0
      %v2860 = vand.u32 %v309, 4294901760
      %2861 = vmatpush1.msra.mxu0 %v2860
      %2862 = vmatprep.subr.mxu0 0.0
      %v2863 = vand.u32 %v310, 4294901760
      %2864 = vmatpush1.msra.mxu0 %v2863
      %2865 = vmatprep.subr.mxu0 0.0
      %2866 = vmatpush1.msra.mxu0 0.0
      %2867 = vmatprep.subr.mxu0 0.0
      %2868 = vmatpush1.msra.mxu0 0.0
      %2869 = vmatprep.subr.mxu0 0.0
      %2870 = vmatpush1.msra.mxu0 0.0
      %2871 = vmatprep.subr.mxu0 0.0
      %2872 = vmatpush1.msra.mxu0 0.0
      %2873 = vmatprep.subr.mxu0 0.0
      %2874 = vmatpush1.msra.mxu0 0.0
      %2875 = vmatprep.subr.mxu0 0.0
      %2876 = vmatpush1.msra.mxu0 0.0
      %2877 = vmatprep.subr.mxu0 0.0
      %2878 = vmatpush1.msra.mxu0 0.0
      %2879 = vmatprep.subr.mxu0 0.0
      %2880 = vmatpush1.msra.mxu0 0.0
      %2881 = vmatprep.subr.mxu0 0.0
      %2882 = vmatpush1.msra.mxu0 0.0
      %2883 = vmatprep.subr.mxu0 0.0
      %2884 = vmatpush1.msra.mxu0 0.0
      %2885 = vmatprep.subr.mxu0 0.0
      %2886 = vmatpush1.msra.mxu0 0.0
      %2887 = vmatprep.subr.mxu0 0.0
      %2888 = vmatpush1.msra.mxu0 0.0
      %2889 = vmatprep.subr.mxu0 0.0
      %2890 = vmatpush1.msra.mxu0 0.0
      %2891 = vmatprep.subr.mxu0 0.0
      %2892 = vmatpush1.msra.mxu0 0.0
      %2893 = vmatprep.subr.mxu0 0.0
      %2894 = vmatpush1.msra.mxu0 0.0
      %2895 = vmatprep.subr.mxu0 0.0
      %2896 = vmatpush1.msra.mxu0 0.0
      %2897 = vmatprep.mubr.f32.mxu0 0.0
      %v2898 = vand.u32 %v2262, 4294901760
      %2899 = vmatmul.mubr.f32.gmra.mrb[0].mxu0 %v2898
      %v2900 = vpop.f32.mrb[0].mxu0
      %v2901 = vadd.f32 %v2814, %v2900
      %v2902 = vpop.f32.mrb[0].mxu0
      %2903 = vdwg.mxu0
      %v2904 = vadd.f32 %v2261, %v2901
      %v2905 = vtanh.pop %v2904
      %v2906 = vsub.f32 %v2905, %v1608
      %v2907 = vmul.f32 %v2259, %v2906
      %v2908 = vadd.f32 %v1608, %v2907
      %s2909 = scalar_lea.vmem %s271, 1
      %2910 = vst [vmem:[%s2909 - $0x1] sm:$0x2] %v2908
      %s2911 = scalar_lea.vmem %s260, 16
      %v2912 = vld [vmem:[%s2911] sm:$0xff]
      %2913 = vmatprep.subr.mxu0 0.0
      %v2914 = vand.u32 %v279, 4294901760
      %2915 = vmatpush1.msra.mxu0 %v2914
      %2916 = vmatprep.subr.mxu0 0.0
      %v2917 = vand.u32 %v280, 4294901760
      %2918 = vmatpush1.msra.mxu0 %v2917
      %2919 = vmatprep.subr.mxu0 0.0
      %v2920 = vand.u32 %v281, 4294901760
      %2921 = vmatpush1.msra.mxu0 %v2920
      %2922 = vmatprep.subr.mxu0 0.0
      %v2923 = vand.u32 %v282, 4294901760
      %2924 = vmatpush1.msra.mxu0 %v2923
      %2925 = vmatprep.subr.mxu0 0.0
      %v2926 = vand.u32 %v283, 4294901760
      %2927 = vmatpush1.msra.mxu0 %v2926
      %2928 = vmatprep.subr.mxu0 0.0
      %v2929 = vand.u32 %v284, 4294901760
      %2930 = vmatpush1.msra.mxu0 %v2929
      %2931 = vmatprep.subr.mxu0 0.0
      %v2932 = vand.u32 %v285, 4294901760
      %2933 = vmatpush1.msra.mxu0 %v2932
      %2934 = vmatprep.subr.mxu0 0.0
      %v2935 = vand.u32 %v286, 4294901760
      %2936 = vmatpush1.msra.mxu0 %v2935
      %2937 = vmatprep.subr.mxu0 0.0
      %v2938 = vand.u32 %v287, 4294901760
      %2939 = vmatpush1.msra.mxu0 %v2938
      %2940 = vmatprep.subr.mxu0 0.0
      %v2941 = vand.u32 %v288, 4294901760
      %2942 = vmatpush1.msra.mxu0 %v2941
      %2943 = vmatprep.subr.mxu0 0.0
      %v2944 = vand.u32 %v289, 4294901760
      %2945 = vmatpush1.msra.mxu0 %v2944
      %2946 = vmatprep.subr.mxu0 0.0
      %v2947 = vand.u32 %v290, 4294901760
      %2948 = vmatpush1.msra.mxu0 %v2947
      %2949 = vmatprep.subr.mxu0 0.0
      %v2950 = vand.u32 %v291, 4294901760
      %2951 = vmatpush1.msra.mxu0 %v2950
      %2952 = vmatprep.subr.mxu0 0.0
      %v2953 = vand.u32 %v292, 4294901760
      %2954 = vmatpush1.msra.mxu0 %v2953
      %2955 = vmatprep.subr.mxu0 0.0
      %v2956 = vand.u32 %v293, 4294901760
      %2957 = vmatpush1.msra.mxu0 %v2956
      %2958 = vmatprep.subr.mxu0 0.0
      %v2959 = vand.u32 %v294, 4294901760
      %2960 = vmatpush1.msra.mxu0 %v2959
      %2961 = vmatprep.subr.mxu0 0.0
      %2962 = vmatpush1.msra.mxu0 0.0
      %2963 = vmatprep.subr.mxu0 0.0
      %2964 = vmatpush1.msra.mxu0 0.0
      %2965 = vmatprep.subr.mxu0 0.0
      %2966 = vmatpush1.msra.mxu0 0.0
      %2967 = vmatprep.subr.mxu0 0.0
      %2968 = vmatpush1.msra.mxu0 0.0
      %2969 = vmatprep.subr.mxu0 0.0
      %2970 = vmatpush1.msra.mxu0 0.0
      %2971 = vmatprep.subr.mxu0 0.0
      %2972 = vmatpush1.msra.mxu0 0.0
      %2973 = vmatprep.subr.mxu0 0.0
      %2974 = vmatpush1.msra.mxu0 0.0
      %2975 = vmatprep.subr.mxu0 0.0
      %2976 = vmatpush1.msra.mxu0 0.0
      %2977 = vmatprep.subr.mxu0 0.0
      %2978 = vmatpush1.msra.mxu0 0.0
      %2979 = vmatprep.subr.mxu0 0.0
      %2980 = vmatpush1.msra.mxu0 0.0
      %2981 = vmatprep.subr.mxu0 0.0
      %2982 = vmatpush1.msra.mxu0 0.0
      %2983 = vmatprep.subr.mxu0 0.0
      %2984 = vmatpush1.msra.mxu0 0.0
      %2985 = vmatprep.subr.mxu0 0.0
      %2986 = vmatpush1.msra.mxu0 0.0
      %2987 = vmatprep.subr.mxu0 0.0
      %2988 = vmatpush1.msra.mxu0 0.0
      %2989 = vmatprep.subr.mxu0 0.0
      %2990 = vmatpush1.msra.mxu0 0.0
      %2991 = vmatprep.subr.mxu0 0.0
      %2992 = vmatpush1.msra.mxu0 0.0
      %2993 = vmatprep.mubr.f32.mxu0 0.0
      %v2994 = vand.u32 %v2908, 4294901760
      %v2995 = vsub.f32 %v2908, %v2994
      %v2996 = vand.u32 %v2995, 4294901760
      %v2997 = vsub.f32 %v2995, %v2996
      %v2998 = vand.u32 %v2997, 4294901760
      %2999 = vmatmul.mubr.f32.gmra.mrb[0].mxu0 %v2998
      %v3000 = vpop.f32.mrb[0].mxu0
      %v3001 = vadd.f32 0.0, %v3000
      %v3002 = vpop.f32.mrb[0].mxu0
      %3003 = vdwg.mxu0
      %3004 = vmatprep.subr.mxu0 0.0
      %v3005 = vand.u32 %v279, 4294901760
      %v3006 = vsub.f32 %v279, %v3005
      %v3007 = vand.u32 %v3006, 4294901760
      %v3008 = vsub.f32 %v3006, %v3007
      %v3009 = vand.u32 %v3008, 4294901760
      %3010 = vmatpush1.msra.mxu0 %v3009
      %3011 = vmatprep.subr.mxu0 0.0
      %v3012 = vand.u32 %v280, 4294901760
      %v3013 = vsub.f32 %v280, %v3012
      %v3014 = vand.u32 %v3013, 4294901760
      %v3015 = vsub.f32 %v3013, %v3014
      %v3016 = vand.u32 %v3015, 4294901760
      %3017 = vmatpush1.msra.mxu0 %v3016
      %3018 = vmatprep.subr.mxu0 0.0
      %v3019 = vand.u32 %v281, 4294901760
      %v3020 = vsub.f32 %v281, %v3019
      %v3021 = vand.u32 %v3020, 4294901760
      %v3022 = vsub.f32 %v3020, %v3021
      %v3023 = vand.u32 %v3022, 4294901760
      %3024 = vmatpush1.msra.mxu0 %v3023
      %3025 = vmatprep.subr.mxu0 0.0
      %v3026 = vand.u32 %v282, 4294901760
      %v3027 = vsub.f32 %v282, %v3026
      %v3028 = vand.u32 %v3027, 4294901760
      %v3029 = vsub.f32 %v3027, %v3028
      %v3030 = vand.u32 %v3029, 4294901760
      %3031 = vmatpush1.msra.mxu0 %v3030
      %3032 = vmatprep.subr.mxu0 0.0
      %v3033 = vand.u32 %v283, 4294901760
      %v3034 = vsub.f32 %v283, %v3033
      %v3035 = vand.u32 %v3034, 4294901760
      %v3036 = vsub.f32 %v3034, %v3035
      %v3037 = vand.u32 %v3036, 4294901760
      %3038 = vmatpush1.msra.mxu0 %v3037
      %3039 = vmatprep.subr.mxu0 0.0
      %v3040 = vand.u32 %v284, 4294901760
      %v3041 = vsub.f32 %v284, %v3040
      %v3042 = vand.u32 %v3041, 4294901760
      %v3043 = vsub.f32 %v3041, %v3042
      %v3044 = vand.u32 %v3043, 4294901760
      %3045 = vmatpush1.msra.mxu0 %v3044
      %3046 = vmatprep.subr.mxu0 0.0
      %v3047 = vand.u32 %v285, 4294901760
      %v3048 = vsub.f32 %v285, %v3047
      %v3049 = vand.u32 %v3048, 4294901760
      %v3050 = vsub.f32 %v3048, %v3049
      %v3051 = vand.u32 %v3050, 4294901760
      %3052 = vmatpush1.msra.mxu0 %v3051
      %3053 = vmatprep.subr.mxu0 0.0
      %v3054 = vand.u32 %v286, 4294901760
      %v3055 = vsub.f32 %v286, %v3054
      %v3056 = vand.u32 %v3055, 4294901760
      %v3057 = vsub.f32 %v3055, %v3056
      %v3058 = vand.u32 %v3057, 4294901760
      %3059 = vmatpush1.msra.mxu0 %v3058
      %3060 = vmatprep.subr.mxu0 0.0
      %v3061 = vand.u32 %v287, 4294901760
      %v3062 = vsub.f32 %v287, %v3061
      %v3063 = vand.u32 %v3062, 4294901760
      %v3064 = vsub.f32 %v3062, %v3063
      %v3065 = vand.u32 %v3064, 4294901760
      %3066 = vmatpush1.msra.mxu0 %v3065
      %3067 = vmatprep.subr.mxu0 0.0
      %v3068 = vand.u32 %v288, 4294901760
      %v3069 = vsub.f32 %v288, %v3068
      %v3070 = vand.u32 %v3069, 4294901760
      %v3071 = vsub.f32 %v3069, %v3070
      %v3072 = vand.u32 %v3071, 4294901760
      %3073 = vmatpush1.msra.mxu0 %v3072
      %3074 = vmatprep.subr.mxu0 0.0
      %v3075 = vand.u32 %v289, 4294901760
      %v3076 = vsub.f32 %v289, %v3075
      %v3077 = vand.u32 %v3076, 4294901760
      %v3078 = vsub.f32 %v3076, %v3077
      %v3079 = vand.u32 %v3078, 4294901760
      %3080 = vmatpush1.msra.mxu0 %v3079
      %3081 = vmatprep.subr.mxu0 0.0
      %v3082 = vand.u32 %v290, 4294901760
      %v3083 = vsub.f32 %v290, %v3082
      %v3084 = vand.u32 %v3083, 4294901760
      %v3085 = vsub.f32 %v3083, %v3084
      %v3086 = vand.u32 %v3085, 4294901760
      %3087 = vmatpush1.msra.mxu0 %v3086
      %3088 = vmatprep.subr.mxu0 0.0
      %v3089 = vand.u32 %v291, 4294901760
      %v3090 = vsub.f32 %v291, %v3089
      %v3091 = vand.u32 %v3090, 4294901760
      %v3092 = vsub.f32 %v3090, %v3091
      %v3093 = vand.u32 %v3092, 4294901760
      %3094 = vmatpush1.msra.mxu0 %v3093
      %3095 = vmatprep.subr.mxu0 0.0
      %v3096 = vand.u32 %v292, 4294901760
      %v3097 = vsub.f32 %v292, %v3096
      %v3098 = vand.u32 %v3097, 4294901760
      %v3099 = vsub.f32 %v3097, %v3098
      %v3100 = vand.u32 %v3099, 4294901760
      %3101 = vmatpush1.msra.mxu0 %v3100
      %3102 = vmatprep.subr.mxu0 0.0
      %v3103 = vand.u32 %v293, 4294901760
      %v3104 = vsub.f32 %v293, %v3103
      %v3105 = vand.u32 %v3104, 4294901760
      %v3106 = vsub.f32 %v3104, %v3105
      %v3107 = vand.u32 %v3106, 4294901760
      %3108 = vmatpush1.msra.mxu0 %v3107
      %3109 = vmatprep.subr.mxu0 0.0
      %v3110 = vand.u32 %v294, 4294901760
      %v3111 = vsub.f32 %v294, %v3110
      %v3112 = vand.u32 %v3111, 4294901760
      %v3113 = vsub.f32 %v3111, %v3112
      %v3114 = vand.u32 %v3113, 4294901760
      %3115 = vmatpush1.msra.mxu0 %v3114
      %3116 = vmatprep.subr.mxu0 0.0
      %3117 = vmatpush1.msra.mxu0 0.0
      %3118 = vmatprep.subr.mxu0 0.0
      %3119 = vmatpush1.msra.mxu0 0.0
      %3120 = vmatprep.subr.mxu0 0.0
      %3121 = vmatpush1.msra.mxu0 0.0
      %3122 = vmatprep.subr.mxu0 0.0
      %3123 = vmatpush1.msra.mxu0 0.0
      %3124 = vmatprep.subr.mxu0 0.0
      %3125 = vmatpush1.msra.mxu0 0.0
      %3126 = vmatprep.subr.mxu0 0.0
      %3127 = vmatpush1.msra.mxu0 0.0
      %3128 = vmatprep.subr.mxu0 0.0
      %3129 = vmatpush1.msra.mxu0 0.0
      %3130 = vmatprep.subr.mxu0 0.0
      %3131 = vmatpush1.msra.mxu0 0.0
      %3132 = vmatprep.subr.mxu0 0.0
      %3133 = vmatpush1.msra.mxu0 0.0
      %3134 = vmatprep.subr.mxu0 0.0
      %3135 = vmatpush1.msra.mxu0 0.0
      %3136 = vmatprep.subr.mxu0 0.0
      %3137 = vmatpush1.msra.mxu0 0.0
      %3138 = vmatprep.subr.mxu0 0.0
      %3139 = vmatpush1.msra.mxu0 0.0
      %3140 = vmatprep.subr.mxu0 0.0
      %3141 = vmatpush1.msra.mxu0 0.0
      %3142 = vmatprep.subr.mxu0 0.0
      %3143 = vmatpush1.msra.mxu0 0.0
      %3144 = vmatprep.subr.mxu0 0.0
      %3145 = vmatpush1.msra.mxu0 0.0
      %3146 = vmatprep.subr.mxu0 0.0
      %3147 = vmatpush1.msra.mxu0 0.0
      %3148 = vmatprep.mubr.f32.mxu0 0.0
      %v3149 = vand.u32 %v2908, 4294901760
      %3150 = vmatmul.mubr.f32.gmra.mrb[0].mxu0 %v3149
      %v3151 = vpop.f32.mrb[0].mxu0
      %v3152 = vadd.f32 %v3001, %v3151
      %v3153 = vpop.f32.mrb[0].mxu0
      %3154 = vdwg.mxu0
      %3155 = vmatprep.subr.mxu0 0.0
      %v3156 = vand.u32 %v279, 4294901760
      %v3157 = vsub.f32 %v279, %v3156
      %3158 = vmatpush1.msra.mxu0 %v3157
      %3159 = vmatprep.subr.mxu0 0.0
      %v3160 = vand.u32 %v280, 4294901760
      %v3161 = vsub.f32 %v280, %v3160
      %3162 = vmatpush1.msra.mxu0 %v3161
      %3163 = vmatprep.subr.mxu0 0.0
      %v3164 = vand.u32 %v281, 4294901760
      %v3165 = vsub.f32 %v281, %v3164
      %3166 = vmatpush1.msra.mxu0 %v3165
      %3167 = vmatprep.subr.mxu0 0.0
      %v3168 = vand.u32 %v282, 4294901760
      %v3169 = vsub.f32 %v282, %v3168
      %3170 = vmatpush1.msra.mxu0 %v3169
      %3171 = vmatprep.subr.mxu0 0.0
      %v3172 = vand.u32 %v283, 4294901760
      %v3173 = vsub.f32 %v283, %v3172
      %3174 = vmatpush1.msra.mxu0 %v3173
      %3175 = vmatprep.subr.mxu0 0.0
      %v3176 = vand.u32 %v284, 4294901760
      %v3177 = vsub.f32 %v284, %v3176
      %3178 = vmatpush1.msra.mxu0 %v3177
      %3179 = vmatprep.subr.mxu0 0.0
      %v3180 = vand.u32 %v285, 4294901760
      %v3181 = vsub.f32 %v285, %v3180
      %3182 = vmatpush1.msra.mxu0 %v3181
      %3183 = vmatprep.subr.mxu0 0.0
      %v3184 = vand.u32 %v286, 4294901760
      %v3185 = vsub.f32 %v286, %v3184
      %3186 = vmatpush1.msra.mxu0 %v3185
      %3187 = vmatprep.subr.mxu0 0.0
      %v3188 = vand.u32 %v287, 4294901760
      %v3189 = vsub.f32 %v287, %v3188
      %3190 = vmatpush1.msra.mxu0 %v3189
      %3191 = vmatprep.subr.mxu0 0.0
      %v3192 = vand.u32 %v288, 4294901760
      %v3193 = vsub.f32 %v288, %v3192
      %3194 = vmatpush1.msra.mxu0 %v3193
      %3195 = vmatprep.subr.mxu0 0.0
      %v3196 = vand.u32 %v289, 4294901760
      %v3197 = vsub.f32 %v289, %v3196
      %3198 = vmatpush1.msra.mxu0 %v3197
      %3199 = vmatprep.subr.mxu0 0.0
      %v3200 = vand.u32 %v290, 4294901760
      %v3201 = vsub.f32 %v290, %v3200
      %3202 = vmatpush1.msra.mxu0 %v3201
      %3203 = vmatprep.subr.mxu0 0.0
      %v3204 = vand.u32 %v291, 4294901760
      %v3205 = vsub.f32 %v291, %v3204
      %3206 = vmatpush1.msra.mxu0 %v3205
      %3207 = vmatprep.subr.mxu0 0.0
      %v3208 = vand.u32 %v292, 4294901760
      %v3209 = vsub.f32 %v292, %v3208
      %3210 = vmatpush1.msra.mxu0 %v3209
      %3211 = vmatprep.subr.mxu0 0.0
      %v3212 = vand.u32 %v293, 4294901760
      %v3213 = vsub.f32 %v293, %v3212
      %3214 = vmatpush1.msra.mxu0 %v3213
      %3215 = vmatprep.subr.mxu0 0.0
      %v3216 = vand.u32 %v294, 4294901760
      %v3217 = vsub.f32 %v294, %v3216
      %3218 = vmatpush1.msra.mxu0 %v3217
      %3219 = vmatprep.subr.mxu0 0.0
      %3220 = vmatpush1.msra.mxu0 0.0
      %3221 = vmatprep.subr.mxu0 0.0
      %3222 = vmatpush1.msra.mxu0 0.0
      %3223 = vmatprep.subr.mxu0 0.0
      %3224 = vmatpush1.msra.mxu0 0.0
      %3225 = vmatprep.subr.mxu0 0.0
      %3226 = vmatpush1.msra.mxu0 0.0
      %3227 = vmatprep.subr.mxu0 0.0
      %3228 = vmatpush1.msra.mxu0 0.0
      %3229 = vmatprep.subr.mxu0 0.0
      %3230 = vmatpush1.msra.mxu0 0.0
      %3231 = vmatprep.subr.mxu0 0.0
      %3232 = vmatpush1.msra.mxu0 0.0
      %3233 = vmatprep.subr.mxu0 0.0
      %3234 = vmatpush1.msra.mxu0 0.0
      %3235 = vmatprep.subr.mxu0 0.0
      %3236 = vmatpush1.msra.mxu0 0.0
      %3237 = vmatprep.subr.mxu0 0.0
      %3238 = vmatpush1.msra.mxu0 0.0
      %3239 = vmatprep.subr.mxu0 0.0
      %3240 = vmatpush1.msra.mxu0 0.0
      %3241 = vmatprep.subr.mxu0 0.0
      %3242 = vmatpush1.msra.mxu0 0.0
      %3243 = vmatprep.subr.mxu0 0.0
      %3244 = vmatpush1.msra.mxu0 0.0
      %3245 = vmatprep.subr.mxu0 0.0
      %3246 = vmatpush1.msra.mxu0 0.0
      %3247 = vmatprep.subr.mxu0 0.0
      %3248 = vmatpush1.msra.mxu0 0.0
      %3249 = vmatprep.subr.mxu0 0.0
      %3250 = vmatpush1.msra.mxu0 0.0
      %3251 = vmatprep.mubr.f32.mxu0 0.0
      %v3252 = vand.u32 %v2908, 4294901760
      %v3253 = vsub.f32 %v2908, %v3252
      %3254 = vmatmul.mubr.f32.gmra.mrb[0].mxu0 %v3253
      %v3255 = vpop.f32.mrb[0].mxu0
      %v3256 = vadd.f32 %v3152, %v3255
      %v3257 = vpop.f32.mrb[0].mxu0
      %3258 = vdwg.mxu0
      %3259 = vmatprep.subr.mxu0 0.0
      %v3260 = vand.u32 %v279, 4294901760
      %3261 = vmatpush1.msra.mxu0 %v3260
      %3262 = vmatprep.subr.mxu0 0.0
      %v3263 = vand.u32 %v280, 4294901760
      %3264 = vmatpush1.msra.mxu0 %v3263
      %3265 = vmatprep.subr.mxu0 0.0
      %v3266 = vand.u32 %v281, 4294901760
      %3267 = vmatpush1.msra.mxu0 %v3266
      %3268 = vmatprep.subr.mxu0 0.0
      %v3269 = vand.u32 %v282, 4294901760
      %3270 = vmatpush1.msra.mxu0 %v3269
      %3271 = vmatprep.subr.mxu0 0.0
      %v3272 = vand.u32 %v283, 4294901760
      %3273 = vmatpush1.msra.mxu0 %v3272
      %3274 = vmatprep.subr.mxu0 0.0
      %v3275 = vand.u32 %v284, 4294901760
      %3276 = vmatpush1.msra.mxu0 %v3275
      %3277 = vmatprep.subr.mxu0 0.0
      %v3278 = vand.u32 %v285, 4294901760
      %3279 = vmatpush1.msra.mxu0 %v3278
      %3280 = vmatprep.subr.mxu0 0.0
      %v3281 = vand.u32 %v286, 4294901760
      %3282 = vmatpush1.msra.mxu0 %v3281
      %3283 = vmatprep.subr.mxu0 0.0
      %v3284 = vand.u32 %v287, 4294901760
      %3285 = vmatpush1.msra.mxu0 %v3284
      %3286 = vmatprep.subr.mxu0 0.0
      %v3287 = vand.u32 %v288, 4294901760
      %3288 = vmatpush1.msra.mxu0 %v3287
      %3289 = vmatprep.subr.mxu0 0.0
      %v3290 = vand.u32 %v289, 4294901760
      %3291 = vmatpush1.msra.mxu0 %v3290
      %3292 = vmatprep.subr.mxu0 0.0
      %v3293 = vand.u32 %v290, 4294901760
      %3294 = vmatpush1.msra.mxu0 %v3293
      %3295 = vmatprep.subr.mxu0 0.0
      %v3296 = vand.u32 %v291, 4294901760
      %3297 = vmatpush1.msra.mxu0 %v3296
      %3298 = vmatprep.subr.mxu0 0.0
      %v3299 = vand.u32 %v292, 4294901760
      %3300 = vmatpush1.msra.mxu0 %v3299
      %3301 = vmatprep.subr.mxu0 0.0
      %v3302 = vand.u32 %v293, 4294901760
      %3303 = vmatpush1.msra.mxu0 %v3302
      %3304 = vmatprep.subr.mxu0 0.0
      %v3305 = vand.u32 %v294, 4294901760
      %3306 = vmatpush1.msra.mxu0 %v3305
      %3307 = vmatprep.subr.mxu0 0.0
      %3308 = vmatpush1.msra.mxu0 0.0
      %3309 = vmatprep.subr.mxu0 0.0
      %3310 = vmatpush1.msra.mxu0 0.0
      %3311 = vmatprep.subr.mxu0 0.0
      %3312 = vmatpush1.msra.mxu0 0.0
      %3313 = vmatprep.subr.mxu0 0.0
      %3314 = vmatpush1.msra.mxu0 0.0
      %3315 = vmatprep.subr.mxu0 0.0
      %3316 = vmatpush1.msra.mxu0 0.0
      %3317 = vmatprep.subr.mxu0 0.0
      %3318 = vmatpush1.msra.mxu0 0.0
      %3319 = vmatprep.subr.mxu0 0.0
      %3320 = vmatpush1.msra.mxu0 0.0
      %3321 = vmatprep.subr.mxu0 0.0
      %3322 = vmatpush1.msra.mxu0 0.0
      %3323 = vmatprep.subr.mxu0 0.0
      %3324 = vmatpush1.msra.mxu0 0.0
      %3325 = vmatprep.subr.mxu0 0.0
      %3326 = vmatpush1.msra.mxu0 0.0
      %3327 = vmatprep.subr.mxu0 0.0
      %3328 = vmatpush1.msra.mxu0 0.0
      %3329 = vmatprep.subr.mxu0 0.0
      %3330 = vmatpush1.msra.mxu0 0.0
      %3331 = vmatprep.subr.mxu0 0.0
      %3332 = vmatpush1.msra.mxu0 0.0
      %3333 = vmatprep.subr.mxu0 0.0
      %3334 = vmatpush1.msra.mxu0 0.0
      %3335 = vmatprep.subr.mxu0 0.0
      %3336 = vmatpush1.msra.mxu0 0.0
      %3337 = vmatprep.subr.mxu0 0.0
      %3338 = vmatpush1.msra.mxu0 0.0
      %3339 = vmatprep.mubr.f32.mxu0 0.0
      %v3340 = vand.u32 %v2908, 4294901760
      %v3341 = vsub.f32 %v2908, %v3340
      %v3342 = vand.u32 %v3341, 4294901760
      %3343 = vmatmul.mubr.f32.gmra.mrb[0].mxu0 %v3342
      %v3344 = vpop.f32.mrb[0].mxu0
      %v3345 = vadd.f32 %v3256, %v3344
      %v3346 = vpop.f32.mrb[0].mxu0
      %3347 = vdwg.mxu0
      %3348 = vmatprep.subr.mxu0 0.0
      %v3349 = vand.u32 %v279, 4294901760
      %v3350 = vsub.f32 %v279, %v3349
      %v3351 = vand.u32 %v3350, 4294901760
      %3352 = vmatpush1.msra.mxu0 %v3351
      %3353 = vmatprep.subr.mxu0 0.0
      %v3354 = vand.u32 %v280, 4294901760
      %v3355 = vsub.f32 %v280, %v3354
      %v3356 = vand.u32 %v3355, 4294901760
      %3357 = vmatpush1.msra.mxu0 %v3356
      %3358 = vmatprep.subr.mxu0 0.0
      %v3359 = vand.u32 %v281, 4294901760
      %v3360 = vsub.f32 %v281, %v3359
      %v3361 = vand.u32 %v3360, 4294901760
      %3362 = vmatpush1.msra.mxu0 %v3361
      %3363 = vmatprep.subr.mxu0 0.0
      %v3364 = vand.u32 %v282, 4294901760
      %v3365 = vsub.f32 %v282, %v3364
      %v3366 = vand.u32 %v3365, 4294901760
      %3367 = vmatpush1.msra.mxu0 %v3366
      %3368 = vmatprep.subr.mxu0 0.0
      %v3369 = vand.u32 %v283, 4294901760
      %v3370 = vsub.f32 %v283, %v3369
      %v3371 = vand.u32 %v3370, 4294901760
      %3372 = vmatpush1.msra.mxu0 %v3371
      %3373 = vmatprep.subr.mxu0 0.0
      %v3374 = vand.u32 %v284, 4294901760
      %v3375 = vsub.f32 %v284, %v3374
      %v3376 = vand.u32 %v3375, 4294901760
      %3377 = vmatpush1.msra.mxu0 %v3376
      %3378 = vmatprep.subr.mxu0 0.0
      %v3379 = vand.u32 %v285, 4294901760
      %v3380 = vsub.f32 %v285, %v3379
      %v3381 = vand.u32 %v3380, 4294901760
      %3382 = vmatpush1.msra.mxu0 %v3381
      %3383 = vmatprep.subr.mxu0 0.0
      %v3384 = vand.u32 %v286, 4294901760
      %v3385 = vsub.f32 %v286, %v3384
      %v3386 = vand.u32 %v3385, 4294901760
      %3387 = vmatpush1.msra.mxu0 %v3386
      %3388 = vmatprep.subr.mxu0 0.0
      %v3389 = vand.u32 %v287, 4294901760
      %v3390 = vsub.f32 %v287, %v3389
      %v3391 = vand.u32 %v3390, 4294901760
      %3392 = vmatpush1.msra.mxu0 %v3391
      %3393 = vmatprep.subr.mxu0 0.0
      %v3394 = vand.u32 %v288, 4294901760
      %v3395 = vsub.f32 %v288, %v3394
      %v3396 = vand.u32 %v3395, 4294901760
      %3397 = vmatpush1.msra.mxu0 %v3396
      %3398 = vmatprep.subr.mxu0 0.0
      %v3399 = vand.u32 %v289, 4294901760
      %v3400 = vsub.f32 %v289, %v3399
      %v3401 = vand.u32 %v3400, 4294901760
      %3402 = vmatpush1.msra.mxu0 %v3401
      %3403 = vmatprep.subr.mxu0 0.0
      %v3404 = vand.u32 %v290, 4294901760
      %v3405 = vsub.f32 %v290, %v3404
      %v3406 = vand.u32 %v3405, 4294901760
      %3407 = vmatpush1.msra.mxu0 %v3406
      %3408 = vmatprep.subr.mxu0 0.0
      %v3409 = vand.u32 %v291, 4294901760
      %v3410 = vsub.f32 %v291, %v3409
      %v3411 = vand.u32 %v3410, 4294901760
      %3412 = vmatpush1.msra.mxu0 %v3411
      %3413 = vmatprep.subr.mxu0 0.0
      %v3414 = vand.u32 %v292, 4294901760
      %v3415 = vsub.f32 %v292, %v3414
      %v3416 = vand.u32 %v3415, 4294901760
      %3417 = vmatpush1.msra.mxu0 %v3416
      %3418 = vmatprep.subr.mxu0 0.0
      %v3419 = vand.u32 %v293, 4294901760
      %v3420 = vsub.f32 %v293, %v3419
      %v3421 = vand.u32 %v3420, 4294901760
      %3422 = vmatpush1.msra.mxu0 %v3421
      %3423 = vmatprep.subr.mxu0 0.0
      %v3424 = vand.u32 %v294, 4294901760
      %v3425 = vsub.f32 %v294, %v3424
      %v3426 = vand.u32 %v3425, 4294901760
      %3427 = vmatpush1.msra.mxu0 %v3426
      %3428 = vmatprep.subr.mxu0 0.0
      %3429 = vmatpush1.msra.mxu0 0.0
      %3430 = vmatprep.subr.mxu0 0.0
      %3431 = vmatpush1.msra.mxu0 0.0
      %3432 = vmatprep.subr.mxu0 0.0
      %3433 = vmatpush1.msra.mxu0 0.0
      %3434 = vmatprep.subr.mxu0 0.0
      %3435 = vmatpush1.msra.mxu0 0.0
      %3436 = vmatprep.subr.mxu0 0.0
      %3437 = vmatpush1.msra.mxu0 0.0
      %3438 = vmatprep.subr.mxu0 0.0
      %3439 = vmatpush1.msra.mxu0 0.0
      %3440 = vmatprep.subr.mxu0 0.0
      %3441 = vmatpush1.msra.mxu0 0.0
      %3442 = vmatprep.subr.mxu0 0.0
      %3443 = vmatpush1.msra.mxu0 0.0
      %3444 = vmatprep.subr.mxu0 0.0
      %3445 = vmatpush1.msra.mxu0 0.0
      %3446 = vmatprep.subr.mxu0 0.0
      %3447 = vmatpush1.msra.mxu0 0.0
      %3448 = vmatprep.subr.mxu0 0.0
      %3449 = vmatpush1.msra.mxu0 0.0
      %3450 = vmatprep.subr.mxu0 0.0
      %3451 = vmatpush1.msra.mxu0 0.0
      %3452 = vmatprep.subr.mxu0 0.0
      %3453 = vmatpush1.msra.mxu0 0.0
      %3454 = vmatprep.subr.mxu0 0.0
      %3455 = vmatpush1.msra.mxu0 0.0
      %3456 = vmatprep.subr.mxu0 0.0
      %3457 = vmatpush1.msra.mxu0 0.0
      %3458 = vmatprep.subr.mxu0 0.0
      %3459 = vmatpush1.msra.mxu0 0.0
      %3460 = vmatprep.mubr.f32.mxu0 0.0
      %v3461 = vand.u32 %v2908, 4294901760
      %3462 = vmatmul.mubr.f32.gmra.mrb[0].mxu0 %v3461
      %v3463 = vpop.f32.mrb[0].mxu0
      %v3464 = vadd.f32 %v3345, %v3463
      %v3465 = vpop.f32.mrb[0].mxu0
      %3466 = vdwg.mxu0
      %3467 = vmatprep.subr.mxu0 0.0
      %v3468 = vand.u32 %v279, 4294901760
      %3469 = vmatpush1.msra.mxu0 %v3468
      %3470 = vmatprep.subr.mxu0 0.0
      %v3471 = vand.u32 %v280, 4294901760
      %3472 = vmatpush1.msra.mxu0 %v3471
      %3473 = vmatprep.subr.mxu0 0.0
      %v3474 = vand.u32 %v281, 4294901760
      %3475 = vmatpush1.msra.mxu0 %v3474
      %3476 = vmatprep.subr.mxu0 0.0
      %v3477 = vand.u32 %v282, 4294901760
      %3478 = vmatpush1.msra.mxu0 %v3477
      %3479 = vmatprep.subr.mxu0 0.0
      %v3480 = vand.u32 %v283, 4294901760
      %3481 = vmatpush1.msra.mxu0 %v3480
      %3482 = vmatprep.subr.mxu0 0.0
      %v3483 = vand.u32 %v284, 4294901760
      %3484 = vmatpush1.msra.mxu0 %v3483
      %3485 = vmatprep.subr.mxu0 0.0
      %v3486 = vand.u32 %v285, 4294901760
      %3487 = vmatpush1.msra.mxu0 %v3486
      %3488 = vmatprep.subr.mxu0 0.0
      %v3489 = vand.u32 %v286, 4294901760
      %3490 = vmatpush1.msra.mxu0 %v3489
      %3491 = vmatprep.subr.mxu0 0.0
      %v3492 = vand.u32 %v287, 4294901760
      %3493 = vmatpush1.msra.mxu0 %v3492
      %3494 = vmatprep.subr.mxu0 0.0
      %v3495 = vand.u32 %v288, 4294901760
      %3496 = vmatpush1.msra.mxu0 %v3495
      %3497 = vmatprep.subr.mxu0 0.0
      %v3498 = vand.u32 %v289, 4294901760
      %3499 = vmatpush1.msra.mxu0 %v3498
      %3500 = vmatprep.subr.mxu0 0.0
      %v3501 = vand.u32 %v290, 4294901760
      %3502 = vmatpush1.msra.mxu0 %v3501
      %3503 = vmatprep.subr.mxu0 0.0
      %v3504 = vand.u32 %v291, 4294901760
      %3505 = vmatpush1.msra.mxu0 %v3504
      %3506 = vmatprep.subr.mxu0 0.0
      %v3507 = vand.u32 %v292, 4294901760
      %3508 = vmatpush1.msra.mxu0 %v3507
      %3509 = vmatprep.subr.mxu0 0.0
      %v3510 = vand.u32 %v293, 4294901760
      %3511 = vmatpush1.msra.mxu0 %v3510
      %3512 = vmatprep.subr.mxu0 0.0
      %v3513 = vand.u32 %v294, 4294901760
      %3514 = vmatpush1.msra.mxu0 %v3513
      %3515 = vmatprep.subr.mxu0 0.0
      %3516 = vmatpush1.msra.mxu0 0.0
      %3517 = vmatprep.subr.mxu0 0.0
      %3518 = vmatpush1.msra.mxu0 0.0
      %3519 = vmatprep.subr.mxu0 0.0
      %3520 = vmatpush1.msra.mxu0 0.0
      %3521 = vmatprep.subr.mxu0 0.0
      %3522 = vmatpush1.msra.mxu0 0.0
      %3523 = vmatprep.subr.mxu0 0.0
      %3524 = vmatpush1.msra.mxu0 0.0
      %3525 = vmatprep.subr.mxu0 0.0
      %3526 = vmatpush1.msra.mxu0 0.0
      %3527 = vmatprep.subr.mxu0 0.0
      %3528 = vmatpush1.msra.mxu0 0.0
      %3529 = vmatprep.subr.mxu0 0.0
      %3530 = vmatpush1.msra.mxu0 0.0
      %3531 = vmatprep.subr.mxu0 0.0
      %3532 = vmatpush1.msra.mxu0 0.0
      %3533 = vmatprep.subr.mxu0 0.0
      %3534 = vmatpush1.msra.mxu0 0.0
      %3535 = vmatprep.subr.mxu0 0.0
      %3536 = vmatpush1.msra.mxu0 0.0
      %3537 = vmatprep.subr.mxu0 0.0
      %3538 = vmatpush1.msra.mxu0 0.0
      %3539 = vmatprep.subr.mxu0 0.0
      %3540 = vmatpush1.msra.mxu0 0.0
      %3541 = vmatprep.subr.mxu0 0.0
      %3542 = vmatpush1.msra.mxu0 0.0
      %3543 = vmatprep.subr.mxu0 0.0
      %3544 = vmatpush1.msra.mxu0 0.0
      %3545 = vmatprep.subr.mxu0 0.0
      %3546 = vmatpush1.msra.mxu0 0.0
      %3547 = vmatprep.mubr.f32.mxu0 0.0
      %v3548 = vand.u32 %v2908, 4294901760
      %3549 = vmatmul.mubr.f32.gmra.mrb[0].mxu0 %v3548
      %v3550 = vpop.f32.mrb[0].mxu0
      %v3551 = vadd.f32 %v3464, %v3550
      %v3552 = vpop.f32.mrb[0].mxu0
      %3553 = vdwg.mxu0
      %v3554 = vadd.f32 %v2912, %v3551
      %v3555 = vxor.u32 %v3554, 2147483648
      %v3556 = vmul.f32 %v3555, 1.442695
      %v3557 = vpow.pop %v3556
      %v3558 = vadd.f32 %v3557, 1.0
      %v3559 = vrcp.pop %v3558
      %v3560 = vmul.f32 1.0, %v3559
      %s3561 = scalar_lea.vmem %s266, 16
      %v3562 = vld [vmem:[%s3561] sm:$0xff]
      %v3563 = vmul.f32 %v3560, %v2908
      %3564 = vmatprep.subr.mxu0 0.0
      %v3565 = vand.u32 %v295, 4294901760
      %3566 = vmatpush1.msra.mxu0 %v3565
      %3567 = vmatprep.subr.mxu0 0.0
      %v3568 = vand.u32 %v296, 4294901760
      %3569 = vmatpush1.msra.mxu0 %v3568
      %3570 = vmatprep.subr.mxu0 0.0
      %v3571 = vand.u32 %v297, 4294901760
      %3572 = vmatpush1.msra.mxu0 %v3571
      %3573 = vmatprep.subr.mxu0 0.0
      %v3574 = vand.u32 %v298, 4294901760
      %3575 = vmatpush1.msra.mxu0 %v3574
      %3576 = vmatprep.subr.mxu0 0.0
      %v3577 = vand.u32 %v299, 4294901760
      %3578 = vmatpush1.msra.mxu0 %v3577
      %3579 = vmatprep.subr.mxu0 0.0
      %v3580 = vand.u32 %v300, 4294901760
      %3581 = vmatpush1.msra.mxu0 %v3580
      %3582 = vmatprep.subr.mxu0 0.0
      %v3583 = vand.u32 %v301, 4294901760
      %3584 = vmatpush1.msra.mxu0 %v3583
      %3585 = vmatprep.subr.mxu0 0.0
      %v3586 = vand.u32 %v302, 4294901760
      %3587 = vmatpush1.msra.mxu0 %v3586
      %3588 = vmatprep.subr.mxu0 0.0
      %v3589 = vand.u32 %v303, 4294901760
      %3590 = vmatpush1.msra.mxu0 %v3589
      %3591 = vmatprep.subr.mxu0 0.0
      %v3592 = vand.u32 %v304, 4294901760
      %3593 = vmatpush1.msra.mxu0 %v3592
      %3594 = vmatprep.subr.mxu0 0.0
      %v3595 = vand.u32 %v305, 4294901760
      %3596 = vmatpush1.msra.mxu0 %v3595
      %3597 = vmatprep.subr.mxu0 0.0
      %v3598 = vand.u32 %v306, 4294901760
      %3599 = vmatpush1.msra.mxu0 %v3598
      %3600 = vmatprep.subr.mxu0 0.0
      %v3601 = vand.u32 %v307, 4294901760
      %3602 = vmatpush1.msra.mxu0 %v3601
      %3603 = vmatprep.subr.mxu0 0.0
      %v3604 = vand.u32 %v308, 4294901760
      %3605 = vmatpush1.msra.mxu0 %v3604
      %3606 = vmatprep.subr.mxu0 0.0
      %v3607 = vand.u32 %v309, 4294901760
      %3608 = vmatpush1.msra.mxu0 %v3607
      %3609 = vmatprep.subr.mxu0 0.0
      %v3610 = vand.u32 %v310, 4294901760
      %3611 = vmatpush1.msra.mxu0 %v3610
      %3612 = vmatprep.subr.mxu0 0.0
      %3613 = vmatpush1.msra.mxu0 0.0
      %3614 = vmatprep.subr.mxu0 0.0
      %3615 = vmatpush1.msra.mxu0 0.0
      %3616 = vmatprep.subr.mxu0 0.0
      %3617 = vmatpush1.msra.mxu0 0.0
      %3618 = vmatprep.subr.mxu0 0.0
      %3619 = vmatpush1.msra.mxu0 0.0
      %3620 = vmatprep.subr.mxu0 0.0
      %3621 = vmatpush1.msra.mxu0 0.0
      %3622 = vmatprep.subr.mxu0 0.0
      %3623 = vmatpush1.msra.mxu0 0.0
      %3624 = vmatprep.subr.mxu0 0.0
      %3625 = vmatpush1.msra.mxu0 0.0
      %3626 = vmatprep.subr.mxu0 0.0
      %3627 = vmatpush1.msra.mxu0 0.0
      %3628 = vmatprep.subr.mxu0 0.0
      %3629 = vmatpush1.msra.mxu0 0.0
      %3630 = vmatprep.subr.mxu0 0.0
      %3631 = vmatpush1.msra.mxu0 0.0
      %3632 = vmatprep.subr.mxu0 0.0
      %3633 = vmatpush1.msra.mxu0 0.0
      %3634 = vmatprep.subr.mxu0 0.0
      %3635 = vmatpush1.msra.mxu0 0.0
      %3636 = vmatprep.subr.mxu0 0.0
      %3637 = vmatpush1.msra.mxu0 0.0
      %3638 = vmatprep.subr.mxu0 0.0
      %3639 = vmatpush1.msra.mxu0 0.0
      %3640 = vmatprep.subr.mxu0 0.0
      %3641 = vmatpush1.msra.mxu0 0.0
      %3642 = vmatprep.subr.mxu0 0.0
      %3643 = vmatpush1.msra.mxu0 0.0
      %3644 = vmatprep.mubr.f32.mxu0 0.0
      %v3645 = vand.u32 %v3563, 4294901760
      %v3646 = vsub.f32 %v3563, %v3645
      %v3647 = vand.u32 %v3646, 4294901760
      %v3648 = vsub.f32 %v3646, %v3647
      %v3649 = vand.u32 %v3648, 4294901760
      %3650 = vmatmul.mubr.f32.gmra.mrb[0].mxu0 %v3649
      %v3651 = vpop.f32.mrb[0].mxu0
      %v3652 = vadd.f32 0.0, %v3651
      %v3653 = vpop.f32.mrb[0].mxu0
      %3654 = vdwg.mxu0
      %3655 = vmatprep.subr.mxu0 0.0
      %v3656 = vand.u32 %v295, 4294901760
      %v3657 = vsub.f32 %v295, %v3656
      %v3658 = vand.u32 %v3657, 4294901760
      %v3659 = vsub.f32 %v3657, %v3658
      %v3660 = vand.u32 %v3659, 4294901760
      %3661 = vmatpush1.msra.mxu0 %v3660
      %3662 = vmatprep.subr.mxu0 0.0
      %v3663 = vand.u32 %v296, 4294901760
      %v3664 = vsub.f32 %v296, %v3663
      %v3665 = vand.u32 %v3664, 4294901760
      %v3666 = vsub.f32 %v3664, %v3665
      %v3667 = vand.u32 %v3666, 4294901760
      %3668 = vmatpush1.msra.mxu0 %v3667
      %3669 = vmatprep.subr.mxu0 0.0
      %v3670 = vand.u32 %v297, 4294901760
      %v3671 = vsub.f32 %v297, %v3670
      %v3672 = vand.u32 %v3671, 4294901760
      %v3673 = vsub.f32 %v3671, %v3672
      %v3674 = vand.u32 %v3673, 4294901760
      %3675 = vmatpush1.msra.mxu0 %v3674
      %3676 = vmatprep.subr.mxu0 0.0
      %v3677 = vand.u32 %v298, 4294901760
      %v3678 = vsub.f32 %v298, %v3677
      %v3679 = vand.u32 %v3678, 4294901760
      %v3680 = vsub.f32 %v3678, %v3679
      %v3681 = vand.u32 %v3680, 4294901760
      %3682 = vmatpush1.msra.mxu0 %v3681
      %3683 = vmatprep.subr.mxu0 0.0
      %v3684 = vand.u32 %v299, 4294901760
      %v3685 = vsub.f32 %v299, %v3684
      %v3686 = vand.u32 %v3685, 4294901760
      %v3687 = vsub.f32 %v3685, %v3686
      %v3688 = vand.u32 %v3687, 4294901760
      %3689 = vmatpush1.msra.mxu0 %v3688
      %3690 = vmatprep.subr.mxu0 0.0
      %v3691 = vand.u32 %v300, 4294901760
      %v3692 = vsub.f32 %v300, %v3691
      %v3693 = vand.u32 %v3692, 4294901760
      %v3694 = vsub.f32 %v3692, %v3693
      %v3695 = vand.u32 %v3694, 4294901760
      %3696 = vmatpush1.msra.mxu0 %v3695
      %3697 = vmatprep.subr.mxu0 0.0
      %v3698 = vand.u32 %v301, 4294901760
      %v3699 = vsub.f32 %v301, %v3698
      %v3700 = vand.u32 %v3699, 4294901760
      %v3701 = vsub.f32 %v3699, %v3700
      %v3702 = vand.u32 %v3701, 4294901760
      %3703 = vmatpush1.msra.mxu0 %v3702
      %3704 = vmatprep.subr.mxu0 0.0
      %v3705 = vand.u32 %v302, 4294901760
      %v3706 = vsub.f32 %v302, %v3705
      %v3707 = vand.u32 %v3706, 4294901760
      %v3708 = vsub.f32 %v3706, %v3707
      %v3709 = vand.u32 %v3708, 4294901760
      %3710 = vmatpush1.msra.mxu0 %v3709
      %3711 = vmatprep.subr.mxu0 0.0
      %v3712 = vand.u32 %v303, 4294901760
      %v3713 = vsub.f32 %v303, %v3712
      %v3714 = vand.u32 %v3713, 4294901760
      %v3715 = vsub.f32 %v3713, %v3714
      %v3716 = vand.u32 %v3715, 4294901760
      %3717 = vmatpush1.msra.mxu0 %v3716
      %3718 = vmatprep.subr.mxu0 0.0
      %v3719 = vand.u32 %v304, 4294901760
      %v3720 = vsub.f32 %v304, %v3719
      %v3721 = vand.u32 %v3720, 4294901760
      %v3722 = vsub.f32 %v3720, %v3721
      %v3723 = vand.u32 %v3722, 4294901760
      %3724 = vmatpush1.msra.mxu0 %v3723
      %3725 = vmatprep.subr.mxu0 0.0
      %v3726 = vand.u32 %v305, 4294901760
      %v3727 = vsub.f32 %v305, %v3726
      %v3728 = vand.u32 %v3727, 4294901760
      %v3729 = vsub.f32 %v3727, %v3728
      %v3730 = vand.u32 %v3729, 4294901760
      %3731 = vmatpush1.msra.mxu0 %v3730
      %3732 = vmatprep.subr.mxu0 0.0
      %v3733 = vand.u32 %v306, 4294901760
      %v3734 = vsub.f32 %v306, %v3733
      %v3735 = vand.u32 %v3734, 4294901760
      %v3736 = vsub.f32 %v3734, %v3735
      %v3737 = vand.u32 %v3736, 4294901760
      %3738 = vmatpush1.msra.mxu0 %v3737
      %3739 = vmatprep.subr.mxu0 0.0
      %v3740 = vand.u32 %v307, 4294901760
      %v3741 = vsub.f32 %v307, %v3740
      %v3742 = vand.u32 %v3741, 4294901760
      %v3743 = vsub.f32 %v3741, %v3742
      %v3744 = vand.u32 %v3743, 4294901760
      %3745 = vmatpush1.msra.mxu0 %v3744
      %3746 = vmatprep.subr.mxu0 0.0
      %v3747 = vand.u32 %v308, 4294901760
      %v3748 = vsub.f32 %v308, %v3747
      %v3749 = vand.u32 %v3748, 4294901760
      %v3750 = vsub.f32 %v3748, %v3749
      %v3751 = vand.u32 %v3750, 4294901760
      %3752 = vmatpush1.msra.mxu0 %v3751
      %3753 = vmatprep.subr.mxu0 0.0
      %v3754 = vand.u32 %v309, 4294901760
      %v3755 = vsub.f32 %v309, %v3754
      %v3756 = vand.u32 %v3755, 4294901760
      %v3757 = vsub.f32 %v3755, %v3756
      %v3758 = vand.u32 %v3757, 4294901760
      %3759 = vmatpush1.msra.mxu0 %v3758
      %3760 = vmatprep.subr.mxu0 0.0
      %v3761 = vand.u32 %v310, 4294901760
      %v3762 = vsub.f32 %v310, %v3761
      %v3763 = vand.u32 %v3762, 4294901760
      %v3764 = vsub.f32 %v3762, %v3763
      %v3765 = vand.u32 %v3764, 4294901760
      %3766 = vmatpush1.msra.mxu0 %v3765
      %3767 = vmatprep.subr.mxu0 0.0
      %3768 = vmatpush1.msra.mxu0 0.0
      %3769 = vmatprep.subr.mxu0 0.0
      %3770 = vmatpush1.msra.mxu0 0.0
      %3771 = vmatprep.subr.mxu0 0.0
      %3772 = vmatpush1.msra.mxu0 0.0
      %3773 = vmatprep.subr.mxu0 0.0
      %3774 = vmatpush1.msra.mxu0 0.0
      %3775 = vmatprep.subr.mxu0 0.0
      %3776 = vmatpush1.msra.mxu0 0.0
      %3777 = vmatprep.subr.mxu0 0.0
      %3778 = vmatpush1.msra.mxu0 0.0
      %3779 = vmatprep.subr.mxu0 0.0
      %3780 = vmatpush1.msra.mxu0 0.0
      %3781 = vmatprep.subr.mxu0 0.0
      %3782 = vmatpush1.msra.mxu0 0.0
      %3783 = vmatprep.subr.mxu0 0.0
      %3784 = vmatpush1.msra.mxu0 0.0
      %3785 = vmatprep.subr.mxu0 0.0
      %3786 = vmatpush1.msra.mxu0 0.0
      %3787 = vmatprep.subr.mxu0 0.0
      %3788 = vmatpush1.msra.mxu0 0.0
      %3789 = vmatprep.subr.mxu0 0.0
      %3790 = vmatpush1.msra.mxu0 0.0
      %3791 = vmatprep.subr.mxu0 0.0
      %3792 = vmatpush1.msra.mxu0 0.0
      %3793 = vmatprep.subr.mxu0 0.0
      %3794 = vmatpush1.msra.mxu0 0.0
      %3795 = vmatprep.subr.mxu0 0.0
      %3796 = vmatpush1.msra.mxu0 0.0
      %3797 = vmatprep.subr.mxu0 0.0
      %3798 = vmatpush1.msra.mxu0 0.0
      %3799 = vmatprep.mubr.f32.mxu0 0.0
      %v3800 = vand.u32 %v3563, 4294901760
      %3801 = vmatmul.mubr.f32.gmra.mrb[0].mxu0 %v3800
      %v3802 = vpop.f32.mrb[0].mxu0
      %v3803 = vadd.f32 %v3652, %v3802
      %v3804 = vpop.f32.mrb[0].mxu0
      %3805 = vdwg.mxu0
      %3806 = vmatprep.subr.mxu0 0.0
      %v3807 = vand.u32 %v295, 4294901760
      %v3808 = vsub.f32 %v295, %v3807
      %3809 = vmatpush1.msra.mxu0 %v3808
      %3810 = vmatprep.subr.mxu0 0.0
      %v3811 = vand.u32 %v296, 4294901760
      %v3812 = vsub.f32 %v296, %v3811
      %3813 = vmatpush1.msra.mxu0 %v3812
      %3814 = vmatprep.subr.mxu0 0.0
      %v3815 = vand.u32 %v297, 4294901760
      %v3816 = vsub.f32 %v297, %v3815
      %3817 = vmatpush1.msra.mxu0 %v3816
      %3818 = vmatprep.subr.mxu0 0.0
      %v3819 = vand.u32 %v298, 4294901760
      %v3820 = vsub.f32 %v298, %v3819
      %3821 = vmatpush1.msra.mxu0 %v3820
      %3822 = vmatprep.subr.mxu0 0.0
      %v3823 = vand.u32 %v299, 4294901760
      %v3824 = vsub.f32 %v299, %v3823
      %3825 = vmatpush1.msra.mxu0 %v3824
      %3826 = vmatprep.subr.mxu0 0.0
      %v3827 = vand.u32 %v300, 4294901760
      %v3828 = vsub.f32 %v300, %v3827
      %3829 = vmatpush1.msra.mxu0 %v3828
      %3830 = vmatprep.subr.mxu0 0.0
      %v3831 = vand.u32 %v301, 4294901760
      %v3832 = vsub.f32 %v301, %v3831
      %3833 = vmatpush1.msra.mxu0 %v3832
      %3834 = vmatprep.subr.mxu0 0.0
      %v3835 = vand.u32 %v302, 4294901760
      %v3836 = vsub.f32 %v302, %v3835
      %3837 = vmatpush1.msra.mxu0 %v3836
      %3838 = vmatprep.subr.mxu0 0.0
      %v3839 = vand.u32 %v303, 4294901760
      %v3840 = vsub.f32 %v303, %v3839
      %3841 = vmatpush1.msra.mxu0 %v3840
      %3842 = vmatprep.subr.mxu0 0.0
      %v3843 = vand.u32 %v304, 4294901760
      %v3844 = vsub.f32 %v304, %v3843
      %3845 = vmatpush1.msra.mxu0 %v3844
      %3846 = vmatprep.subr.mxu0 0.0
      %v3847 = vand.u32 %v305, 4294901760
      %v3848 = vsub.f32 %v305, %v3847
      %3849 = vmatpush1.msra.mxu0 %v3848
      %3850 = vmatprep.subr.mxu0 0.0
      %v3851 = vand.u32 %v306, 4294901760
      %v3852 = vsub.f32 %v306, %v3851
      %3853 = vmatpush1.msra.mxu0 %v3852
      %3854 = vmatprep.subr.mxu0 0.0
      %v3855 = vand.u32 %v307, 4294901760
      %v3856 = vsub.f32 %v307, %v3855
      %3857 = vmatpush1.msra.mxu0 %v3856
      %3858 = vmatprep.subr.mxu0 0.0
      %v3859 = vand.u32 %v308, 4294901760
      %v3860 = vsub.f32 %v308, %v3859
      %3861 = vmatpush1.msra.mxu0 %v3860
      %3862 = vmatprep.subr.mxu0 0.0
      %v3863 = vand.u32 %v309, 4294901760
      %v3864 = vsub.f32 %v309, %v3863
      %3865 = vmatpush1.msra.mxu0 %v3864
      %3866 = vmatprep.subr.mxu0 0.0
      %v3867 = vand.u32 %v310, 4294901760
      %v3868 = vsub.f32 %v310, %v3867
      %3869 = vmatpush1.msra.mxu0 %v3868
      %3870 = vmatprep.subr.mxu0 0.0
      %3871 = vmatpush1.msra.mxu0 0.0
      %3872 = vmatprep.subr.mxu0 0.0
      %3873 = vmatpush1.msra.mxu0 0.0
      %3874 = vmatprep.subr.mxu0 0.0
      %3875 = vmatpush1.msra.mxu0 0.0
      %3876 = vmatprep.subr.mxu0 0.0
      %3877 = vmatpush1.msra.mxu0 0.0
      %3878 = vmatprep.subr.mxu0 0.0
      %3879 = vmatpush1.msra.mxu0 0.0
      %3880 = vmatprep.subr.mxu0 0.0
      %3881 = vmatpush1.msra.mxu0 0.0
      %3882 = vmatprep.subr.mxu0 0.0
      %3883 = vmatpush1.msra.mxu0 0.0
      %3884 = vmatprep.subr.mxu0 0.0
      %3885 = vmatpush1.msra.mxu0 0.0
      %3886 = vmatprep.subr.mxu0 0.0
      %3887 = vmatpush1.msra.mxu0 0.0
      %3888 = vmatprep.subr.mxu0 0.0
      %3889 = vmatpush1.msra.mxu0 0.0
      %3890 = vmatprep.subr.mxu0 0.0
      %3891 = vmatpush1.msra.mxu0 0.0
      %3892 = vmatprep.subr.mxu0 0.0
      %3893 = vmatpush1.msra.mxu0 0.0
      %3894 = vmatprep.subr.mxu0 0.0
      %3895 = vmatpush1.msra.mxu0 0.0
      %3896 = vmatprep.subr.mxu0 0.0
      %3897 = vmatpush1.msra.mxu0 0.0
      %3898 = vmatprep.subr.mxu0 0.0
      %3899 = vmatpush1.msra.mxu0 0.0
      %3900 = vmatprep.subr.mxu0 0.0
      %3901 = vmatpush1.msra.mxu0 0.0
      %3902 = vmatprep.mubr.f32.mxu0 0.0
      %v3903 = vand.u32 %v3563, 4294901760
      %v3904 = vsub.f32 %v3563, %v3903
      %3905 = vmatmul.mubr.f32.gmra.mrb[0].mxu0 %v3904
      %v3906 = vpop.f32.mrb[0].mxu0
      %v3907 = vadd.f32 %v3803, %v3906
      %v3908 = vpop.f32.mrb[0].mxu0
      %3909 = vdwg.mxu0
      %3910 = vmatprep.subr.mxu0 0.0
      %v3911 = vand.u32 %v295, 4294901760
      %3912 = vmatpush1.msra.mxu0 %v3911
      %3913 = vmatprep.subr.mxu0 0.0
      %v3914 = vand.u32 %v296, 4294901760
      %3915 = vmatpush1.msra.mxu0 %v3914
      %3916 = vmatprep.subr.mxu0 0.0
      %v3917 = vand.u32 %v297, 4294901760
      %3918 = vmatpush1.msra.mxu0 %v3917
      %3919 = vmatprep.subr.mxu0 0.0
      %v3920 = vand.u32 %v298, 4294901760
      %3921 = vmatpush1.msra.mxu0 %v3920
      %3922 = vmatprep.subr.mxu0 0.0
      %v3923 = vand.u32 %v299, 4294901760
      %3924 = vmatpush1.msra.mxu0 %v3923
      %3925 = vmatprep.subr.mxu0 0.0
      %v3926 = vand.u32 %v300, 4294901760
      %3927 = vmatpush1.msra.mxu0 %v3926
      %3928 = vmatprep.subr.mxu0 0.0
      %v3929 = vand.u32 %v301, 4294901760
      %3930 = vmatpush1.msra.mxu0 %v3929
      %3931 = vmatprep.subr.mxu0 0.0
      %v3932 = vand.u32 %v302, 4294901760
      %3933 = vmatpush1.msra.mxu0 %v3932
      %3934 = vmatprep.subr.mxu0 0.0
      %v3935 = vand.u32 %v303, 4294901760
      %3936 = vmatpush1.msra.mxu0 %v3935
      %3937 = vmatprep.subr.mxu0 0.0
      %v3938 = vand.u32 %v304, 4294901760
      %3939 = vmatpush1.msra.mxu0 %v3938
      %3940 = vmatprep.subr.mxu0 0.0
      %v3941 = vand.u32 %v305, 4294901760
      %3942 = vmatpush1.msra.mxu0 %v3941
      %3943 = vmatprep.subr.mxu0 0.0
      %v3944 = vand.u32 %v306, 4294901760
      %3945 = vmatpush1.msra.mxu0 %v3944
      %3946 = vmatprep.subr.mxu0 0.0
      %v3947 = vand.u32 %v307, 4294901760
      %3948 = vmatpush1.msra.mxu0 %v3947
      %3949 = vmatprep.subr.mxu0 0.0
      %v3950 = vand.u32 %v308, 4294901760
      %3951 = vmatpush1.msra.mxu0 %v3950
      %3952 = vmatprep.subr.mxu0 0.0
      %v3953 = vand.u32 %v309, 4294901760
      %3954 = vmatpush1.msra.mxu0 %v3953
      %3955 = vmatprep.subr.mxu0 0.0
      %v3956 = vand.u32 %v310, 4294901760
      %3957 = vmatpush1.msra.mxu0 %v3956
      %3958 = vmatprep.subr.mxu0 0.0
      %3959 = vmatpush1.msra.mxu0 0.0
      %3960 = vmatprep.subr.mxu0 0.0
      %3961 = vmatpush1.msra.mxu0 0.0
      %3962 = vmatprep.subr.mxu0 0.0
      %3963 = vmatpush1.msra.mxu0 0.0
      %3964 = vmatprep.subr.mxu0 0.0
      %3965 = vmatpush1.msra.mxu0 0.0
      %3966 = vmatprep.subr.mxu0 0.0
      %3967 = vmatpush1.msra.mxu0 0.0
      %3968 = vmatprep.subr.mxu0 0.0
      %3969 = vmatpush1.msra.mxu0 0.0
      %3970 = vmatprep.subr.mxu0 0.0
      %3971 = vmatpush1.msra.mxu0 0.0
      %3972 = vmatprep.subr.mxu0 0.0
      %3973 = vmatpush1.msra.mxu0 0.0
      %3974 = vmatprep.subr.mxu0 0.0
      %3975 = vmatpush1.msra.mxu0 0.0
      %3976 = vmatprep.subr.mxu0 0.0
      %3977 = vmatpush1.msra.mxu0 0.0
      %3978 = vmatprep.subr.mxu0 0.0
      %3979 = vmatpush1.msra.mxu0 0.0
      %3980 = vmatprep.subr.mxu0 0.0
      %3981 = vmatpush1.msra.mxu0 0.0
      %3982 = vmatprep.subr.mxu0 0.0
      %3983 = vmatpush1.msra.mxu0 0.0
      %3984 = vmatprep.subr.mxu0 0.0
      %3985 = vmatpush1.msra.mxu0 0.0
      %3986 = vmatprep.subr.mxu0 0.0
      %3987 = vmatpush1.msra.mxu0 0.0
      %3988 = vmatprep.subr.mxu0 0.0
      %3989 = vmatpush1.msra.mxu0 0.0
      %3990 = vmatprep.mubr.f32.mxu0 0.0
      %v3991 = vand.u32 %v3563, 4294901760
      %v3992 = vsub.f32 %v3563, %v3991
      %v3993 = vand.u32 %v3992, 4294901760
      %3994 = vmatmul.mubr.f32.gmra.mrb[0].mxu0 %v3993
      %v3995 = vpop.f32.mrb[0].mxu0
      %v3996 = vadd.f32 %v3907, %v3995
      %v3997 = vpop.f32.mrb[0].mxu0
      %3998 = vdwg.mxu0
      %3999 = vmatprep.subr.mxu0 0.0
      %v4000 = vand.u32 %v295, 4294901760
      %v4001 = vsub.f32 %v295, %v4000
      %v4002 = vand.u32 %v4001, 4294901760
      %4003 = vmatpush1.msra.mxu0 %v4002
      %4004 = vmatprep.subr.mxu0 0.0
      %v4005 = vand.u32 %v296, 4294901760
      %v4006 = vsub.f32 %v296, %v4005
      %v4007 = vand.u32 %v4006, 4294901760
      %4008 = vmatpush1.msra.mxu0 %v4007
      %4009 = vmatprep.subr.mxu0 0.0
      %v4010 = vand.u32 %v297, 4294901760
      %v4011 = vsub.f32 %v297, %v4010
      %v4012 = vand.u32 %v4011, 4294901760
      %4013 = vmatpush1.msra.mxu0 %v4012
      %4014 = vmatprep.subr.mxu0 0.0
      %v4015 = vand.u32 %v298, 4294901760
      %v4016 = vsub.f32 %v298, %v4015
      %v4017 = vand.u32 %v4016, 4294901760
      %4018 = vmatpush1.msra.mxu0 %v4017
      %4019 = vmatprep.subr.mxu0 0.0
      %v4020 = vand.u32 %v299, 4294901760
      %v4021 = vsub.f32 %v299, %v4020
      %v4022 = vand.u32 %v4021, 4294901760
      %4023 = vmatpush1.msra.mxu0 %v4022
      %4024 = vmatprep.subr.mxu0 0.0
      %v4025 = vand.u32 %v300, 4294901760
      %v4026 = vsub.f32 %v300, %v4025
      %v4027 = vand.u32 %v4026, 4294901760
      %4028 = vmatpush1.msra.mxu0 %v4027
      %4029 = vmatprep.subr.mxu0 0.0
      %v4030 = vand.u32 %v301, 4294901760
      %v4031 = vsub.f32 %v301, %v4030
      %v4032 = vand.u32 %v4031, 4294901760
      %4033 = vmatpush1.msra.mxu0 %v4032
      %4034 = vmatprep.subr.mxu0 0.0
      %v4035 = vand.u32 %v302, 4294901760
      %v4036 = vsub.f32 %v302, %v4035
      %v4037 = vand.u32 %v4036, 4294901760
      %4038 = vmatpush1.msra.mxu0 %v4037
      %4039 = vmatprep.subr.mxu0 0.0
      %v4040 = vand.u32 %v303, 4294901760
      %v4041 = vsub.f32 %v303, %v4040
      %v4042 = vand.u32 %v4041, 4294901760
      %4043 = vmatpush1.msra.mxu0 %v4042
      %4044 = vmatprep.subr.mxu0 0.0
      %v4045 = vand.u32 %v304, 4294901760
      %v4046 = vsub.f32 %v304, %v4045
      %v4047 = vand.u32 %v4046, 4294901760
      %4048 = vmatpush1.msra.mxu0 %v4047
      %4049 = vmatprep.subr.mxu0 0.0
      %v4050 = vand.u32 %v305, 4294901760
      %v4051 = vsub.f32 %v305, %v4050
      %v4052 = vand.u32 %v4051, 4294901760
      %4053 = vmatpush1.msra.mxu0 %v4052
      %4054 = vmatprep.subr.mxu0 0.0
      %v4055 = vand.u32 %v306, 4294901760
      %v4056 = vsub.f32 %v306, %v4055
      %v4057 = vand.u32 %v4056, 4294901760
      %4058 = vmatpush1.msra.mxu0 %v4057
      %4059 = vmatprep.subr.mxu0 0.0
      %v4060 = vand.u32 %v307, 4294901760
      %v4061 = vsub.f32 %v307, %v4060
      %v4062 = vand.u32 %v4061, 4294901760
      %4063 = vmatpush1.msra.mxu0 %v4062
      %4064 = vmatprep.subr.mxu0 0.0
      %v4065 = vand.u32 %v308, 4294901760
      %v4066 = vsub.f32 %v308, %v4065
      %v4067 = vand.u32 %v4066, 4294901760
      %4068 = vmatpush1.msra.mxu0 %v4067
      %4069 = vmatprep.subr.mxu0 0.0
      %v4070 = vand.u32 %v309, 4294901760
      %v4071 = vsub.f32 %v309, %v4070
      %v4072 = vand.u32 %v4071, 4294901760
      %4073 = vmatpush1.msra.mxu0 %v4072
      %4074 = vmatprep.subr.mxu0 0.0
      %v4075 = vand.u32 %v310, 4294901760
      %v4076 = vsub.f32 %v310, %v4075
      %v4077 = vand.u32 %v4076, 4294901760
      %4078 = vmatpush1.msra.mxu0 %v4077
      %4079 = vmatprep.subr.mxu0 0.0
      %4080 = vmatpush1.msra.mxu0 0.0
      %4081 = vmatprep.subr.mxu0 0.0
      %4082 = vmatpush1.msra.mxu0 0.0
      %4083 = vmatprep.subr.mxu0 0.0
      %4084 = vmatpush1.msra.mxu0 0.0
      %4085 = vmatprep.subr.mxu0 0.0
      %4086 = vmatpush1.msra.mxu0 0.0
      %4087 = vmatprep.subr.mxu0 0.0
      %4088 = vmatpush1.msra.mxu0 0.0
      %4089 = vmatprep.subr.mxu0 0.0
      %4090 = vmatpush1.msra.mxu0 0.0
      %4091 = vmatprep.subr.mxu0 0.0
      %4092 = vmatpush1.msra.mxu0 0.0
      %4093 = vmatprep.subr.mxu0 0.0
      %4094 = vmatpush1.msra.mxu0 0.0
      %4095 = vmatprep.subr.mxu0 0.0
      %4096 = vmatpush1.msra.mxu0 0.0
      %4097 = vmatprep.subr.mxu0 0.0
      %4098 = vmatpush1.msra.mxu0 0.0
      %4099 = vmatprep.subr.mxu0 0.0
      %4100 = vmatpush1.msra.mxu0 0.0
      %4101 = vmatprep.subr.mxu0 0.0
      %4102 = vmatpush1.msra.mxu0 0.0
      %4103 = vmatprep.subr.mxu0 0.0
      %4104 = vmatpush1.msra.mxu0 0.0
      %4105 = vmatprep.subr.mxu0 0.0
      %4106 = vmatpush1.msra.mxu0 0.0
      %4107 = vmatprep.subr.mxu0 0.0
      %4108 = vmatpush1.msra.mxu0 0.0
      %4109 = vmatprep.subr.mxu0 0.0
      %4110 = vmatpush1.msra.mxu0 0.0
      %4111 = vmatprep.mubr.f32.mxu0 0.0
      %v4112 = vand.u32 %v3563, 4294901760
      %4113 = vmatmul.mubr.f32.gmra.mrb[0].mxu0 %v4112
      %v4114 = vpop.f32.mrb[0].mxu0
      %v4115 = vadd.f32 %v3996, %v4114
      %v4116 = vpop.f32.mrb[0].mxu0
      %4117 = vdwg.mxu0
      %4118 = vmatprep.subr.mxu0 0.0
      %v4119 = vand.u32 %v295, 4294901760
      %4120 = vmatpush1.msra.mxu0 %v4119
      %4121 = vmatprep.subr.mxu0 0.0
      %v4122 = vand.u32 %v296, 4294901760
      %4123 = vmatpush1.msra.mxu0 %v4122
      %4124 = vmatprep.subr.mxu0 0.0
      %v4125 = vand.u32 %v297, 4294901760
      %4126 = vmatpush1.msra.mxu0 %v4125
      %4127 = vmatprep.subr.mxu0 0.0
      %v4128 = vand.u32 %v298, 4294901760
      %4129 = vmatpush1.msra.mxu0 %v4128
      %4130 = vmatprep.subr.mxu0 0.0
      %v4131 = vand.u32 %v299, 4294901760
      %4132 = vmatpush1.msra.mxu0 %v4131
      %4133 = vmatprep.subr.mxu0 0.0
      %v4134 = vand.u32 %v300, 4294901760
      %4135 = vmatpush1.msra.mxu0 %v4134
      %4136 = vmatprep.subr.mxu0 0.0
      %v4137 = vand.u32 %v301, 4294901760
      %4138 = vmatpush1.msra.mxu0 %v4137
      %4139 = vmatprep.subr.mxu0 0.0
      %v4140 = vand.u32 %v302, 4294901760
      %4141 = vmatpush1.msra.mxu0 %v4140
      %4142 = vmatprep.subr.mxu0 0.0
      %v4143 = vand.u32 %v303, 4294901760
      %4144 = vmatpush1.msra.mxu0 %v4143
      %4145 = vmatprep.subr.mxu0 0.0
      %v4146 = vand.u32 %v304, 4294901760
      %4147 = vmatpush1.msra.mxu0 %v4146
      %4148 = vmatprep.subr.mxu0 0.0
      %v4149 = vand.u32 %v305, 4294901760
      %4150 = vmatpush1.msra.mxu0 %v4149
      %4151 = vmatprep.subr.mxu0 0.0
      %v4152 = vand.u32 %v306, 4294901760
      %4153 = vmatpush1.msra.mxu0 %v4152
      %4154 = vmatprep.subr.mxu0 0.0
      %v4155 = vand.u32 %v307, 4294901760
      %4156 = vmatpush1.msra.mxu0 %v4155
      %4157 = vmatprep.subr.mxu0 0.0
      %v4158 = vand.u32 %v308, 4294901760
      %4159 = vmatpush1.msra.mxu0 %v4158
      %4160 = vmatprep.subr.mxu0 0.0
      %v4161 = vand.u32 %v309, 4294901760
      %4162 = vmatpush1.msra.mxu0 %v4161
      %4163 = vmatprep.subr.mxu0 0.0
      %v4164 = vand.u32 %v310, 4294901760
      %4165 = vmatpush1.msra.mxu0 %v4164
      %4166 = vmatprep.subr.mxu0 0.0
      %4167 = vmatpush1.msra.mxu0 0.0
      %4168 = vmatprep.subr.mxu0 0.0
      %4169 = vmatpush1.msra.mxu0 0.0
      %4170 = vmatprep.subr.mxu0 0.0
      %4171 = vmatpush1.msra.mxu0 0.0
      %4172 = vmatprep.subr.mxu0 0.0
      %4173 = vmatpush1.msra.mxu0 0.0
      %4174 = vmatprep.subr.mxu0 0.0
      %4175 = vmatpush1.msra.mxu0 0.0
      %4176 = vmatprep.subr.mxu0 0.0
      %4177 = vmatpush1.msra.mxu0 0.0
      %4178 = vmatprep.subr.mxu0 0.0
      %4179 = vmatpush1.msra.mxu0 0.0
      %4180 = vmatprep.subr.mxu0 0.0
      %4181 = vmatpush1.msra.mxu0 0.0
      %4182 = vmatprep.subr.mxu0 0.0
      %4183 = vmatpush1.msra.mxu0 0.0
      %4184 = vmatprep.subr.mxu0 0.0
      %4185 = vmatpush1.msra.mxu0 0.0
      %4186 = vmatprep.subr.mxu0 0.0
      %4187 = vmatpush1.msra.mxu0 0.0
      %4188 = vmatprep.subr.mxu0 0.0
      %4189 = vmatpush1.msra.mxu0 0.0
      %4190 = vmatprep.subr.mxu0 0.0
      %4191 = vmatpush1.msra.mxu0 0.0
      %4192 = vmatprep.subr.mxu0 0.0
      %4193 = vmatpush1.msra.mxu0 0.0
      %4194 = vmatprep.subr.mxu0 0.0
      %4195 = vmatpush1.msra.mxu0 0.0
      %4196 = vmatprep.subr.mxu0 0.0
      %4197 = vmatpush1.msra.mxu0 0.0
      %4198 = vmatprep.mubr.f32.mxu0 0.0
      %v4199 = vand.u32 %v3563, 4294901760
      %4200 = vmatmul.mubr.f32.gmra.mrb[0].mxu0 %v4199
      %v4201 = vpop.f32.mrb[0].mxu0
      %v4202 = vadd.f32 %v4115, %v4201
      %v4203 = vpop.f32.mrb[0].mxu0
      %4204 = vdwg.mxu0
      %v4205 = vadd.f32 %v3562, %v4202
      %v4206 = vtanh.pop %v4205
      %v4207 = vsub.f32 %v4206, %v2908
      %v4208 = vmul.f32 %v3560, %v4207
      %v4209 = vadd.f32 %v2908, %v4208
      %s4210 = scalar_lea.vmem %s271, 2
      %4211 = vst [vmem:[%s4210 - $0x1] sm:$0x2] %v4209
      %4212 = vst [vmem:[#allocation2] sm:$0xff] %v4209
      %4213 = vst [vmem:[%s6] sm:$0xff] %v4209
      %s4214 = smul.u32 3, %s18
      %p4215 = scmp.lt.s32.totalorder %s4214, 8
      %s4216 = scalar_select %p4215, %s4214, 8
      %s4217 = scalar_lea.vmem %s5, %s4216
      // Predicated region
      $region45: #{mgu_forward.1} parent=39 // pred_check
        %p4218 = pneg %p151
      $region46: #{mgu_forward.1} parent=39 // pred_check_branch
        %4220 = sbr.rel (%p4218) target = $region48
      $region47: #{mgu_forward.1} parent=39 // pred_region
        %s4221 = smul.u32 3, %s18
      $region48: #{mgu_forward.1} parent=39 // pred_fallthru
        _
      // Predicated region
      $region49: #{mgu_forward.1} parent=39 // pred_check
        %p4222 = pneg %p172
      $region50: #{mgu_forward.1} parent=39 // pred_check_branch
        %4224 = sbr.rel (%p4222) target = $region52
      $region51: #{mgu_forward.1} parent=39 // pred_region
        _
      $region52: #{mgu_forward.1} parent=39 // pred_fallthru
        _
      // Predicated region
      $region53: #{mgu_forward.1} parent=39 // pred_check
        %p4225 = pneg %p172
      $region54: #{mgu_forward.1} parent=39 // pred_check_branch
        %4227 = sbr.rel (%p4225) target = $region56
      $region55: #{mgu_forward.1} parent=39 // pred_region
        _
      $region56: #{mgu_forward.1} parent=39 // pred_fallthru
        _
    $region40: #{mgu_forward.1} parent=5 // pred_fallthru
      _
    %p4228 = scmp.le.s32.totalorder 2, %s13
    // Predicated region
    $region57: #{mgu_forward.1} parent=5 // pred_check
      %p4229 = pneg %p4228
    $region58: #{mgu_forward.1} parent=5 // pred_check_branch
      %4231 = sbr.rel (%p4229) target = $region60
    $region59: #{mgu_forward.1} parent=5 // pred_region
      %s4232 = ssub.s32 %s13, 2
      // Predicated region
      $region61: #{mgu_forward.1} parent=59 // pred_check
        %p4233 = pneg %p157
      $region62: #{mgu_forward.1} parent=59 // pred_check_branch
        %4235 = sbr.rel (%p4233) target = $region64
      $region63: #{mgu_forward.1} parent=59 // pred_region
        %s4236 = smul.u32 3, %s19
        %p4237 = scmp.lt.s32.totalorder %s4236, 8
        %s4238 = scalar_select %p4237, %s4236, 8
        %s4239 = scalar_lea.vmem %s5, %s4238
      $region64: #{mgu_forward.1} parent=59 // pred_fallthru
        _
    $region60: #{mgu_forward.1} parent=5 // pred_fallthru
      _
  $region6: #{mgu_forward.1} parent=0 // loop_footer
    %s17 = sadd.s32 1, %s13
  $region7: #{mgu_forward.1} parent=0 // loop_footer_branch
    %12 = sbr.rel target = $region3
  $region8: #{mgu_forward.1} parent=0 // loop_exit
    _

</llo_original>
